<compile_context>
chip_gen: v5e
topology: v5e:2x2
jax: 0.10.0
libtpu: 0.0.40
codegen_flags: <defaults>
</compile_context>

<pallas_src>
import jax
import jax.numpy as jnp
from jax.experimental import pallas as pl
from jax.experimental.pallas import tpu as pltpu

_K = 5  # all convs are 5x5, stride 1, no padding


# ----------------------------------------------------------------------------
# In-kernel building blocks (operate on VMEM scratch refs)
# ----------------------------------------------------------------------------
def _conv5x5_relu(src, dst, w_ref, b_ref):
    """src: (Hi, Wi, Cin) f32 ref; dst: (Ho, Wo, Cout) f32 ref.
    w_ref: (25*Cin, Cout) bf16 (rows ordered (ki, kj, cin)); b_ref: (1, Cout) f32."""
    Ho, Wo, _ = dst.shape
    w = w_ref[...]          # bf16, hoisted out of the row loop
    b = b_ref[...]          # f32

    @pl.loop(0, Ho)
    def _(h):
        # im2col for one output row: (Wo, 25*Cin), built from contiguous VMEM slices.
        patches = jnp.concatenate(
            [src[h + i, j:j + Wo, :] for i in range(_K) for j in range(_K)],
            axis=-1)
        acc = jnp.dot(patches.astype(jnp.bfloat16), w,
                      preferred_element_type=jnp.float32)       # (Wo, Cout) f32
        dst[h] = jnp.maximum(acc + b, 0.0)


def _maxpool2x2(src, tmp):
    """src: (2Ho, 2Wo, C) f32 ref; tmp: (2Ho, Wo, C) f32 ref. Returns (Ho, Wo, C) value."""
    H2, W2, _ = src.shape
    Ho, Wo = H2 // 2, W2 // 2
    # max over the W pairs (stride-2 sublane reads), then over the H pairs (stride-2
    # leading-dim reads). Pure VPU work on VMEM-resident data.
    tmp[...] = jnp.maximum(src[:, pl.ds(0, Wo, 2), :],
                           src[:, pl.ds(1, Wo, 2), :])
    return jnp.maximum(tmp[pl.ds(0, Ho, 2)], tmp[pl.ds(1, Ho, 2)])


# ----------------------------------------------------------------------------
# Fused forward kernel (one batch element per grid step)
# ----------------------------------------------------------------------------
def _mycnn_kernel(x_ref, w1_ref, b1_ref, w2_ref, b2_ref, w3_ref, b3_ref,
                  w4_ref, b4_ref, w5_ref, b5_ref,
                  o_ref,
                  a0, a1, a2, t2, a2p, a3, t3):
    # Stage the per-sample NHWC input tile into scratch.
    a0[...] = x_ref[0]                                  # (28, 28, 1)

    _conv5x5_relu(a0, a1, w1_ref, b1_ref)               # (24, 24, 16)
    _conv5x5_relu(a1, a2, w2_ref, b2_ref)               # (20, 20, 32)
    a2p[...] = _maxpool2x2(a2, t2)                      # (10, 10, 32)
    _conv5x5_relu(a2p, a3, w3_ref, b3_ref)              # (6, 6, 64)
    p3 = _maxpool2x2(a3, t3)                            # (3, 3, 64) value

    # Flatten in (h, w, c) order; fc4 weight rows were permuted in the wrapper so this
    # exactly reproduces PyTorch's NCHW view(N, -1) ordering.
    flat = jnp.concatenate(
        [p3[h, w:w + 1, :] for h in range(3) for w in range(3)], axis=-1)   # (1, 576)

    h4 = jnp.dot(flat.astype(jnp.bfloat16), w4_ref[...],
                 preferred_element_type=jnp.float32) + b4_ref[...]
    h4 = jnp.maximum(h4, 0.0)                           # (1, 100)
    logits = jnp.dot(h4.astype(jnp.bfloat16), w5_ref[...],
                     preferred_element_type=jnp.float32) + b5_ref[...]      # (1, 10)
    o_ref[0] = logits


# ----------------------------------------------------------------------------
# Wrapper: weight re-layout (trace-time glue on params only) + pallas_call
# ----------------------------------------------------------------------------
def _prep_conv_w(w):
    # PyTorch (Cout, Cin, kh, kw) -> (kh*kw*Cin, Cout), rows ordered (ki, kj, cin), bf16.
    cout, cin, kh, kw = w.shape
    return jnp.transpose(w, (2, 3, 1, 0)).reshape(kh * kw * cin, cout).astype(jnp.bfloat16)


def mycnn_forward(x_nchw, params):
    n = x_nchw.shape[0]
    x = jnp.transpose(x_nchw, (0, 2, 3, 1))                       # (N, 28, 28, 1) NHWC

    w1 = _prep_conv_w(params["w1"])                               # (25, 16)
    w2 = _prep_conv_w(params["w2"])                               # (400, 32)
    w3 = _prep_conv_w(params["w3"])                               # (800, 64)
    # fc4: PyTorch flattens NCHW (c, h, w); the kernel flattens NHWC (h, w, c),
    # so permute the weight rows accordingly (weights-only glue, no activation traffic).
    w4 = (jnp.transpose(params["w4"].reshape(100, 64, 3, 3), (2, 3, 1, 0))
          .reshape(64 * 3 * 3, 100).astype(jnp.bfloat16))         # (576, 100)
    w5 = jnp.transpose(params["w5"]).astype(jnp.bfloat16)         # (100, 10)
    b1 = params["b1"].reshape(1, -1).astype(jnp.float32)
    b2 = params["b2"].reshape(1, -1).astype(jnp.float32)
    b3 = params["b3"].reshape(1, -1).astype(jnp.float32)
    b4 = params["b4"].reshape(1, -1).astype(jnp.float32)
    b5 = params["b5"].reshape(1, -1).astype(jnp.float32)

    def _full(arr):
        # whole array in VMEM, same block for every grid step (no re-DMA after step 0)
        return pl.BlockSpec(arr.shape, lambda nn: (0, 0))

    grid_spec = pltpu.PrefetchScalarGridSpec(
        num_scalar_prefetch=0,
        grid=(n,),
        in_specs=[
            pl.BlockSpec((1, 28, 28, 1), lambda nn: (nn, 0, 0, 0)),
            _full(w1), _full(b1),
            _full(w2), _full(b2),
            _full(w3), _full(b3),
            _full(w4), _full(b4),
            _full(w5), _full(b5),
        ],
        out_specs=pl.BlockSpec((1, 1, 10), lambda nn: (nn, 0, 0)),
        scratch_shapes=[
            pltpu.VMEM((28, 28, 1), jnp.float32),    # a0: staged input
            pltpu.VMEM((24, 24, 16), jnp.float32),   # a1: conv1+relu
            pltpu.VMEM((20, 20, 32), jnp.float32),   # a2: conv2+relu
            pltpu.VMEM((20, 10, 32), jnp.float32),   # t2: pool2 temp
            pltpu.VMEM((10, 10, 32), jnp.float32),   # a2p: pool2 out
            pltpu.VMEM((6, 6, 64), jnp.float32),     # a3: conv3+relu
            pltpu.VMEM((6, 3, 64), jnp.float32),     # t3: pool3 temp
        ],
    )

    out = pl.pallas_call(
        _mycnn_kernel,
        out_shape=jax.ShapeDtypeStruct((n, 1, 10), jnp.float32),
        grid_spec=grid_spec,
        compiler_params=pltpu.CompilerParams(
            dimension_semantics=("parallel",)),       # batch grid -> both TCs on v7x
    )(x, w1, b1, w2, b2, w3, b3, w4, b4, w5, b5)
    return out.reshape(n, 10)


# ----------------------------------------------------------------------------
# Parameters (PyTorch layout) and driver
# ----------------------------------------------------------------------------
def init_params(key):
    ks = jax.random.split(key, 10)
    s = 0.05
    return {
        "w1": s * jax.random.normal(ks[0], (16, 1, 5, 5), jnp.float32),
        "b1": s * jax.random.normal(ks[1], (16,), jnp.float32),
        "w2": s * jax.random.normal(ks[2], (32, 16, 5, 5), jnp.float32),
        "b2": s * jax.random.normal(ks[3], (32,), jnp.float32),
        "w3": s * jax.random.normal(ks[4], (64, 32, 5, 5), jnp.float32),
        "b3": s * jax.random.normal(ks[5], (64,), jnp.float32),
        "w4": s * jax.random.normal(ks[6], (100, 64 * 3 * 3), jnp.float32),
        "b4": s * jax.random.normal(ks[7], (100,), jnp.float32),
        "w5": s * jax.random.normal(ks[8], (10, 100), jnp.float32),
        "b5": s * jax.random.normal(ks[9], (10,), jnp.float32),
    }


if __name__ == "__main__":
    # fc4 in_features = 64*3*3 implies a 1x28x28 input (MNIST-like).
    batch = 2
    key = jax.random.PRNGKey(0)
    kx, kp = jax.random.split(key)
    x = jax.random.normal(kx, (batch, 1, 28, 28), jnp.float32)
    params = init_params(kp)

    fwd = jax.jit(mycnn_forward)
    out = jax.block_until_ready(fwd(x, params))

    assert out.shape == (batch, 10), out.shape
    assert out.dtype == jnp.float32, out.dtype
    assert bool(jnp.all(jnp.isfinite(out)))
    print("KERNEL_OK")
</pallas_src>

<mosaic_0001>
module attributes {stable_mosaic.version = 11 : i64} {
  func.func @_mycnn_kernel(%arg0: i32, %arg1: memref<1x28x28x1xf32, #tpu.memory_space<vmem>>, %arg2: memref<25x16xbf16, #tpu.memory_space<vmem>>, %arg3: memref<1x16xf32, #tpu.memory_space<vmem>>, %arg4: memref<400x32xbf16, #tpu.memory_space<vmem>>, %arg5: memref<1x32xf32, #tpu.memory_space<vmem>>, %arg6: memref<800x64xbf16, #tpu.memory_space<vmem>>, %arg7: memref<1x64xf32, #tpu.memory_space<vmem>>, %arg8: memref<576x100xbf16, #tpu.memory_space<vmem>>, %arg9: memref<1x100xf32, #tpu.memory_space<vmem>>, %arg10: memref<100x10xbf16, #tpu.memory_space<vmem>>, %arg11: memref<1x10xf32, #tpu.memory_space<vmem>>, %arg12: memref<1x1x10xf32, #tpu.memory_space<vmem>>, %arg13: memref<28x28x1xf32, #tpu.memory_space<vmem>>, %arg14: memref<24x24x16xf32, #tpu.memory_space<vmem>>, %arg15: memref<20x20x32xf32, #tpu.memory_space<vmem>>, %arg16: memref<20x10x32xf32, #tpu.memory_space<vmem>>, %arg17: memref<10x10x32xf32, #tpu.memory_space<vmem>>, %arg18: memref<6x6x64xf32, #tpu.memory_space<vmem>>, %arg19: memref<6x3x64xf32, #tpu.memory_space<vmem>>) attributes {dimension_semantics = [#tpu.dimension_semantics<parallel>], iteration_bounds = array<i64: 2>, scalar_prefetch = 0 : i64, scratch_operands = 7 : i64, tpu.core_type = #tpu.core_type<tc>, window_params = [{transform_indices = @transform_0, window_bounds = array<i64: 1, 28, 28, 1>}, {pipeline_mode = #tpu.pipeline_mode<synchronous>, transform_indices = @transform_1, window_bounds = array<i64: 25, 16>}, {pipeline_mode = #tpu.pipeline_mode<synchronous>, transform_indices = @transform_2, window_bounds = array<i64: 1, 16>}, {pipeline_mode = #tpu.pipeline_mode<synchronous>, transform_indices = @transform_3, window_bounds = array<i64: 400, 32>}, {pipeline_mode = #tpu.pipeline_mode<synchronous>, transform_indices = @transform_4, window_bounds = array<i64: 1, 32>}, {pipeline_mode = #tpu.pipeline_mode<synchronous>, transform_indices = @transform_5, window_bounds = array<i64: 800, 64>}, {pipeline_mode = #tpu.pipeline_mode<synchronous>, transform_indices = @transform_6, window_bounds = array<i64: 1, 64>}, {pipeline_mode = #tpu.pipeline_mode<synchronous>, transform_indices = @transform_7, window_bounds = array<i64: 576, 100>}, {pipeline_mode = #tpu.pipeline_mode<synchronous>, transform_indices = @transform_8, window_bounds = array<i64: 1, 100>}, {pipeline_mode = #tpu.pipeline_mode<synchronous>, transform_indices = @transform_9, window_bounds = array<i64: 100, 10>}, {pipeline_mode = #tpu.pipeline_mode<synchronous>, transform_indices = @transform_10, window_bounds = array<i64: 1, 10>}, {transform_indices = @transform_11, window_bounds = array<i64: 1, 1, 10>}]} {
    %c0 = arith.constant 0 : index
    %c0_0 = arith.constant 0 : index
    %c0_1 = arith.constant 0 : index
    %c0_2 = arith.constant 0 : index
    %0 = vector.load %arg1[%c0, %c0_0, %c0_1, %c0_2] : memref<1x28x28x1xf32, #tpu.memory_space<vmem>>, vector<1x28x28x1xf32>
    %1 = vector.shape_cast %0 : vector<1x28x28x1xf32> to vector<28x28x1xf32>
    %c0_3 = arith.constant 0 : index
    %c0_4 = arith.constant 0 : index
    %c0_5 = arith.constant 0 : index
    %2 = vector.load %arg13[%c0_3, %c0_4, %c0_5] : memref<28x28x1xf32, #tpu.memory_space<vmem>>, vector<28x28x1xf32>
    tpu.vector_store %arg13[%c0_3, %c0_4, %c0_5], %1 {strides = array<i32>} : memref<28x28x1xf32, #tpu.memory_space<vmem>>, vector<28x28x1xf32>,
    %c0_6 = arith.constant 0 : index
    %c0_7 = arith.constant 0 : index
    %3 = vector.load %arg2[%c0_6, %c0_7] : memref<25x16xbf16, #tpu.memory_space<vmem>>, vector<25x16xbf16>
    %c0_8 = arith.constant 0 : index
    %c0_9 = arith.constant 0 : index
    %4 = vector.load %arg3[%c0_8, %c0_9] : memref<1x16xf32, #tpu.memory_space<vmem>>, vector<1x16xf32>
    %c0_i32 = arith.constant 0 : i32
    %c24_i32 = arith.constant 24 : i32
    %5 = arith.addi %c0_i32, %c24_i32 : i32
    %c1_i32 = arith.constant 1 : i32
    scf.for %arg20 = %c0_i32 to %5 step %c1_i32  : i32 {
      %c1_i32_70 = arith.constant 1 : i32
      %61 = arith.muli %arg20, %c1_i32_70 : i32
      %c0_i32_71 = arith.constant 0 : i32
      %62 = arith.addi %c0_i32_71, %61 : i32
      %c0_i32_72 = arith.constant 0 : i32
      %63 = arith.addi %62, %c0_i32_72 : i32
      %64 = arith.index_cast %63 : i32 to index
      %c0_73 = arith.constant 0 : index
      %c0_74 = arith.constant 0 : index
      %65 = vector.load %arg13[%64, %c0_73, %c0_74] : memref<28x28x1xf32, #tpu.memory_space<vmem>>, vector<1x24x1xf32>
      %66 = vector.shape_cast %65 : vector<1x24x1xf32> to vector<24x1xf32>
      %c0_i32_75 = arith.constant 0 : i32
      %67 = arith.addi %62, %c0_i32_75 : i32
      %68 = arith.index_cast %67 : i32 to index
      %c1_76 = arith.constant 1 : index
      %c0_77 = arith.constant 0 : index
      %69 = vector.load %arg13[%68, %c1_76, %c0_77] : memref<28x28x1xf32, #tpu.memory_space<vmem>>, vector<1x24x1xf32>
      %70 = vector.shape_cast %69 : vector<1x24x1xf32> to vector<24x1xf32>
      %c0_i32_78 = arith.constant 0 : i32
      %71 = arith.addi %62, %c0_i32_78 : i32
      %72 = arith.index_cast %71 : i32 to index
      %c2 = arith.constant 2 : index
      %c0_79 = arith.constant 0 : index
      %73 = vector.load %arg13[%72, %c2, %c0_79] : memref<28x28x1xf32, #tpu.memory_space<vmem>>, vector<1x24x1xf32>
      %74 = vector.shape_cast %73 : vector<1x24x1xf32> to vector<24x1xf32>
      %c0_i32_80 = arith.constant 0 : i32
      %75 = arith.addi %62, %c0_i32_80 : i32
      %76 = arith.index_cast %75 : i32 to index
      %c3 = arith.constant 3 : index
      %c0_81 = arith.constant 0 : index
      %77 = vector.load %arg13[%76, %c3, %c0_81] : memref<28x28x1xf32, #tpu.memory_space<vmem>>, vector<1x24x1xf32>
      %78 = vector.shape_cast %77 : vector<1x24x1xf32> to vector<24x1xf32>
      %c0_i32_82 = arith.constant 0 : i32
      %79 = arith.addi %62, %c0_i32_82 : i32
      %80 = arith.index_cast %79 : i32 to index
      %c4 = arith.constant 4 : index
      %c0_83 = arith.constant 0 : index
      %81 = vector.load %arg13[%80, %c4, %c0_83] : memref<28x28x1xf32, #tpu.memory_space<vmem>>, vector<1x24x1xf32>
      %82 = vector.shape_cast %81 : vector<1x24x1xf32> to vector<24x1xf32>
      %c1_i32_84 = arith.constant 1 : i32
      %83 = arith.addi %62, %c1_i32_84 : i32
      %84 = arith.index_cast %83 : i32 to index
      %c0_85 = arith.constant 0 : index
      %c0_86 = arith.constant 0 : index
      %85 = vector.load %arg13[%84, %c0_85, %c0_86] : memref<28x28x1xf32, #tpu.memory_space<vmem>>, vector<1x24x1xf32>
      %86 = vector.shape_cast %85 : vector<1x24x1xf32> to vector<24x1xf32>
      %c1_i32_87 = arith.constant 1 : i32
      %87 = arith.addi %62, %c1_i32_87 : i32
      %88 = arith.index_cast %87 : i32 to index
      %c1_88 = arith.constant 1 : index
      %c0_89 = arith.constant 0 : index
      %89 = vector.load %arg13[%88, %c1_88, %c0_89] : memref<28x28x1xf32, #tpu.memory_space<vmem>>, vector<1x24x1xf32>
      %90 = vector.shape_cast %89 : vector<1x24x1xf32> to vector<24x1xf32>
      %c1_i32_90 = arith.constant 1 : i32
      %91 = arith.addi %62, %c1_i32_90 : i32
      %92 = arith.index_cast %91 : i32 to index
      %c2_91 = arith.constant 2 : index
      %c0_92 = arith.constant 0 : index
      %93 = vector.load %arg13[%92, %c2_91, %c0_92] : memref<28x28x1xf32, #tpu.memory_space<vmem>>, vector<1x24x1xf32>
      %94 = vector.shape_cast %93 : vector<1x24x1xf32> to vector<24x1xf32>
      %c1_i32_93 = arith.constant 1 : i32
      %95 = arith.addi %62, %c1_i32_93 : i32
      %96 = arith.index_cast %95 : i32 to index
      %c3_94 = arith.constant 3 : index
      %c0_95 = arith.constant 0 : index
      %97 = vector.load %arg13[%96, %c3_94, %c0_95] : memref<28x28x1xf32, #tpu.memory_space<vmem>>, vector<1x24x1xf32>
      %98 = vector.shape_cast %97 : vector<1x24x1xf32> to vector<24x1xf32>
      %c1_i32_96 = arith.constant 1 : i32
      %99 = arith.addi %62, %c1_i32_96 : i32
      %100 = arith.index_cast %99 : i32 to index
      %c4_97 = arith.constant 4 : index
      %c0_98 = arith.constant 0 : index
      %101 = vector.load %arg13[%100, %c4_97, %c0_98] : memref<28x28x1xf32, #tpu.memory_space<vmem>>, vector<1x24x1xf32>
      %102 = vector.shape_cast %101 : vector<1x24x1xf32> to vector<24x1xf32>
      %c2_i32 = arith.constant 2 : i32
      %103 = arith.addi %62, %c2_i32 : i32
      %104 = arith.index_cast %103 : i32 to index
      %c0_99 = arith.constant 0 : index
      %c0_100 = arith.constant 0 : index
      %105 = vector.load %arg13[%104, %c0_99, %c0_100] : memref<28x28x1xf32, #tpu.memory_space<vmem>>, vector<1x24x1xf32>
      %106 = vector.shape_cast %105 : vector<1x24x1xf32> to vector<24x1xf32>
      %c2_i32_101 = arith.constant 2 : i32
      %107 = arith.addi %62, %c2_i32_101 : i32
      %108 = arith.index_cast %107 : i32 to index
      %c1_102 = arith.constant 1 : index
      %c0_103 = arith.constant 0 : index
      %109 = vector.load %arg13[%108, %c1_102, %c0_103] : memref<28x28x1xf32, #tpu.memory_space<vmem>>, vector<1x24x1xf32>
      %110 = vector.shape_cast %109 : vector<1x24x1xf32> to vector<24x1xf32>
      %c2_i32_104 = arith.constant 2 : i32
      %111 = arith.addi %62, %c2_i32_104 : i32
      %112 = arith.index_cast %111 : i32 to index
      %c2_105 = arith.constant 2 : index
      %c0_106 = arith.constant 0 : index
      %113 = vector.load %arg13[%112, %c2_105, %c0_106] : memref<28x28x1xf32, #tpu.memory_space<vmem>>, vector<1x24x1xf32>
      %114 = vector.shape_cast %113 : vector<1x24x1xf32> to vector<24x1xf32>
      %c2_i32_107 = arith.constant 2 : i32
      %115 = arith.addi %62, %c2_i32_107 : i32
      %116 = arith.index_cast %115 : i32 to index
      %c3_108 = arith.constant 3 : index
      %c0_109 = arith.constant 0 : index
      %117 = vector.load %arg13[%116, %c3_108, %c0_109] : memref<28x28x1xf32, #tpu.memory_space<vmem>>, vector<1x24x1xf32>
      %118 = vector.shape_cast %117 : vector<1x24x1xf32> to vector<24x1xf32>
      %c2_i32_110 = arith.constant 2 : i32
      %119 = arith.addi %62, %c2_i32_110 : i32
      %120 = arith.index_cast %119 : i32 to index
      %c4_111 = arith.constant 4 : index
      %c0_112 = arith.constant 0 : index
      %121 = vector.load %arg13[%120, %c4_111, %c0_112] : memref<28x28x1xf32, #tpu.memory_space<vmem>>, vector<1x24x1xf32>
      %122 = vector.shape_cast %121 : vector<1x24x1xf32> to vector<24x1xf32>
      %c3_i32 = arith.constant 3 : i32
      %123 = arith.addi %62, %c3_i32 : i32
      %124 = arith.index_cast %123 : i32 to index
      %c0_113 = arith.constant 0 : index
      %c0_114 = arith.constant 0 : index
      %125 = vector.load %arg13[%124, %c0_113, %c0_114] : memref<28x28x1xf32, #tpu.memory_space<vmem>>, vector<1x24x1xf32>
      %126 = vector.shape_cast %125 : vector<1x24x1xf32> to vector<24x1xf32>
      %c3_i32_115 = arith.constant 3 : i32
      %127 = arith.addi %62, %c3_i32_115 : i32
      %128 = arith.index_cast %127 : i32 to index
      %c1_116 = arith.constant 1 : index
      %c0_117 = arith.constant 0 : index
      %129 = vector.load %arg13[%128, %c1_116, %c0_117] : memref<28x28x1xf32, #tpu.memory_space<vmem>>, vector<1x24x1xf32>
      %130 = vector.shape_cast %129 : vector<1x24x1xf32> to vector<24x1xf32>
      %c3_i32_118 = arith.constant 3 : i32
      %131 = arith.addi %62, %c3_i32_118 : i32
      %132 = arith.index_cast %131 : i32 to index
      %c2_119 = arith.constant 2 : index
      %c0_120 = arith.constant 0 : index
      %133 = vector.load %arg13[%132, %c2_119, %c0_120] : memref<28x28x1xf32, #tpu.memory_space<vmem>>, vector<1x24x1xf32>
      %134 = vector.shape_cast %133 : vector<1x24x1xf32> to vector<24x1xf32>
      %c3_i32_121 = arith.constant 3 : i32
      %135 = arith.addi %62, %c3_i32_121 : i32
      %136 = arith.index_cast %135 : i32 to index
      %c3_122 = arith.constant 3 : index
      %c0_123 = arith.constant 0 : index
      %137 = vector.load %arg13[%136, %c3_122, %c0_123] : memref<28x28x1xf32, #tpu.memory_space<vmem>>, vector<1x24x1xf32>
      %138 = vector.shape_cast %137 : vector<1x24x1xf32> to vector<24x1xf32>
      %c3_i32_124 = arith.constant 3 : i32
      %139 = arith.addi %62, %c3_i32_124 : i32
      %140 = arith.index_cast %139 : i32 to index
      %c4_125 = arith.constant 4 : index
      %c0_126 = arith.constant 0 : index
      %141 = vector.load %arg13[%140, %c4_125, %c0_126] : memref<28x28x1xf32, #tpu.memory_space<vmem>>, vector<1x24x1xf32>
      %142 = vector.shape_cast %141 : vector<1x24x1xf32> to vector<24x1xf32>
      %c4_i32 = arith.constant 4 : i32
      %143 = arith.addi %62, %c4_i32 : i32
      %144 = arith.index_cast %143 : i32 to index
      %c0_127 = arith.constant 0 : index
      %c0_128 = arith.constant 0 : index
      %145 = vector.load %arg13[%144, %c0_127, %c0_128] : memref<28x28x1xf32, #tpu.memory_space<vmem>>, vector<1x24x1xf32>
      %146 = vector.shape_cast %145 : vector<1x24x1xf32> to vector<24x1xf32>
      %c4_i32_129 = arith.constant 4 : i32
      %147 = arith.addi %62, %c4_i32_129 : i32
      %148 = arith.index_cast %147 : i32 to index
      %c1_130 = arith.constant 1 : index
      %c0_131 = arith.constant 0 : index
      %149 = vector.load %arg13[%148, %c1_130, %c0_131] : memref<28x28x1xf32, #tpu.memory_space<vmem>>, vector<1x24x1xf32>
      %150 = vector.shape_cast %149 : vector<1x24x1xf32> to vector<24x1xf32>
      %c4_i32_132 = arith.constant 4 : i32
      %151 = arith.addi %62, %c4_i32_132 : i32
      %152 = arith.index_cast %151 : i32 to index
      %c2_133 = arith.constant 2 : index
      %c0_134 = arith.constant 0 : index
      %153 = vector.load %arg13[%152, %c2_133, %c0_134] : memref<28x28x1xf32, #tpu.memory_space<vmem>>, vector<1x24x1xf32>
      %154 = vector.shape_cast %153 : vector<1x24x1xf32> to vector<24x1xf32>
      %c4_i32_135 = arith.constant 4 : i32
      %155 = arith.addi %62, %c4_i32_135 : i32
      %156 = arith.index_cast %155 : i32 to index
      %c3_136 = arith.constant 3 : index
      %c0_137 = arith.constant 0 : index
      %157 = vector.load %arg13[%156, %c3_136, %c0_137] : memref<28x28x1xf32, #tpu.memory_space<vmem>>, vector<1x24x1xf32>
      %158 = vector.shape_cast %157 : vector<1x24x1xf32> to vector<24x1xf32>
      %c4_i32_138 = arith.constant 4 : i32
      %159 = arith.addi %62, %c4_i32_138 : i32
      %160 = arith.index_cast %159 : i32 to index
      %c4_139 = arith.constant 4 : index
      %c0_140 = arith.constant 0 : index
      %161 = vector.load %arg13[%160, %c4_139, %c0_140] : memref<28x28x1xf32, #tpu.memory_space<vmem>>, vector<1x24x1xf32>
      %162 = vector.shape_cast %161 : vector<1x24x1xf32> to vector<24x1xf32>
      %163 = tpu.concatenate %66, %70, %74, %78, %82, %86, %90, %94, %98, %102, %106, %110, %114, %118, %122, %126 in 1 : vector<24x1xf32>, vector<24x1xf32>, vector<24x1xf32>, vector<24x1xf32>, vector<24x1xf32>, vector<24x1xf32>, vector<24x1xf32>, vector<24x1xf32>, vector<24x1xf32>, vector<24x1xf32>, vector<24x1xf32>, vector<24x1xf32>, vector<24x1xf32>, vector<24x1xf32>, vector<24x1xf32>, vector<24x1xf32> -> vector<24x16xf32>
      %164 = tpu.concatenate %130, %134, %138, %142, %146, %150, %154, %158, %162 in 1 : vector<24x1xf32>, vector<24x1xf32>, vector<24x1xf32>, vector<24x1xf32>, vector<24x1xf32>, vector<24x1xf32>, vector<24x1xf32>, vector<24x1xf32>, vector<24x1xf32> -> vector<24x9xf32>
      %165 = tpu.concatenate %163, %164 in 1 : vector<24x16xf32>, vector<24x9xf32> -> vector<24x25xf32>
      %166 = arith.truncf %165 : vector<24x25xf32> to vector<24x25xbf16>
      %cst_141 = arith.constant dense<0.000000e+00> : vector<24x16xf32>
      %167 = tpu.matmul %166, %3, %cst_141 {dimension_numbers = #tpu.dot_dimension_numbers<[1], [0], [0], [1], [0, 0, 1, 1], [], []>} : vector<24x25xbf16>, vector<25x16xbf16>, vector<24x16xf32> -> vector<24x16xf32>
      %168 = vector.broadcast %4 : vector<1x16xf32> to vector<24x16xf32>
      %169 = arith.addf %167, %168 : vector<24x16xf32>
      %cst_142 = arith.constant 0.000000e+00 : f32
      %170 = vector.broadcast %cst_142 : f32 to vector<24x16xf32>
      %171 = arith.maximumf %169, %170 : vector<24x16xf32>
      %172 = arith.index_cast %62 : i32 to index
      %c0_143 = arith.constant 0 : index
      %c0_144 = arith.constant 0 : index
      %173 = vector.load %arg14[%172, %c0_143, %c0_144] : memref<24x24x16xf32, #tpu.memory_space<vmem>>, vector<1x24x16xf32>
      %174 = vector.shape_cast %173 : vector<1x24x16xf32> to vector<24x16xf32>
      %175 = vector.shape_cast %171 : vector<24x16xf32> to vector<1x24x16xf32>
      tpu.vector_store %arg14[%172, %c0_143, %c0_144], %175 {strides = array<i32>} : memref<24x24x16xf32, #tpu.memory_space<vmem>>, vector<1x24x16xf32>,
    }
    %c24_i32_10 = arith.constant 24 : i32
    %c0_11 = arith.constant 0 : index
    %c0_12 = arith.constant 0 : index
    %6 = vector.load %arg4[%c0_11, %c0_12] : memref<400x32xbf16, #tpu.memory_space<vmem>>, vector<400x32xbf16>
    %c0_13 = arith.constant 0 : index
    %c0_14 = arith.constant 0 : index
    %7 = vector.load %arg5[%c0_13, %c0_14] : memref<1x32xf32, #tpu.memory_space<vmem>>, vector<1x32xf32>
    %c0_i32_15 = arith.constant 0 : i32
    %c20_i32 = arith.constant 20 : i32
    %8 = arith.addi %c0_i32_15, %c20_i32 : i32
    %c1_i32_16 = arith.constant 1 : i32
    scf.for %arg20 = %c0_i32_15 to %8 step %c1_i32_16  : i32 {
      %c1_i32_70 = arith.constant 1 : i32
      %61 = arith.muli %arg20, %c1_i32_70 : i32
      %c0_i32_71 = arith.constant 0 : i32
      %62 = arith.addi %c0_i32_71, %61 : i32
      %c0_i32_72 = arith.constant 0 : i32
      %63 = arith.addi %62, %c0_i32_72 : i32
      %64 = arith.index_cast %63 : i32 to index
      %c0_73 = arith.constant 0 : index
      %c0_74 = arith.constant 0 : index
      %65 = vector.load %arg14[%64, %c0_73, %c0_74] : memref<24x24x16xf32, #tpu.memory_space<vmem>>, vector<1x20x16xf32>
      %66 = vector.shape_cast %65 : vector<1x20x16xf32> to vector<20x16xf32>
      %c0_i32_75 = arith.constant 0 : i32
      %67 = arith.addi %62, %c0_i32_75 : i32
      %68 = arith.index_cast %67 : i32 to index
      %c1_76 = arith.constant 1 : index
      %c0_77 = arith.constant 0 : index
      %69 = vector.load %arg14[%68, %c1_76, %c0_77] : memref<24x24x16xf32, #tpu.memory_space<vmem>>, vector<1x20x16xf32>
      %70 = vector.shape_cast %69 : vector<1x20x16xf32> to vector<20x16xf32>
      %c0_i32_78 = arith.constant 0 : i32
      %71 = arith.addi %62, %c0_i32_78 : i32
      %72 = arith.index_cast %71 : i32 to index
      %c2 = arith.constant 2 : index
      %c0_79 = arith.constant 0 : index
      %73 = vector.load %arg14[%72, %c2, %c0_79] : memref<24x24x16xf32, #tpu.memory_space<vmem>>, vector<1x20x16xf32>
      %74 = vector.shape_cast %73 : vector<1x20x16xf32> to vector<20x16xf32>
      %c0_i32_80 = arith.constant 0 : i32
      %75 = arith.addi %62, %c0_i32_80 : i32
      %76 = arith.index_cast %75 : i32 to index
      %c3 = arith.constant 3 : index
      %c0_81 = arith.constant 0 : index
      %77 = vector.load %arg14[%76, %c3, %c0_81] : memref<24x24x16xf32, #tpu.memory_space<vmem>>, vector<1x20x16xf32>
      %78 = vector.shape_cast %77 : vector<1x20x16xf32> to vector<20x16xf32>
      %c0_i32_82 = arith.constant 0 : i32
      %79 = arith.addi %62, %c0_i32_82 : i32
      %80 = arith.index_cast %79 : i32 to index
      %c4 = arith.constant 4 : index
      %c0_83 = arith.constant 0 : index
      %81 = vector.load %arg14[%80, %c4, %c0_83] : memref<24x24x16xf32, #tpu.memory_space<vmem>>, vector<1x20x16xf32>
      %82 = vector.shape_cast %81 : vector<1x20x16xf32> to vector<20x16xf32>
      %c1_i32_84 = arith.constant 1 : i32
      %83 = arith.addi %62, %c1_i32_84 : i32
      %84 = arith.index_cast %83 : i32 to index
      %c0_85 = arith.constant 0 : index
      %c0_86 = arith.constant 0 : index
      %85 = vector.load %arg14[%84, %c0_85, %c0_86] : memref<24x24x16xf32, #tpu.memory_space<vmem>>, vector<1x20x16xf32>
      %86 = vector.shape_cast %85 : vector<1x20x16xf32> to vector<20x16xf32>
      %c1_i32_87 = arith.constant 1 : i32
      %87 = arith.addi %62, %c1_i32_87 : i32
      %88 = arith.index_cast %87 : i32 to index
      %c1_88 = arith.constant 1 : index
      %c0_89 = arith.constant 0 : index
      %89 = vector.load %arg14[%88, %c1_88, %c0_89] : memref<24x24x16xf32, #tpu.memory_space<vmem>>, vector<1x20x16xf32>
      %90 = vector.shape_cast %89 : vector<1x20x16xf32> to vector<20x16xf32>
      %c1_i32_90 = arith.constant 1 : i32
      %91 = arith.addi %62, %c1_i32_90 : i32
      %92 = arith.index_cast %91 : i32 to index
      %c2_91 = arith.constant 2 : index
      %c0_92 = arith.constant 0 : index
      %93 = vector.load %arg14[%92, %c2_91, %c0_92] : memref<24x24x16xf32, #tpu.memory_space<vmem>>, vector<1x20x16xf32>
      %94 = vector.shape_cast %93 : vector<1x20x16xf32> to vector<20x16xf32>
      %c1_i32_93 = arith.constant 1 : i32
      %95 = arith.addi %62, %c1_i32_93 : i32
      %96 = arith.index_cast %95 : i32 to index
      %c3_94 = arith.constant 3 : index
      %c0_95 = arith.constant 0 : index
      %97 = vector.load %arg14[%96, %c3_94, %c0_95] : memref<24x24x16xf32, #tpu.memory_space<vmem>>, vector<1x20x16xf32>
      %98 = vector.shape_cast %97 : vector<1x20x16xf32> to vector<20x16xf32>
      %c1_i32_96 = arith.constant 1 : i32
      %99 = arith.addi %62, %c1_i32_96 : i32
      %100 = arith.index_cast %99 : i32 to index
      %c4_97 = arith.constant 4 : index
      %c0_98 = arith.constant 0 : index
      %101 = vector.load %arg14[%100, %c4_97, %c0_98] : memref<24x24x16xf32, #tpu.memory_space<vmem>>, vector<1x20x16xf32>
      %102 = vector.shape_cast %101 : vector<1x20x16xf32> to vector<20x16xf32>
      %c2_i32 = arith.constant 2 : i32
      %103 = arith.addi %62, %c2_i32 : i32
      %104 = arith.index_cast %103 : i32 to index
      %c0_99 = arith.constant 0 : index
      %c0_100 = arith.constant 0 : index
      %105 = vector.load %arg14[%104, %c0_99, %c0_100] : memref<24x24x16xf32, #tpu.memory_space<vmem>>, vector<1x20x16xf32>
      %106 = vector.shape_cast %105 : vector<1x20x16xf32> to vector<20x16xf32>
      %c2_i32_101 = arith.constant 2 : i32
      %107 = arith.addi %62, %c2_i32_101 : i32
      %108 = arith.index_cast %107 : i32 to index
      %c1_102 = arith.constant 1 : index
      %c0_103 = arith.constant 0 : index
      %109 = vector.load %arg14[%108, %c1_102, %c0_103] : memref<24x24x16xf32, #tpu.memory_space<vmem>>, vector<1x20x16xf32>
      %110 = vector.shape_cast %109 : vector<1x20x16xf32> to vector<20x16xf32>
      %c2_i32_104 = arith.constant 2 : i32
      %111 = arith.addi %62, %c2_i32_104 : i32
      %112 = arith.index_cast %111 : i32 to index
      %c2_105 = arith.constant 2 : index
      %c0_106 = arith.constant 0 : index
      %113 = vector.load %arg14[%112, %c2_105, %c0_106] : memref<24x24x16xf32, #tpu.memory_space<vmem>>, vector<1x20x16xf32>
      %114 = vector.shape_cast %113 : vector<1x20x16xf32> to vector<20x16xf32>
      %c2_i32_107 = arith.constant 2 : i32
      %115 = arith.addi %62, %c2_i32_107 : i32
      %116 = arith.index_cast %115 : i32 to index
      %c3_108 = arith.constant 3 : index
      %c0_109 = arith.constant 0 : index
      %117 = vector.load %arg14[%116, %c3_108, %c0_109] : memref<24x24x16xf32, #tpu.memory_space<vmem>>, vector<1x20x16xf32>
      %118 = vector.shape_cast %117 : vector<1x20x16xf32> to vector<20x16xf32>
      %c2_i32_110 = arith.constant 2 : i32
      %119 = arith.addi %62, %c2_i32_110 : i32
      %120 = arith.index_cast %119 : i32 to index
      %c4_111 = arith.constant 4 : index
      %c0_112 = arith.constant 0 : index
      %121 = vector.load %arg14[%120, %c4_111, %c0_112] : memref<24x24x16xf32, #tpu.memory_space<vmem>>, vector<1x20x16xf32>
      %122 = vector.shape_cast %121 : vector<1x20x16xf32> to vector<20x16xf32>
      %c3_i32 = arith.constant 3 : i32
      %123 = arith.addi %62, %c3_i32 : i32
      %124 = arith.index_cast %123 : i32 to index
      %c0_113 = arith.constant 0 : index
      %c0_114 = arith.constant 0 : index
      %125 = vector.load %arg14[%124, %c0_113, %c0_114] : memref<24x24x16xf32, #tpu.memory_space<vmem>>, vector<1x20x16xf32>
      %126 = vector.shape_cast %125 : vector<1x20x16xf32> to vector<20x16xf32>
      %c3_i32_115 = arith.constant 3 : i32
      %127 = arith.addi %62, %c3_i32_115 : i32
      %128 = arith.index_cast %127 : i32 to index
      %c1_116 = arith.constant 1 : index
      %c0_117 = arith.constant 0 : index
      %129 = vector.load %arg14[%128, %c1_116, %c0_117] : memref<24x24x16xf32, #tpu.memory_space<vmem>>, vector<1x20x16xf32>
      %130 = vector.shape_cast %129 : vector<1x20x16xf32> to vector<20x16xf32>
      %c3_i32_118 = arith.constant 3 : i32
      %131 = arith.addi %62, %c3_i32_118 : i32
      %132 = arith.index_cast %131 : i32 to index
      %c2_119 = arith.constant 2 : index
      %c0_120 = arith.constant 0 : index
      %133 = vector.load %arg14[%132, %c2_119, %c0_120] : memref<24x24x16xf32, #tpu.memory_space<vmem>>, vector<1x20x16xf32>
      %134 = vector.shape_cast %133 : vector<1x20x16xf32> to vector<20x16xf32>
      %c3_i32_121 = arith.constant 3 : i32
      %135 = arith.addi %62, %c3_i32_121 : i32
      %136 = arith.index_cast %135 : i32 to index
      %c3_122 = arith.constant 3 : index
      %c0_123 = arith.constant 0 : index
      %137 = vector.load %arg14[%136, %c3_122, %c0_123] : memref<24x24x16xf32, #tpu.memory_space<vmem>>, vector<1x20x16xf32>
      %138 = vector.shape_cast %137 : vector<1x20x16xf32> to vector<20x16xf32>
      %c3_i32_124 = arith.constant 3 : i32
      %139 = arith.addi %62, %c3_i32_124 : i32
      %140 = arith.index_cast %139 : i32 to index
      %c4_125 = arith.constant 4 : index
      %c0_126 = arith.constant 0 : index
      %141 = vector.load %arg14[%140, %c4_125, %c0_126] : memref<24x24x16xf32, #tpu.memory_space<vmem>>, vector<1x20x16xf32>
      %142 = vector.shape_cast %141 : vector<1x20x16xf32> to vector<20x16xf32>
      %c4_i32 = arith.constant 4 : i32
      %143 = arith.addi %62, %c4_i32 : i32
      %144 = arith.index_cast %143 : i32 to index
      %c0_127 = arith.constant 0 : index
      %c0_128 = arith.constant 0 : index
      %145 = vector.load %arg14[%144, %c0_127, %c0_128] : memref<24x24x16xf32, #tpu.memory_space<vmem>>, vector<1x20x16xf32>
      %146 = vector.shape_cast %145 : vector<1x20x16xf32> to vector<20x16xf32>
      %c4_i32_129 = arith.constant 4 : i32
      %147 = arith.addi %62, %c4_i32_129 : i32
      %148 = arith.index_cast %147 : i32 to index
      %c1_130 = arith.constant 1 : index
      %c0_131 = arith.constant 0 : index
      %149 = vector.load %arg14[%148, %c1_130, %c0_131] : memref<24x24x16xf32, #tpu.memory_space<vmem>>, vector<1x20x16xf32>
      %150 = vector.shape_cast %149 : vector<1x20x16xf32> to vector<20x16xf32>
      %c4_i32_132 = arith.constant 4 : i32
      %151 = arith.addi %62, %c4_i32_132 : i32
      %152 = arith.index_cast %151 : i32 to index
      %c2_133 = arith.constant 2 : index
      %c0_134 = arith.constant 0 : index
      %153 = vector.load %arg14[%152, %c2_133, %c0_134] : memref<24x24x16xf32, #tpu.memory_space<vmem>>, vector<1x20x16xf32>
      %154 = vector.shape_cast %153 : vector<1x20x16xf32> to vector<20x16xf32>
      %c4_i32_135 = arith.constant 4 : i32
      %155 = arith.addi %62, %c4_i32_135 : i32
      %156 = arith.index_cast %155 : i32 to index
      %c3_136 = arith.constant 3 : index
      %c0_137 = arith.constant 0 : index
      %157 = vector.load %arg14[%156, %c3_136, %c0_137] : memref<24x24x16xf32, #tpu.memory_space<vmem>>, vector<1x20x16xf32>
      %158 = vector.shape_cast %157 : vector<1x20x16xf32> to vector<20x16xf32>
      %c4_i32_138 = arith.constant 4 : i32
      %159 = arith.addi %62, %c4_i32_138 : i32
      %160 = arith.index_cast %159 : i32 to index
      %c4_139 = arith.constant 4 : index
      %c0_140 = arith.constant 0 : index
      %161 = vector.load %arg14[%160, %c4_139, %c0_140] : memref<24x24x16xf32, #tpu.memory_space<vmem>>, vector<1x20x16xf32>
      %162 = vector.shape_cast %161 : vector<1x20x16xf32> to vector<20x16xf32>
      %163 = tpu.concatenate %66, %70, %74, %78, %82, %86, %90, %94, %98, %102, %106, %110, %114, %118, %122, %126 in 1 : vector<20x16xf32>, vector<20x16xf32>, vector<20x16xf32>, vector<20x16xf32>, vector<20x16xf32>, vector<20x16xf32>, vector<20x16xf32>, vector<20x16xf32>, vector<20x16xf32>, vector<20x16xf32>, vector<20x16xf32>, vector<20x16xf32>, vector<20x16xf32>, vector<20x16xf32>, vector<20x16xf32>, vector<20x16xf32> -> vector<20x256xf32>
      %164 = tpu.concatenate %130, %134, %138, %142, %146, %150, %154, %158, %162 in 1 : vector<20x16xf32>, vector<20x16xf32>, vector<20x16xf32>, vector<20x16xf32>, vector<20x16xf32>, vector<20x16xf32>, vector<20x16xf32>, vector<20x16xf32>, vector<20x16xf32> -> vector<20x144xf32>
      %165 = tpu.concatenate %163, %164 in 1 : vector<20x256xf32>, vector<20x144xf32> -> vector<20x400xf32>
      %166 = arith.truncf %165 : vector<20x400xf32> to vector<20x400xbf16>
      %cst_141 = arith.constant dense<0.000000e+00> : vector<20x32xf32>
      %167 = tpu.matmul %166, %6, %cst_141 {dimension_numbers = #tpu.dot_dimension_numbers<[1], [0], [0], [1], [0, 0, 1, 1], [], []>} : vector<20x400xbf16>, vector<400x32xbf16>, vector<20x32xf32> -> vector<20x32xf32>
      %168 = vector.broadcast %7 : vector<1x32xf32> to vector<20x32xf32>
      %169 = arith.addf %167, %168 : vector<20x32xf32>
      %cst_142 = arith.constant 0.000000e+00 : f32
      %170 = vector.broadcast %cst_142 : f32 to vector<20x32xf32>
      %171 = arith.maximumf %169, %170 : vector<20x32xf32>
      %172 = arith.index_cast %62 : i32 to index
      %c0_143 = arith.constant 0 : index
      %c0_144 = arith.constant 0 : index
      %173 = vector.load %arg15[%172, %c0_143, %c0_144] : memref<20x20x32xf32, #tpu.memory_space<vmem>>, vector<1x20x32xf32>
      %174 = vector.shape_cast %173 : vector<1x20x32xf32> to vector<20x32xf32>
      %175 = vector.shape_cast %171 : vector<20x32xf32> to vector<1x20x32xf32>
      tpu.vector_store %arg15[%172, %c0_143, %c0_144], %175 {strides = array<i32>} : memref<20x20x32xf32, #tpu.memory_space<vmem>>, vector<1x20x32xf32>,
    }
    %c20_i32_17 = arith.constant 20 : i32
    %c0_18 = arith.constant 0 : index
    %c0_19 = arith.constant 0 : index
    %c0_20 = arith.constant 0 : index
    %9 = tpu.strided_load %arg15[%c0_18, %c0_19, %c0_20] {strides = array<i32: 1, 2, 1>} : memref<20x20x32xf32, #tpu.memory_space<vmem>>, vector<20x10x32xf32>
    %c0_21 = arith.constant 0 : index
    %c1 = arith.constant 1 : index
    %c0_22 = arith.constant 0 : index
    %10 = tpu.strided_load %arg15[%c0_21, %c1, %c0_22] {strides = array<i32: 1, 2, 1>} : memref<20x20x32xf32, #tpu.memory_space<vmem>>, vector<20x10x32xf32>
    %11 = arith.maximumf %9, %10 : vector<20x10x32xf32>
    %c0_23 = arith.constant 0 : index
    %c0_24 = arith.constant 0 : index
    %c0_25 = arith.constant 0 : index
    %12 = vector.load %arg16[%c0_23, %c0_24, %c0_25] : memref<20x10x32xf32, #tpu.memory_space<vmem>>, vector<20x10x32xf32>
    tpu.vector_store %arg16[%c0_23, %c0_24, %c0_25], %11 {strides = array<i32>} : memref<20x10x32xf32, #tpu.memory_space<vmem>>, vector<20x10x32xf32>,
    %c0_26 = arith.constant 0 : index
    %c0_27 = arith.constant 0 : index
    %c0_28 = arith.constant 0 : index
    %13 = tpu.strided_load %arg16[%c0_26, %c0_27, %c0_28] {strides = array<i32: 2, 1, 1>} : memref<20x10x32xf32, #tpu.memory_space<vmem>>, vector<10x10x32xf32>
    %c1_29 = arith.constant 1 : index
    %c0_30 = arith.constant 0 : index
    %c0_31 = arith.constant 0 : index
    %14 = tpu.strided_load %arg16[%c1_29, %c0_30, %c0_31] {strides = array<i32: 2, 1, 1>} : memref<20x10x32xf32, #tpu.memory_space<vmem>>, vector<10x10x32xf32>
    %15 = arith.maximumf %13, %14 : vector<10x10x32xf32>
    %c0_32 = arith.constant 0 : index
    %c0_33 = arith.constant 0 : index
    %c0_34 = arith.constant 0 : index
    %16 = vector.load %arg17[%c0_32, %c0_33, %c0_34] : memref<10x10x32xf32, #tpu.memory_space<vmem>>, vector<10x10x32xf32>
    tpu.vector_store %arg17[%c0_32, %c0_33, %c0_34], %15 {strides = array<i32>} : memref<10x10x32xf32, #tpu.memory_space<vmem>>, vector<10x10x32xf32>,
    %c0_35 = arith.constant 0 : index
    %c0_36 = arith.constant 0 : index
    %17 = vector.load %arg6[%c0_35, %c0_36] : memref<800x64xbf16, #tpu.memory_space<vmem>>, vector<800x64xbf16>
    %c0_37 = arith.constant 0 : index
    %c0_38 = arith.constant 0 : index
    %18 = vector.load %arg7[%c0_37, %c0_38] : memref<1x64xf32, #tpu.memory_space<vmem>>, vector<1x64xf32>
    %c0_i32_39 = arith.constant 0 : i32
    %c6_i32 = arith.constant 6 : i32
    %19 = arith.addi %c0_i32_39, %c6_i32 : i32
    %c1_i32_40 = arith.constant 1 : i32
    scf.for %arg20 = %c0_i32_39 to %19 step %c1_i32_40  : i32 {
      %c1_i32_70 = arith.constant 1 : i32
      %61 = arith.muli %arg20, %c1_i32_70 : i32
      %c0_i32_71 = arith.constant 0 : i32
      %62 = arith.addi %c0_i32_71, %61 : i32
      %c0_i32_72 = arith.constant 0 : i32
      %63 = arith.addi %62, %c0_i32_72 : i32
      %64 = arith.index_cast %63 : i32 to index
      %c0_73 = arith.constant 0 : index
      %c0_74 = arith.constant 0 : index
      %65 = vector.load %arg17[%64, %c0_73, %c0_74] : memref<10x10x32xf32, #tpu.memory_space<vmem>>, vector<1x6x32xf32>
      %66 = vector.shape_cast %65 : vector<1x6x32xf32> to vector<6x32xf32>
      %c0_i32_75 = arith.constant 0 : i32
      %67 = arith.addi %62, %c0_i32_75 : i32
      %68 = arith.index_cast %67 : i32 to index
      %c1_76 = arith.constant 1 : index
      %c0_77 = arith.constant 0 : index
      %69 = vector.load %arg17[%68, %c1_76, %c0_77] : memref<10x10x32xf32, #tpu.memory_space<vmem>>, vector<1x6x32xf32>
      %70 = vector.shape_cast %69 : vector<1x6x32xf32> to vector<6x32xf32>
      %c0_i32_78 = arith.constant 0 : i32
      %71 = arith.addi %62, %c0_i32_78 : i32
      %72 = arith.index_cast %71 : i32 to index
      %c2 = arith.constant 2 : index
      %c0_79 = arith.constant 0 : index
      %73 = vector.load %arg17[%72, %c2, %c0_79] : memref<10x10x32xf32, #tpu.memory_space<vmem>>, vector<1x6x32xf32>
      %74 = vector.shape_cast %73 : vector<1x6x32xf32> to vector<6x32xf32>
      %c0_i32_80 = arith.constant 0 : i32
      %75 = arith.addi %62, %c0_i32_80 : i32
      %76 = arith.index_cast %75 : i32 to index
      %c3 = arith.constant 3 : index
      %c0_81 = arith.constant 0 : index
      %77 = vector.load %arg17[%76, %c3, %c0_81] : memref<10x10x32xf32, #tpu.memory_space<vmem>>, vector<1x6x32xf32>
      %78 = vector.shape_cast %77 : vector<1x6x32xf32> to vector<6x32xf32>
      %c0_i32_82 = arith.constant 0 : i32
      %79 = arith.addi %62, %c0_i32_82 : i32
      %80 = arith.index_cast %79 : i32 to index
      %c4 = arith.constant 4 : index
      %c0_83 = arith.constant 0 : index
      %81 = vector.load %arg17[%80, %c4, %c0_83] : memref<10x10x32xf32, #tpu.memory_space<vmem>>, vector<1x6x32xf32>
      %82 = vector.shape_cast %81 : vector<1x6x32xf32> to vector<6x32xf32>
      %c1_i32_84 = arith.constant 1 : i32
      %83 = arith.addi %62, %c1_i32_84 : i32
      %84 = arith.index_cast %83 : i32 to index
      %c0_85 = arith.constant 0 : index
      %c0_86 = arith.constant 0 : index
      %85 = vector.load %arg17[%84, %c0_85, %c0_86] : memref<10x10x32xf32, #tpu.memory_space<vmem>>, vector<1x6x32xf32>
      %86 = vector.shape_cast %85 : vector<1x6x32xf32> to vector<6x32xf32>
      %c1_i32_87 = arith.constant 1 : i32
      %87 = arith.addi %62, %c1_i32_87 : i32
      %88 = arith.index_cast %87 : i32 to index
      %c1_88 = arith.constant 1 : index
      %c0_89 = arith.constant 0 : index
      %89 = vector.load %arg17[%88, %c1_88, %c0_89] : memref<10x10x32xf32, #tpu.memory_space<vmem>>, vector<1x6x32xf32>
      %90 = vector.shape_cast %89 : vector<1x6x32xf32> to vector<6x32xf32>
      %c1_i32_90 = arith.constant 1 : i32
      %91 = arith.addi %62, %c1_i32_90 : i32
      %92 = arith.index_cast %91 : i32 to index
      %c2_91 = arith.constant 2 : index
      %c0_92 = arith.constant 0 : index
      %93 = vector.load %arg17[%92, %c2_91, %c0_92] : memref<10x10x32xf32, #tpu.memory_space<vmem>>, vector<1x6x32xf32>
      %94 = vector.shape_cast %93 : vector<1x6x32xf32> to vector<6x32xf32>
      %c1_i32_93 = arith.constant 1 : i32
      %95 = arith.addi %62, %c1_i32_93 : i32
      %96 = arith.index_cast %95 : i32 to index
      %c3_94 = arith.constant 3 : index
      %c0_95 = arith.constant 0 : index
      %97 = vector.load %arg17[%96, %c3_94, %c0_95] : memref<10x10x32xf32, #tpu.memory_space<vmem>>, vector<1x6x32xf32>
      %98 = vector.shape_cast %97 : vector<1x6x32xf32> to vector<6x32xf32>
      %c1_i32_96 = arith.constant 1 : i32
      %99 = arith.addi %62, %c1_i32_96 : i32
      %100 = arith.index_cast %99 : i32 to index
      %c4_97 = arith.constant 4 : index
      %c0_98 = arith.constant 0 : index
      %101 = vector.load %arg17[%100, %c4_97, %c0_98] : memref<10x10x32xf32, #tpu.memory_space<vmem>>, vector<1x6x32xf32>
      %102 = vector.shape_cast %101 : vector<1x6x32xf32> to vector<6x32xf32>
      %c2_i32 = arith.constant 2 : i32
      %103 = arith.addi %62, %c2_i32 : i32
      %104 = arith.index_cast %103 : i32 to index
      %c0_99 = arith.constant 0 : index
      %c0_100 = arith.constant 0 : index
      %105 = vector.load %arg17[%104, %c0_99, %c0_100] : memref<10x10x32xf32, #tpu.memory_space<vmem>>, vector<1x6x32xf32>
      %106 = vector.shape_cast %105 : vector<1x6x32xf32> to vector<6x32xf32>
      %c2_i32_101 = arith.constant 2 : i32
      %107 = arith.addi %62, %c2_i32_101 : i32
      %108 = arith.index_cast %107 : i32 to index
      %c1_102 = arith.constant 1 : index
      %c0_103 = arith.constant 0 : index
      %109 = vector.load %arg17[%108, %c1_102, %c0_103] : memref<10x10x32xf32, #tpu.memory_space<vmem>>, vector<1x6x32xf32>
      %110 = vector.shape_cast %109 : vector<1x6x32xf32> to vector<6x32xf32>
      %c2_i32_104 = arith.constant 2 : i32
      %111 = arith.addi %62, %c2_i32_104 : i32
      %112 = arith.index_cast %111 : i32 to index
      %c2_105 = arith.constant 2 : index
      %c0_106 = arith.constant 0 : index
      %113 = vector.load %arg17[%112, %c2_105, %c0_106] : memref<10x10x32xf32, #tpu.memory_space<vmem>>, vector<1x6x32xf32>
      %114 = vector.shape_cast %113 : vector<1x6x32xf32> to vector<6x32xf32>
      %c2_i32_107 = arith.constant 2 : i32
      %115 = arith.addi %62, %c2_i32_107 : i32
      %116 = arith.index_cast %115 : i32 to index
      %c3_108 = arith.constant 3 : index
      %c0_109 = arith.constant 0 : index
      %117 = vector.load %arg17[%116, %c3_108, %c0_109] : memref<10x10x32xf32, #tpu.memory_space<vmem>>, vector<1x6x32xf32>
      %118 = vector.shape_cast %117 : vector<1x6x32xf32> to vector<6x32xf32>
      %c2_i32_110 = arith.constant 2 : i32
      %119 = arith.addi %62, %c2_i32_110 : i32
      %120 = arith.index_cast %119 : i32 to index
      %c4_111 = arith.constant 4 : index
      %c0_112 = arith.constant 0 : index
      %121 = vector.load %arg17[%120, %c4_111, %c0_112] : memref<10x10x32xf32, #tpu.memory_space<vmem>>, vector<1x6x32xf32>
      %122 = vector.shape_cast %121 : vector<1x6x32xf32> to vector<6x32xf32>
      %c3_i32 = arith.constant 3 : i32
      %123 = arith.addi %62, %c3_i32 : i32
      %124 = arith.index_cast %123 : i32 to index
      %c0_113 = arith.constant 0 : index
      %c0_114 = arith.constant 0 : index
      %125 = vector.load %arg17[%124, %c0_113, %c0_114] : memref<10x10x32xf32, #tpu.memory_space<vmem>>, vector<1x6x32xf32>
      %126 = vector.shape_cast %125 : vector<1x6x32xf32> to vector<6x32xf32>
      %c3_i32_115 = arith.constant 3 : i32
      %127 = arith.addi %62, %c3_i32_115 : i32
      %128 = arith.index_cast %127 : i32 to index
      %c1_116 = arith.constant 1 : index
      %c0_117 = arith.constant 0 : index
      %129 = vector.load %arg17[%128, %c1_116, %c0_117] : memref<10x10x32xf32, #tpu.memory_space<vmem>>, vector<1x6x32xf32>
      %130 = vector.shape_cast %129 : vector<1x6x32xf32> to vector<6x32xf32>
      %c3_i32_118 = arith.constant 3 : i32
      %131 = arith.addi %62, %c3_i32_118 : i32
      %132 = arith.index_cast %131 : i32 to index
      %c2_119 = arith.constant 2 : index
      %c0_120 = arith.constant 0 : index
      %133 = vector.load %arg17[%132, %c2_119, %c0_120] : memref<10x10x32xf32, #tpu.memory_space<vmem>>, vector<1x6x32xf32>
      %134 = vector.shape_cast %133 : vector<1x6x32xf32> to vector<6x32xf32>
      %c3_i32_121 = arith.constant 3 : i32
      %135 = arith.addi %62, %c3_i32_121 : i32
      %136 = arith.index_cast %135 : i32 to index
      %c3_122 = arith.constant 3 : index
      %c0_123 = arith.constant 0 : index
      %137 = vector.load %arg17[%136, %c3_122, %c0_123] : memref<10x10x32xf32, #tpu.memory_space<vmem>>, vector<1x6x32xf32>
      %138 = vector.shape_cast %137 : vector<1x6x32xf32> to vector<6x32xf32>
      %c3_i32_124 = arith.constant 3 : i32
      %139 = arith.addi %62, %c3_i32_124 : i32
      %140 = arith.index_cast %139 : i32 to index
      %c4_125 = arith.constant 4 : index
      %c0_126 = arith.constant 0 : index
      %141 = vector.load %arg17[%140, %c4_125, %c0_126] : memref<10x10x32xf32, #tpu.memory_space<vmem>>, vector<1x6x32xf32>
      %142 = vector.shape_cast %141 : vector<1x6x32xf32> to vector<6x32xf32>
      %c4_i32 = arith.constant 4 : i32
      %143 = arith.addi %62, %c4_i32 : i32
      %144 = arith.index_cast %143 : i32 to index
      %c0_127 = arith.constant 0 : index
      %c0_128 = arith.constant 0 : index
      %145 = vector.load %arg17[%144, %c0_127, %c0_128] : memref<10x10x32xf32, #tpu.memory_space<vmem>>, vector<1x6x32xf32>
      %146 = vector.shape_cast %145 : vector<1x6x32xf32> to vector<6x32xf32>
      %c4_i32_129 = arith.constant 4 : i32
      %147 = arith.addi %62, %c4_i32_129 : i32
      %148 = arith.index_cast %147 : i32 to index
      %c1_130 = arith.constant 1 : index
      %c0_131 = arith.constant 0 : index
      %149 = vector.load %arg17[%148, %c1_130, %c0_131] : memref<10x10x32xf32, #tpu.memory_space<vmem>>, vector<1x6x32xf32>
      %150 = vector.shape_cast %149 : vector<1x6x32xf32> to vector<6x32xf32>
      %c4_i32_132 = arith.constant 4 : i32
      %151 = arith.addi %62, %c4_i32_132 : i32
      %152 = arith.index_cast %151 : i32 to index
      %c2_133 = arith.constant 2 : index
      %c0_134 = arith.constant 0 : index
      %153 = vector.load %arg17[%152, %c2_133, %c0_134] : memref<10x10x32xf32, #tpu.memory_space<vmem>>, vector<1x6x32xf32>
      %154 = vector.shape_cast %153 : vector<1x6x32xf32> to vector<6x32xf32>
      %c4_i32_135 = arith.constant 4 : i32
      %155 = arith.addi %62, %c4_i32_135 : i32
      %156 = arith.index_cast %155 : i32 to index
      %c3_136 = arith.constant 3 : index
      %c0_137 = arith.constant 0 : index
      %157 = vector.load %arg17[%156, %c3_136, %c0_137] : memref<10x10x32xf32, #tpu.memory_space<vmem>>, vector<1x6x32xf32>
      %158 = vector.shape_cast %157 : vector<1x6x32xf32> to vector<6x32xf32>
      %c4_i32_138 = arith.constant 4 : i32
      %159 = arith.addi %62, %c4_i32_138 : i32
      %160 = arith.index_cast %159 : i32 to index
      %c4_139 = arith.constant 4 : index
      %c0_140 = arith.constant 0 : index
      %161 = vector.load %arg17[%160, %c4_139, %c0_140] : memref<10x10x32xf32, #tpu.memory_space<vmem>>, vector<1x6x32xf32>
      %162 = vector.shape_cast %161 : vector<1x6x32xf32> to vector<6x32xf32>
      %163 = tpu.concatenate %66, %70, %74, %78, %82, %86, %90, %94, %98, %102, %106, %110, %114, %118, %122, %126 in 1 : vector<6x32xf32>, vector<6x32xf32>, vector<6x32xf32>, vector<6x32xf32>, vector<6x32xf32>, vector<6x32xf32>, vector<6x32xf32>, vector<6x32xf32>, vector<6x32xf32>, vector<6x32xf32>, vector<6x32xf32>, vector<6x32xf32>, vector<6x32xf32>, vector<6x32xf32>, vector<6x32xf32>, vector<6x32xf32> -> vector<6x512xf32>
      %164 = tpu.concatenate %130, %134, %138, %142, %146, %150, %154, %158, %162 in 1 : vector<6x32xf32>, vector<6x32xf32>, vector<6x32xf32>, vector<6x32xf32>, vector<6x32xf32>, vector<6x32xf32>, vector<6x32xf32>, vector<6x32xf32>, vector<6x32xf32> -> vector<6x288xf32>
      %165 = tpu.concatenate %163, %164 in 1 : vector<6x512xf32>, vector<6x288xf32> -> vector<6x800xf32>
      %166 = arith.truncf %165 : vector<6x800xf32> to vector<6x800xbf16>
      %cst_141 = arith.constant dense<0.000000e+00> : vector<6x64xf32>
      %167 = tpu.matmul %166, %17, %cst_141 {dimension_numbers = #tpu.dot_dimension_numbers<[1], [0], [0], [1], [0, 0, 1, 1], [], []>} : vector<6x800xbf16>, vector<800x64xbf16>, vector<6x64xf32> -> vector<6x64xf32>
      %168 = vector.broadcast %18 : vector<1x64xf32> to vector<6x64xf32>
      %169 = arith.addf %167, %168 : vector<6x64xf32>
      %cst_142 = arith.constant 0.000000e+00 : f32
      %170 = vector.broadcast %cst_142 : f32 to vector<6x64xf32>
      %171 = arith.maximumf %169, %170 : vector<6x64xf32>
      %172 = arith.index_cast %62 : i32 to index
      %c0_143 = arith.constant 0 : index
      %c0_144 = arith.constant 0 : index
      %173 = vector.load %arg18[%172, %c0_143, %c0_144] : memref<6x6x64xf32, #tpu.memory_space<vmem>>, vector<1x6x64xf32>
      %174 = vector.shape_cast %173 : vector<1x6x64xf32> to vector<6x64xf32>
      %175 = vector.shape_cast %171 : vector<6x64xf32> to vector<1x6x64xf32>
      tpu.vector_store %arg18[%172, %c0_143, %c0_144], %175 {strides = array<i32>} : memref<6x6x64xf32, #tpu.memory_space<vmem>>, vector<1x6x64xf32>,
    }
    %c6_i32_41 = arith.constant 6 : i32
    %c0_42 = arith.constant 0 : index
    %c0_43 = arith.constant 0 : index
    %c0_44 = arith.constant 0 : index
    %20 = tpu.strided_load %arg18[%c0_42, %c0_43, %c0_44] {strides = array<i32: 1, 2, 1>} : memref<6x6x64xf32, #tpu.memory_space<vmem>>, vector<6x3x64xf32>
    %c0_45 = arith.constant 0 : index
    %c1_46 = arith.constant 1 : index
    %c0_47 = arith.constant 0 : index
    %21 = tpu.strided_load %arg18[%c0_45, %c1_46, %c0_47] {strides = array<i32: 1, 2, 1>} : memref<6x6x64xf32, #tpu.memory_space<vmem>>, vector<6x3x64xf32>
    %22 = arith.maximumf %20, %21 : vector<6x3x64xf32>
    %c0_48 = arith.constant 0 : index
    %c0_49 = arith.constant 0 : index
    %c0_50 = arith.constant 0 : index
    %23 = vector.load %arg19[%c0_48, %c0_49, %c0_50] : memref<6x3x64xf32, #tpu.memory_space<vmem>>, vector<6x3x64xf32>
    tpu.vector_store %arg19[%c0_48, %c0_49, %c0_50], %22 {strides = array<i32>} : memref<6x3x64xf32, #tpu.memory_space<vmem>>, vector<6x3x64xf32>,
    %c0_51 = arith.constant 0 : index
    %c0_52 = arith.constant 0 : index
    %c0_53 = arith.constant 0 : index
    %24 = tpu.strided_load %arg19[%c0_51, %c0_52, %c0_53] {strides = array<i32: 2, 1, 1>} : memref<6x3x64xf32, #tpu.memory_space<vmem>>, vector<3x3x64xf32>
    %c1_54 = arith.constant 1 : index
    %c0_55 = arith.constant 0 : index
    %c0_56 = arith.constant 0 : index
    %25 = tpu.strided_load %arg19[%c1_54, %c0_55, %c0_56] {strides = array<i32: 2, 1, 1>} : memref<6x3x64xf32, #tpu.memory_space<vmem>>, vector<3x3x64xf32>
    %26 = arith.maximumf %24, %25 : vector<3x3x64xf32>
    %27 = vector.extract_strided_slice %26 {offsets = [0, 0, 0], sizes = [1, 1, 64], strides = [1, 1, 1]} : vector<3x3x64xf32> to vector<1x1x64xf32>
    %28 = vector.shape_cast %27 : vector<1x1x64xf32> to vector<1x64xf32>
    %29 = vector.extract_strided_slice %26 {offsets = [0, 1, 0], sizes = [1, 1, 64], strides = [1, 1, 1]} : vector<3x3x64xf32> to vector<1x1x64xf32>
    %30 = vector.shape_cast %29 : vector<1x1x64xf32> to vector<1x64xf32>
    %31 = vector.extract_strided_slice %26 {offsets = [0, 2, 0], sizes = [1, 1, 64], strides = [1, 1, 1]} : vector<3x3x64xf32> to vector<1x1x64xf32>
    %32 = vector.shape_cast %31 : vector<1x1x64xf32> to vector<1x64xf32>
    %33 = vector.extract_strided_slice %26 {offsets = [1, 0, 0], sizes = [1, 1, 64], strides = [1, 1, 1]} : vector<3x3x64xf32> to vector<1x1x64xf32>
    %34 = vector.shape_cast %33 : vector<1x1x64xf32> to vector<1x64xf32>
    %35 = vector.extract_strided_slice %26 {offsets = [1, 1, 0], sizes = [1, 1, 64], strides = [1, 1, 1]} : vector<3x3x64xf32> to vector<1x1x64xf32>
    %36 = vector.shape_cast %35 : vector<1x1x64xf32> to vector<1x64xf32>
    %37 = vector.extract_strided_slice %26 {offsets = [1, 2, 0], sizes = [1, 1, 64], strides = [1, 1, 1]} : vector<3x3x64xf32> to vector<1x1x64xf32>
    %38 = vector.shape_cast %37 : vector<1x1x64xf32> to vector<1x64xf32>
    %39 = vector.extract_strided_slice %26 {offsets = [2, 0, 0], sizes = [1, 1, 64], strides = [1, 1, 1]} : vector<3x3x64xf32> to vector<1x1x64xf32>
    %40 = vector.shape_cast %39 : vector<1x1x64xf32> to vector<1x64xf32>
    %41 = vector.extract_strided_slice %26 {offsets = [2, 1, 0], sizes = [1, 1, 64], strides = [1, 1, 1]} : vector<3x3x64xf32> to vector<1x1x64xf32>
    %42 = vector.shape_cast %41 : vector<1x1x64xf32> to vector<1x64xf32>
    %43 = vector.extract_strided_slice %26 {offsets = [2, 2, 0], sizes = [1, 1, 64], strides = [1, 1, 1]} : vector<3x3x64xf32> to vector<1x1x64xf32>
    %44 = vector.shape_cast %43 : vector<1x1x64xf32> to vector<1x64xf32>
    %45 = tpu.concatenate %28, %30, %32, %34, %36, %38, %40, %42, %44 in 1 : vector<1x64xf32>, vector<1x64xf32>, vector<1x64xf32>, vector<1x64xf32>, vector<1x64xf32>, vector<1x64xf32>, vector<1x64xf32>, vector<1x64xf32>, vector<1x64xf32> -> vector<1x576xf32>
    %46 = arith.truncf %45 : vector<1x576xf32> to vector<1x576xbf16>
    %c0_57 = arith.constant 0 : index
    %c0_58 = arith.constant 0 : index
    %47 = vector.load %arg8[%c0_57, %c0_58] : memref<576x100xbf16, #tpu.memory_space<vmem>>, vector<576x100xbf16>
    %cst = arith.constant dense<0.000000e+00> : vector<1x100xf32>
    %48 = tpu.matmul %46, %47, %cst {dimension_numbers = #tpu.dot_dimension_numbers<[1], [0], [0], [1], [0, 0, 1, 1], [], []>} : vector<1x576xbf16>, vector<576x100xbf16>, vector<1x100xf32> -> vector<1x100xf32>
    %c0_59 = arith.constant 0 : index
    %c0_60 = arith.constant 0 : index
    %49 = vector.load %arg9[%c0_59, %c0_60] : memref<1x100xf32, #tpu.memory_space<vmem>>, vector<1x100xf32>
    %50 = arith.addf %48, %49 : vector<1x100xf32>
    %cst_61 = arith.constant 0.000000e+00 : f32
    %51 = vector.broadcast %cst_61 : f32 to vector<1x100xf32>
    %52 = arith.maximumf %50, %51 : vector<1x100xf32>
    %53 = arith.truncf %52 : vector<1x100xf32> to vector<1x100xbf16>
    %c0_62 = arith.constant 0 : index
    %c0_63 = arith.constant 0 : index
    %54 = vector.load %arg10[%c0_62, %c0_63] : memref<100x10xbf16, #tpu.memory_space<vmem>>, vector<100x10xbf16>
    %cst_64 = arith.constant dense<0.000000e+00> : vector<1x10xf32>
    %55 = tpu.matmul %53, %54, %cst_64 {dimension_numbers = #tpu.dot_dimension_numbers<[1], [0], [0], [1], [0, 0, 1, 1], [], []>} : vector<1x100xbf16>, vector<100x10xbf16>, vector<1x10xf32> -> vector<1x10xf32>
    %c0_65 = arith.constant 0 : index
    %c0_66 = arith.constant 0 : index
    %56 = vector.load %arg11[%c0_65, %c0_66] : memref<1x10xf32, #tpu.memory_space<vmem>>, vector<1x10xf32>
    %57 = arith.addf %55, %56 : vector<1x10xf32>
    %c0_67 = arith.constant 0 : index
    %c0_68 = arith.constant 0 : index
    %c0_69 = arith.constant 0 : index
    %58 = vector.load %arg12[%c0_67, %c0_68, %c0_69] : memref<1x1x10xf32, #tpu.memory_space<vmem>>, vector<1x1x10xf32>
    %59 = vector.shape_cast %58 : vector<1x1x10xf32> to vector<1x10xf32>
    %60 = vector.shape_cast %57 : vector<1x10xf32> to vector<1x1x10xf32>
    tpu.vector_store %arg12[%c0_67, %c0_68, %c0_69], %60 {strides = array<i32>} : memref<1x1x10xf32, #tpu.memory_space<vmem>>, vector<1x1x10xf32>,
    return
  }
  func.func @transform_0(%arg0: i32) -> (i32, i32, i32, i32) {
    %c0_i32 = arith.constant 0 : i32
    %c0_i32_0 = arith.constant 0 : i32
    %c0_i32_1 = arith.constant 0 : i32
    %c0_i32_2 = arith.constant 0 : i32
    return %arg0, %c0_i32, %c0_i32_0, %c0_i32_1 : i32, i32, i32, i32
  }
  func.func @transform_1(%arg0: i32) -> (i32, i32) {
    %c0_i32 = arith.constant 0 : i32
    %c0_i32_0 = arith.constant 0 : i32
    %c0_i32_1 = arith.constant 0 : i32
    return %c0_i32, %c0_i32_0 : i32, i32
  }
  func.func @transform_2(%arg0: i32) -> (i32, i32) {
    %c0_i32 = arith.constant 0 : i32
    %c0_i32_0 = arith.constant 0 : i32
    %c0_i32_1 = arith.constant 0 : i32
    return %c0_i32, %c0_i32_0 : i32, i32
  }
  func.func @transform_3(%arg0: i32) -> (i32, i32) {
    %c0_i32 = arith.constant 0 : i32
    %c0_i32_0 = arith.constant 0 : i32
    %c0_i32_1 = arith.constant 0 : i32
    return %c0_i32, %c0_i32_0 : i32, i32
  }
  func.func @transform_4(%arg0: i32) -> (i32, i32) {
    %c0_i32 = arith.constant 0 : i32
    %c0_i32_0 = arith.constant 0 : i32
    %c0_i32_1 = arith.constant 0 : i32
    return %c0_i32, %c0_i32_0 : i32, i32
  }
  func.func @transform_5(%arg0: i32) -> (i32, i32) {
    %c0_i32 = arith.constant 0 : i32
    %c0_i32_0 = arith.constant 0 : i32
    %c0_i32_1 = arith.constant 0 : i32
    return %c0_i32, %c0_i32_0 : i32, i32
  }
  func.func @transform_6(%arg0: i32) -> (i32, i32) {
    %c0_i32 = arith.constant 0 : i32
    %c0_i32_0 = arith.constant 0 : i32
    %c0_i32_1 = arith.constant 0 : i32
    return %c0_i32, %c0_i32_0 : i32, i32
  }
  func.func @transform_7(%arg0: i32) -> (i32, i32) {
    %c0_i32 = arith.constant 0 : i32
    %c0_i32_0 = arith.constant 0 : i32
    %c0_i32_1 = arith.constant 0 : i32
    return %c0_i32, %c0_i32_0 : i32, i32
  }
  func.func @transform_8(%arg0: i32) -> (i32, i32) {
    %c0_i32 = arith.constant 0 : i32
    %c0_i32_0 = arith.constant 0 : i32
    %c0_i32_1 = arith.constant 0 : i32
    return %c0_i32, %c0_i32_0 : i32, i32
  }
  func.func @transform_9(%arg0: i32) -> (i32, i32) {
    %c0_i32 = arith.constant 0 : i32
    %c0_i32_0 = arith.constant 0 : i32
    %c0_i32_1 = arith.constant 0 : i32
    return %c0_i32, %c0_i32_0 : i32, i32
  }
  func.func @transform_10(%arg0: i32) -> (i32, i32) {
    %c0_i32 = arith.constant 0 : i32
    %c0_i32_0 = arith.constant 0 : i32
    %c0_i32_1 = arith.constant 0 : i32
    return %c0_i32, %c0_i32_0 : i32, i32
  }
  func.func @transform_11(%arg0: i32) -> (i32, i32, i32) {
    %c0_i32 = arith.constant 0 : i32
    %c0_i32_0 = arith.constant 0 : i32
    %c0_i32_1 = arith.constant 0 : i32
    return %arg0, %c0_i32, %c0_i32_0 : i32, i32, i32
  }
}

</mosaic_0001>

<llo_original>
// kernel: mycnn_forward.1
$region0: #{mycnn_forward.1}
  #allocation0 [shape = 'u32[]', space=smem, size = 0x4, offset = 0x4, fixed_abs, tag = 'smem constant byte address 0x4 - core index']
  #allocation1 [shape = 'u32[72,128]{1,0:T(1,128)}', space=vmem, size = 0x9000, scoped, tag = 'internal scratch']
  #allocation2 [shape = 'f32[28,28,1]{2,1,0:T(8,128)}', space=vmem, size = 0x70000, scoped, tag = 'scratch operand']
  #allocation3 [shape = 'f32[24,24,16]{2,1,0:T(8,128)}', space=vmem, size = 0x48000, scoped, tag = 'scratch operand']
  #allocation4 [shape = 'f32[20,20,32]{2,1,0:T(8,128)}', space=vmem, size = 0x3c000, scoped, tag = 'scratch operand']
  #allocation5 [shape = 'f32[20,10,32]{2,1,0:T(8,128)}', space=vmem, size = 0x28000, scoped, tag = 'scratch operand']
  #allocation6 [shape = 'f32[10,10,32]{2,1,0:T(8,128)}', space=vmem, size = 0x14000, scoped, tag = 'scratch operand']
  #allocation7 [shape = 'f32[6,6,64]{2,1,0:T(8,128)}', space=vmem, size = 0x6000, scoped, tag = 'scratch operand']
  #allocation8 [shape = 'f32[6,3,64]{2,1,0:T(4,128)}', space=vmem, size = 0x3000, scoped, tag = 'scratch operand']
  %s0 = inlined_call_operand.vmem [shape: f32[2,28,28,1], index: 0, kind: input, shape index: {}]
  %s1 = inlined_call_operand.vmem [shape: bf16[25,16], index: 1, kind: input, shape index: {}]
  %s2 = inlined_call_operand.vmem [shape: f32[1,16], index: 2, kind: input, shape index: {}]
  %s3 = inlined_call_operand.vmem [shape: bf16[400,32], index: 3, kind: input, shape index: {}]
  %s4 = inlined_call_operand.vmem [shape: f32[1,32], index: 4, kind: input, shape index: {}]
  %s5 = inlined_call_operand.vmem [shape: bf16[800,64], index: 5, kind: input, shape index: {}]
  %s6 = inlined_call_operand.vmem [shape: f32[1,64], index: 6, kind: input, shape index: {}]
  %s7 = inlined_call_operand.vmem [shape: bf16[576,100], index: 7, kind: input, shape index: {}]
  %s8 = inlined_call_operand.vmem [shape: f32[1,100], index: 8, kind: input, shape index: {}]
  %s9 = inlined_call_operand.vmem [shape: bf16[100,10], index: 9, kind: input, shape index: {}]
  %s10 = inlined_call_operand.vmem [shape: f32[1,10], index: 10, kind: input, shape index: {}]
  %s11 = inlined_call_operand.hbm [shape: f32[2,1,10], index: 11, kind: output, shape index: {}]
  %s12 = sld [smem:[#allocation0]]
  $region98: #{mycnn_forward.1} parent=0
    _
  %s14 = ssub.s32 1, %s12
  %s15 = scalar_select 0, %s14, %s12
  $region1: #{mycnn_forward.1} parent=0
    #allocation9 [shape = 'u8[1024]{0}', space=vmem, size = 0x400, scoped, tag = 'output window, operand 0']
    #allocation10 [shape = 's32[2]{0}', space=sflag, size = 0x8, scoped, tag = 'scoped memory for mycnn_forward.1']
    %16 = vsyncpa [#allocation10], 0
    %s17 = scalar_lea.sflag [#allocation10], 1
    %18 = vsyncpa %s17, 0
    loop: start=0, step=1, limit=4
    $region2: #{mycnn_forward.1} parent=1 // loop_pre_header
      _
    $region3: #{mycnn_forward.1} parent=1 // loop_header
      %s20 = sphi 0, %s24
      %p21 = scmp.ge.s32.totalorder %s20, 4
      %s30 = sphi 0, %s32
      %s33 = sphi 0, %s30
      %s34 = sphi 0, %s33
      %s50 = sphi 0, %s34
      %s54 = sphi 0, %s54
      %s56 = sphi 0, %s54
      %s57 = sphi 0, %s56
      %s71 = sphi 0, %s57
      %s75 = sphi 0, %s75
      %s77 = sphi 0, %s75
      %s78 = sphi 0, %s77
      %s92 = sphi 0, %s78
      %s96 = sphi 0, %s96
      %s98 = sphi 0, %s96
      %s99 = sphi 0, %s98
      %s113 = sphi 0, %s99
      %s117 = sphi 0, %s117
      %s119 = sphi 0, %s117
      %s120 = sphi 0, %s119
      %s134 = sphi 0, %s120
      %s138 = sphi 0, %s138
      %s140 = sphi 0, %s138
      %s141 = sphi 0, %s140
      %s155 = sphi 0, %s141
      %s159 = sphi 0, %s159
      %s161 = sphi 0, %s159
      %s162 = sphi 0, %s161
      %s176 = sphi 0, %s162
      %s180 = sphi 0, %s180
      %s182 = sphi 0, %s180
      %s183 = sphi 0, %s182
      %s197 = sphi 0, %s183
      %s201 = sphi 0, %s201
      %s203 = sphi 0, %s201
      %s204 = sphi 0, %s203
      %s218 = sphi 0, %s204
      %s222 = sphi 0, %s222
      %s224 = sphi 0, %s222
      %s225 = sphi 0, %s224
      %s239 = sphi 0, %s225
      %s243 = sphi 0, %s243
      %s245 = sphi 0, %s243
      %s246 = sphi 0, %s245
      %s260 = sphi 0, %s246
      %s266 = sphi 0, %s268
      %s269 = sphi 0, %s266
      %s270 = sphi 0, %s269
      %s286 = sphi 0, %s270
    $region4: #{mycnn_forward.1} parent=1 // loop_header_branch
      %23 = sbr.rel (%p21) target = $region8
    $region5: #{mycnn_forward.1} parent=1 // loop_body
      %s25 = ssub.s32 %s20, 1
      %s26 = ssub.s32 %s20, 2
      %s27 = sadd.s32 %s20, 1
      %s28 = ssub.s32 %s20, %s27
      %p29 = scmp.eq.s32.totalorder %s28, 0
      %s31 = sadd.s32 %s30, 1
      %s32 = scalar_select %p29, %s30, %s31
      %p35 = pneg %p29
      %p36 = scmp.eq.s32.totalorder %s20, 1
      %p37 = por %p35, %p36
      %p38 = scmp.ne.s32.totalorder %s30, %s33
      %p39 = scmp.eq.s32.totalorder %s20, 0
      %p40 = por %p38, %p39
      %p41 = scmp.ne.s32.totalorder %s30, %s33
      %p42 = scmp.eq.s32.totalorder %s25, 1
      %p43 = por %p41, %p42
      %p44 = scmp.ne.s32.totalorder %s33, %s34
      %p45 = scmp.eq.s32.totalorder %s25, 0
      %p46 = por %p44, %p45
      %p47 = scmp.ne.s32.totalorder %s33, %s34
      %p48 = scmp.eq.s32.totalorder %s26, 1
      %p49 = por %p47, %p48
      %p51 = scmp.ne.s32.totalorder %s34, %s50
      %p52 = scmp.eq.s32.totalorder %s26, 0
      %p53 = por %p51, %p52
      %s55 = sadd.s32 %s54, 1
      %p58 = scmp.eq.s32.totalorder %s20, 1
      %p59 = scmp.ne.s32.totalorder %s54, %s56
      %p60 = scmp.eq.s32.totalorder %s20, 0
      %p61 = por %p59, %p60
      %p62 = scmp.ne.s32.totalorder %s54, %s56
      %p63 = scmp.eq.s32.totalorder %s25, 1
      %p64 = por %p62, %p63
      %p65 = scmp.ne.s32.totalorder %s56, %s57
      %p66 = scmp.eq.s32.totalorder %s25, 0
      %p67 = por %p65, %p66
      %p68 = scmp.ne.s32.totalorder %s56, %s57
      %p69 = scmp.eq.s32.totalorder %s26, 1
      %p70 = por %p68, %p69
      %p72 = scmp.ne.s32.totalorder %s57, %s71
      %p73 = scmp.eq.s32.totalorder %s26, 0
      %p74 = por %p72, %p73
      %s76 = sadd.s32 %s75, 1
      %p79 = scmp.eq.s32.totalorder %s20, 1
      %p80 = scmp.ne.s32.totalorder %s75, %s77
      %p81 = scmp.eq.s32.totalorder %s20, 0
      %p82 = por %p80, %p81
      %p83 = scmp.ne.s32.totalorder %s75, %s77
      %p84 = scmp.eq.s32.totalorder %s25, 1
      %p85 = por %p83, %p84
      %p86 = scmp.ne.s32.totalorder %s77, %s78
      %p87 = scmp.eq.s32.totalorder %s25, 0
      %p88 = por %p86, %p87
      %p89 = scmp.ne.s32.totalorder %s77, %s78
      %p90 = scmp.eq.s32.totalorder %s26, 1
      %p91 = por %p89, %p90
      %p93 = scmp.ne.s32.totalorder %s78, %s92
      %p94 = scmp.eq.s32.totalorder %s26, 0
      %p95 = por %p93, %p94
      %s97 = sadd.s32 %s96, 1
      %p100 = scmp.eq.s32.totalorder %s20, 1
      %p101 = scmp.ne.s32.totalorder %s96, %s98
      %p102 = scmp.eq.s32.totalorder %s20, 0
      %p103 = por %p101, %p102
      %p104 = scmp.ne.s32.totalorder %s96, %s98
      %p105 = scmp.eq.s32.totalorder %s25, 1
      %p106 = por %p104, %p105
      %p107 = scmp.ne.s32.totalorder %s98, %s99
      %p108 = scmp.eq.s32.totalorder %s25, 0
      %p109 = por %p107, %p108
      %p110 = scmp.ne.s32.totalorder %s98, %s99
      %p111 = scmp.eq.s32.totalorder %s26, 1
      %p112 = por %p110, %p111
      %p114 = scmp.ne.s32.totalorder %s99, %s113
      %p115 = scmp.eq.s32.totalorder %s26, 0
      %p116 = por %p114, %p115
      %s118 = sadd.s32 %s117, 1
      %p121 = scmp.eq.s32.totalorder %s20, 1
      %p122 = scmp.ne.s32.totalorder %s117, %s119
      %p123 = scmp.eq.s32.totalorder %s20, 0
      %p124 = por %p122, %p123
      %p125 = scmp.ne.s32.totalorder %s117, %s119
      %p126 = scmp.eq.s32.totalorder %s25, 1
      %p127 = por %p125, %p126
      %p128 = scmp.ne.s32.totalorder %s119, %s120
      %p129 = scmp.eq.s32.totalorder %s25, 0
      %p130 = por %p128, %p129
      %p131 = scmp.ne.s32.totalorder %s119, %s120
      %p132 = scmp.eq.s32.totalorder %s26, 1
      %p133 = por %p131, %p132
      %p135 = scmp.ne.s32.totalorder %s120, %s134
      %p136 = scmp.eq.s32.totalorder %s26, 0
      %p137 = por %p135, %p136
      %s139 = sadd.s32 %s138, 1
      %p142 = scmp.eq.s32.totalorder %s20, 1
      %p143 = scmp.ne.s32.totalorder %s138, %s140
      %p144 = scmp.eq.s32.totalorder %s20, 0
      %p145 = por %p143, %p144
      %p146 = scmp.ne.s32.totalorder %s138, %s140
      %p147 = scmp.eq.s32.totalorder %s25, 1
      %p148 = por %p146, %p147
      %p149 = scmp.ne.s32.totalorder %s140, %s141
      %p150 = scmp.eq.s32.totalorder %s25, 0
      %p151 = por %p149, %p150
      %p152 = scmp.ne.s32.totalorder %s140, %s141
      %p153 = scmp.eq.s32.totalorder %s26, 1
      %p154 = por %p152, %p153
      %p156 = scmp.ne.s32.totalorder %s141, %s155
      %p157 = scmp.eq.s32.totalorder %s26, 0
      %p158 = por %p156, %p157
      %s160 = sadd.s32 %s159, 1
      %p163 = scmp.eq.s32.totalorder %s20, 1
      %p164 = scmp.ne.s32.totalorder %s159, %s161
      %p165 = scmp.eq.s32.totalorder %s20, 0
      %p166 = por %p164, %p165
      %p167 = scmp.ne.s32.totalorder %s159, %s161
      %p168 = scmp.eq.s32.totalorder %s25, 1
      %p169 = por %p167, %p168
      %p170 = scmp.ne.s32.totalorder %s161, %s162
      %p171 = scmp.eq.s32.totalorder %s25, 0
      %p172 = por %p170, %p171
      %p173 = scmp.ne.s32.totalorder %s161, %s162
      %p174 = scmp.eq.s32.totalorder %s26, 1
      %p175 = por %p173, %p174
      %p177 = scmp.ne.s32.totalorder %s162, %s176
      %p178 = scmp.eq.s32.totalorder %s26, 0
      %p179 = por %p177, %p178
      %s181 = sadd.s32 %s180, 1
      %p184 = scmp.eq.s32.totalorder %s20, 1
      %p185 = scmp.ne.s32.totalorder %s180, %s182
      %p186 = scmp.eq.s32.totalorder %s20, 0
      %p187 = por %p185, %p186
      %p188 = scmp.ne.s32.totalorder %s180, %s182
      %p189 = scmp.eq.s32.totalorder %s25, 1
      %p190 = por %p188, %p189
      %p191 = scmp.ne.s32.totalorder %s182, %s183
      %p192 = scmp.eq.s32.totalorder %s25, 0
      %p193 = por %p191, %p192
      %p194 = scmp.ne.s32.totalorder %s182, %s183
      %p195 = scmp.eq.s32.totalorder %s26, 1
      %p196 = por %p194, %p195
      %p198 = scmp.ne.s32.totalorder %s183, %s197
      %p199 = scmp.eq.s32.totalorder %s26, 0
      %p200 = por %p198, %p199
      %s202 = sadd.s32 %s201, 1
      %p205 = scmp.eq.s32.totalorder %s20, 1
      %p206 = scmp.ne.s32.totalorder %s201, %s203
      %p207 = scmp.eq.s32.totalorder %s20, 0
      %p208 = por %p206, %p207
      %p209 = scmp.ne.s32.totalorder %s201, %s203
      %p210 = scmp.eq.s32.totalorder %s25, 1
      %p211 = por %p209, %p210
      %p212 = scmp.ne.s32.totalorder %s203, %s204
      %p213 = scmp.eq.s32.totalorder %s25, 0
      %p214 = por %p212, %p213
      %p215 = scmp.ne.s32.totalorder %s203, %s204
      %p216 = scmp.eq.s32.totalorder %s26, 1
      %p217 = por %p215, %p216
      %p219 = scmp.ne.s32.totalorder %s204, %s218
      %p220 = scmp.eq.s32.totalorder %s26, 0
      %p221 = por %p219, %p220
      %s223 = sadd.s32 %s222, 1
      %p226 = scmp.eq.s32.totalorder %s20, 1
      %p227 = scmp.ne.s32.totalorder %s222, %s224
      %p228 = scmp.eq.s32.totalorder %s20, 0
      %p229 = por %p227, %p228
      %p230 = scmp.ne.s32.totalorder %s222, %s224
      %p231 = scmp.eq.s32.totalorder %s25, 1
      %p232 = por %p230, %p231
      %p233 = scmp.ne.s32.totalorder %s224, %s225
      %p234 = scmp.eq.s32.totalorder %s25, 0
      %p235 = por %p233, %p234
      %p236 = scmp.ne.s32.totalorder %s224, %s225
      %p237 = scmp.eq.s32.totalorder %s26, 1
      %p238 = por %p236, %p237
      %p240 = scmp.ne.s32.totalorder %s225, %s239
      %p241 = scmp.eq.s32.totalorder %s26, 0
      %p242 = por %p240, %p241
      %s244 = sadd.s32 %s243, 1
      %p247 = scmp.eq.s32.totalorder %s20, 1
      %p248 = scmp.ne.s32.totalorder %s243, %s245
      %p249 = scmp.eq.s32.totalorder %s20, 0
      %p250 = por %p248, %p249
      %p251 = scmp.ne.s32.totalorder %s243, %s245
      %p252 = scmp.eq.s32.totalorder %s25, 1
      %p253 = por %p251, %p252
      %p254 = scmp.ne.s32.totalorder %s245, %s246
      %p255 = scmp.eq.s32.totalorder %s25, 0
      %p256 = por %p254, %p255
      %p257 = scmp.ne.s32.totalorder %s245, %s246
      %p258 = scmp.eq.s32.totalorder %s26, 1
      %p259 = por %p257, %p258
      %p261 = scmp.ne.s32.totalorder %s246, %s260
      %p262 = scmp.eq.s32.totalorder %s26, 0
      %p263 = por %p261, %p262
      %s264 = ssub.s32 %s20, %s27
      %p265 = scmp.eq.s32.totalorder %s264, 0
      %s267 = sadd.s32 %s266, 1
      %s268 = scalar_select %p265, %s266, %s267
      %p271 = pneg %p265
      %p272 = scmp.eq.s32.totalorder %s20, 1
      %p273 = por %p271, %p272
      %p274 = scmp.ne.s32.totalorder %s266, %s269
      %p275 = scmp.eq.s32.totalorder %s20, 0
      %p276 = por %p274, %p275
      %p277 = scmp.ne.s32.totalorder %s266, %s269
      %p278 = scmp.eq.s32.totalorder %s25, 1
      %p279 = por %p277, %p278
      %p280 = scmp.ne.s32.totalorder %s269, %s270
      %p281 = scmp.eq.s32.totalorder %s25, 0
      %p282 = por %p280, %p281
      %p283 = scmp.ne.s32.totalorder %s269, %s270
      %p284 = scmp.eq.s32.totalorder %s26, 1
      %p285 = por %p283, %p284
      %p287 = scmp.ne.s32.totalorder %s270, %s286
      %p288 = scmp.eq.s32.totalorder %s26, 0
      %p289 = por %p287, %p288
      %p290 = scmp.le.s32.totalorder 1, %s20
      %p291 = scmp.lt.s32.totalorder %s20, 3
      %p292 = pnand %p290, %p291
      %p293 = pneg %p292
      // Predicated region
      $region9: #{mycnn_forward.1} parent=5 // pred_check
        _
      $region10: #{mycnn_forward.1} parent=5 // pred_check_branch
        %295 = sbr.rel (%p292) target = $region12
      $region11: #{mycnn_forward.1} parent=5 // pred_region
        %s296 = ssub.s32 %s20, 1
        // Predicated region
        $region13: #{mycnn_forward.1} parent=11 // pred_check
          %p297 = pneg %p67
        $region14: #{mycnn_forward.1} parent=11 // pred_check_branch
          %299 = sbr.rel (%p297) target = $region16
        $region15: #{mycnn_forward.1} parent=11 // pred_region
          _
        $region16: #{mycnn_forward.1} parent=11 // pred_fallthru
          _
        // Predicated region
        $region17: #{mycnn_forward.1} parent=11 // pred_check
          %p300 = pneg %p88
        $region18: #{mycnn_forward.1} parent=11 // pred_check_branch
          %302 = sbr.rel (%p300) target = $region20
        $region19: #{mycnn_forward.1} parent=11 // pred_region
          _
        $region20: #{mycnn_forward.1} parent=11 // pred_fallthru
          _
        // Predicated region
        $region21: #{mycnn_forward.1} parent=11 // pred_check
          %p303 = pneg %p109
        $region22: #{mycnn_forward.1} parent=11 // pred_check_branch
          %305 = sbr.rel (%p303) target = $region24
        $region23: #{mycnn_forward.1} parent=11 // pred_region
          _
        $region24: #{mycnn_forward.1} parent=11 // pred_fallthru
          _
        // Predicated region
        $region25: #{mycnn_forward.1} parent=11 // pred_check
          %p306 = pneg %p130
        $region26: #{mycnn_forward.1} parent=11 // pred_check_branch
          %308 = sbr.rel (%p306) target = $region28
        $region27: #{mycnn_forward.1} parent=11 // pred_region
          _
        $region28: #{mycnn_forward.1} parent=11 // pred_fallthru
          _
        // Predicated region
        $region29: #{mycnn_forward.1} parent=11 // pred_check
          %p309 = pneg %p151
        $region30: #{mycnn_forward.1} parent=11 // pred_check_branch
          %311 = sbr.rel (%p309) target = $region32
        $region31: #{mycnn_forward.1} parent=11 // pred_region
          _
        $region32: #{mycnn_forward.1} parent=11 // pred_fallthru
          _
        // Predicated region
        $region33: #{mycnn_forward.1} parent=11 // pred_check
          %p312 = pneg %p172
        $region34: #{mycnn_forward.1} parent=11 // pred_check_branch
          %314 = sbr.rel (%p312) target = $region36
        $region35: #{mycnn_forward.1} parent=11 // pred_region
          _
        $region36: #{mycnn_forward.1} parent=11 // pred_fallthru
          _
        // Predicated region
        $region37: #{mycnn_forward.1} parent=11 // pred_check
          %p315 = pneg %p193
        $region38: #{mycnn_forward.1} parent=11 // pred_check_branch
          %317 = sbr.rel (%p315) target = $region40
        $region39: #{mycnn_forward.1} parent=11 // pred_region
          _
        $region40: #{mycnn_forward.1} parent=11 // pred_fallthru
          _
        // Predicated region
        $region41: #{mycnn_forward.1} parent=11 // pred_check
          %p318 = pneg %p214
        $region42: #{mycnn_forward.1} parent=11 // pred_check_branch
          %320 = sbr.rel (%p318) target = $region44
        $region43: #{mycnn_forward.1} parent=11 // pred_region
          _
        $region44: #{mycnn_forward.1} parent=11 // pred_fallthru
          _
        // Predicated region
        $region45: #{mycnn_forward.1} parent=11 // pred_check
          %p321 = pneg %p235
        $region46: #{mycnn_forward.1} parent=11 // pred_check_branch
          %323 = sbr.rel (%p321) target = $region48
        $region47: #{mycnn_forward.1} parent=11 // pred_region
          _
        $region48: #{mycnn_forward.1} parent=11 // pred_fallthru
          _
        // Predicated region
        $region49: #{mycnn_forward.1} parent=11 // pred_check
          %p324 = pneg %p256
        $region50: #{mycnn_forward.1} parent=11 // pred_check_branch
          %326 = sbr.rel (%p324) target = $region52
        $region51: #{mycnn_forward.1} parent=11 // pred_region
          _
        $region52: #{mycnn_forward.1} parent=11 // pred_fallthru
          _
      $region12: #{mycnn_forward.1} parent=5 // pred_fallthru
        _
      %p327 = scmp.lt.s32.totalorder %s20, 2
      // Predicated region
      $region53: #{mycnn_forward.1} parent=5 // pred_check
        %p328 = pneg %p327
      $region54: #{mycnn_forward.1} parent=5 // pred_check_branch
        %330 = sbr.rel (%p328) target = $region56
      $region55: #{mycnn_forward.1} parent=5 // pred_region
        // Predicated region
        $region57: #{mycnn_forward.1} parent=55 // pred_check
          %p331 = pneg %p40
        $region58: #{mycnn_forward.1} parent=55 // pred_check_branch
          %333 = sbr.rel (%p331) target = $region60
        $region59: #{mycnn_forward.1} parent=55 // pred_region
          %p334 = scmp.lt.s32.totalorder %s20, 1
          %s335 = scalar_select %p334, %s20, 1
          %s336 = smul.addr %s335, 112
          %s337 = smul.addr %s336, 8
          %s338 = scalar_lea.vmem %s0, %s337
        $region60: #{mycnn_forward.1} parent=55 // pred_fallthru
          _
      $region56: #{mycnn_forward.1} parent=5 // pred_fallthru
        _
      %p339 = scmp.le.s32.totalorder 1, %s20
      %p340 = scmp.lt.s32.totalorder %s20, 3
      %p341 = pnand %p339, %p340
      %p342 = pneg %p341
      // Predicated region
      $region61: #{mycnn_forward.1} parent=5 // pred_check
        _
      $region62: #{mycnn_forward.1} parent=5 // pred_check_branch
        %344 = sbr.rel (%p341) target = $region64
      $region63: #{mycnn_forward.1} parent=5 // pred_region
        %s345 = ssub.s32 %s20, 1
        %p346 = scmp.lt.s32.totalorder %s25, 1
        %s347 = scalar_select %p346, %s25, 1
        %s348 = smul.addr %s347, 112
        %s349 = smul.addr %s348, 8
        %s350 = scalar_lea.vmem %s0, %s349
        %p351 = pneg %p46
        %p352 = pneg %p43
        %p353 = pneg %p67
        %p354 = pneg %p64
        %p355 = pneg %p88
        %p356 = pneg %p85
        %p357 = pneg %p109
        %p358 = pneg %p106
        %p359 = pneg %p130
        %p360 = pneg %p127
        %p361 = pneg %p151
        %p362 = pneg %p148
        %p363 = pneg %p172
        %p364 = pneg %p169
        %p365 = pneg %p193
        %p366 = pneg %p190
        %p367 = pneg %p214
        %p368 = pneg %p211
        %p369 = pneg %p235
        %p370 = pneg %p232
        %p371 = pneg %p256
        %p372 = pneg %p253
        %p373 = pneg %p282
        %p374 = pneg %p279
        %s375 = sand.u32 %s269, 1
        %s376 = scalar_lea.sflag [#allocation10], %s375
        %s377 = sand.u32 %s269, 1
        %s378 = scalar_lea.vmem [#allocation9], %s377
        %p379 = scmp.lt.s32.totalorder %s25, 1
        %s380 = scalar_select %p379, %s25, 1
        %s381 = smul.addr %s380, 112
        %s382 = smul.addr %s381, 8
        %s383 = scalar_lea.vmem %s0, %s382
        %v385 = vld [vmem:[%s383] sm:$0xff]
        %v386 = vld [vmem:[%s383 + $0x8] sm:$0xff]
        %v387 = vld [vmem:[%s383 + $0x10] sm:$0xff]
        %v388 = vld [vmem:[%s383 + $0x18] sm:$0xf]
        %v389 = vld [vmem:[%s383 + $0x20] sm:$0xff]
        %v390 = vld [vmem:[%s383 + $0x28] sm:$0xff]
        %v391 = vld [vmem:[%s383 + $0x30] sm:$0xff]
        %v392 = vld [vmem:[%s383 + $0x38] sm:$0xf]
        %v393 = vld [vmem:[%s383 + $0x40] sm:$0xff]
        %v394 = vld [vmem:[%s383 + $0x48] sm:$0xff]
        %v395 = vld [vmem:[%s383 + $0x50] sm:$0xff]
        %v396 = vld [vmem:[%s383 + $0x58] sm:$0xf]
        %v397 = vld [vmem:[%s383 + $0x60] sm:$0xff]
        %v398 = vld [vmem:[%s383 + $0x68] sm:$0xff]
        %v399 = vld [vmem:[%s383 + $0x70] sm:$0xff]
        %v400 = vld [vmem:[%s383 + $0x78] sm:$0xf]
        %v401 = vld [vmem:[%s383 + $0x80] sm:$0xff]
        %v402 = vld [vmem:[%s383 + $0x88] sm:$0xff]
        %v403 = vld [vmem:[%s383 + $0x90] sm:$0xff]
        %v404 = vld [vmem:[%s383 + $0x98] sm:$0xf]
        %v405 = vld [vmem:[%s383 + $0xa0] sm:$0xff]
        %v406 = vld [vmem:[%s383 + $0xa8] sm:$0xff]
        %v407 = vld [vmem:[%s383 + $0xb0] sm:$0xff]
        %v408 = vld [vmem:[%s383 + $0xb8] sm:$0xf]
        %v409 = vld [vmem:[%s383 + $0xc0] sm:$0xff]
        %v410 = vld [vmem:[%s383 + $0xc8] sm:$0xff]
        %v411 = vld [vmem:[%s383 + $0xd0] sm:$0xff]
        %v412 = vld [vmem:[%s383 + $0xd8] sm:$0xf]
        %v413 = vld [vmem:[%s383 + $0xe0] sm:$0xff]
        %v414 = vld [vmem:[%s383 + $0xe8] sm:$0xff]
        %v415 = vld [vmem:[%s383 + $0xf0] sm:$0xff]
        %v416 = vld [vmem:[%s383 + $0xf8] sm:$0xf]
        %v417 = vld [vmem:[%s383 + $0x100] sm:$0xff]
        %v418 = vld [vmem:[%s383 + $0x108] sm:$0xff]
        %v419 = vld [vmem:[%s383 + $0x110] sm:$0xff]
        %v420 = vld [vmem:[%s383 + $0x118] sm:$0xf]
        %v421 = vld [vmem:[%s383 + $0x120] sm:$0xff]
        %v422 = vld [vmem:[%s383 + $0x128] sm:$0xff]
        %v423 = vld [vmem:[%s383 + $0x130] sm:$0xff]
        %v424 = vld [vmem:[%s383 + $0x138] sm:$0xf]
        %v425 = vld [vmem:[%s383 + $0x140] sm:$0xff]
        %v426 = vld [vmem:[%s383 + $0x148] sm:$0xff]
        %v427 = vld [vmem:[%s383 + $0x150] sm:$0xff]
        %v428 = vld [vmem:[%s383 + $0x158] sm:$0xf]
        %v429 = vld [vmem:[%s383 + $0x160] sm:$0xff]
        %v430 = vld [vmem:[%s383 + $0x168] sm:$0xff]
        %v431 = vld [vmem:[%s383 + $0x170] sm:$0xff]
        %v432 = vld [vmem:[%s383 + $0x178] sm:$0xf]
        %v433 = vld [vmem:[%s383 + $0x180] sm:$0xff]
        %v434 = vld [vmem:[%s383 + $0x188] sm:$0xff]
        %v435 = vld [vmem:[%s383 + $0x190] sm:$0xff]
        %v436 = vld [vmem:[%s383 + $0x198] sm:$0xf]
        %v437 = vld [vmem:[%s383 + $0x1a0] sm:$0xff]
        %v438 = vld [vmem:[%s383 + $0x1a8] sm:$0xff]
        %v439 = vld [vmem:[%s383 + $0x1b0] sm:$0xff]
        %v440 = vld [vmem:[%s383 + $0x1b8] sm:$0xf]
        %v441 = vld [vmem:[%s383 + $0x1c0] sm:$0xff]
        %v442 = vld [vmem:[%s383 + $0x1c8] sm:$0xff]
        %v443 = vld [vmem:[%s383 + $0x1d0] sm:$0xff]
        %v444 = vld [vmem:[%s383 + $0x1d8] sm:$0xf]
        %v445 = vld [vmem:[%s383 + $0x1e0] sm:$0xff]
        %v446 = vld [vmem:[%s383 + $0x1e8] sm:$0xff]
        %v447 = vld [vmem:[%s383 + $0x1f0] sm:$0xff]
        %v448 = vld [vmem:[%s383 + $0x1f8] sm:$0xf]
        %v449 = vld [vmem:[%s383 + $0x200] sm:$0xff]
        %v450 = vld [vmem:[%s383 + $0x208] sm:$0xff]
        %v451 = vld [vmem:[%s383 + $0x210] sm:$0xff]
        %v452 = vld [vmem:[%s383 + $0x218] sm:$0xf]
        %v453 = vld [vmem:[%s383 + $0x220] sm:$0xff]
        %v454 = vld [vmem:[%s383 + $0x228] sm:$0xff]
        %v455 = vld [vmem:[%s383 + $0x230] sm:$0xff]
        %v456 = vld [vmem:[%s383 + $0x238] sm:$0xf]
        %v457 = vld [vmem:[%s383 + $0x240] sm:$0xff]
        %v458 = vld [vmem:[%s383 + $0x248] sm:$0xff]
        %v459 = vld [vmem:[%s383 + $0x250] sm:$0xff]
        %v460 = vld [vmem:[%s383 + $0x258] sm:$0xf]
        %v461 = vld [vmem:[%s383 + $0x260] sm:$0xff]
        %v462 = vld [vmem:[%s383 + $0x268] sm:$0xff]
        %v463 = vld [vmem:[%s383 + $0x270] sm:$0xff]
        %v464 = vld [vmem:[%s383 + $0x278] sm:$0xf]
        %v465 = vld [vmem:[%s383 + $0x280] sm:$0xff]
        %v466 = vld [vmem:[%s383 + $0x288] sm:$0xff]
        %v467 = vld [vmem:[%s383 + $0x290] sm:$0xff]
        %v468 = vld [vmem:[%s383 + $0x298] sm:$0xf]
        %v469 = vld [vmem:[%s383 + $0x2a0] sm:$0xff]
        %v470 = vld [vmem:[%s383 + $0x2a8] sm:$0xff]
        %v471 = vld [vmem:[%s383 + $0x2b0] sm:$0xff]
        %v472 = vld [vmem:[%s383 + $0x2b8] sm:$0xf]
        %v473 = vld [vmem:[%s383 + $0x2c0] sm:$0xff]
        %v474 = vld [vmem:[%s383 + $0x2c8] sm:$0xff]
        %v475 = vld [vmem:[%s383 + $0x2d0] sm:$0xff]
        %v476 = vld [vmem:[%s383 + $0x2d8] sm:$0xf]
        %v477 = vld [vmem:[%s383 + $0x2e0] sm:$0xff]
        %v478 = vld [vmem:[%s383 + $0x2e8] sm:$0xff]
        %v479 = vld [vmem:[%s383 + $0x2f0] sm:$0xff]
        %v480 = vld [vmem:[%s383 + $0x2f8] sm:$0xf]
        %v481 = vld [vmem:[%s383 + $0x300] sm:$0xff]
        %v482 = vld [vmem:[%s383 + $0x308] sm:$0xff]
        %v483 = vld [vmem:[%s383 + $0x310] sm:$0xff]
        %v484 = vld [vmem:[%s383 + $0x318] sm:$0xf]
        %v485 = vld [vmem:[%s383 + $0x320] sm:$0xff]
        %v486 = vld [vmem:[%s383 + $0x328] sm:$0xff]
        %v487 = vld [vmem:[%s383 + $0x330] sm:$0xff]
        %v488 = vld [vmem:[%s383 + $0x338] sm:$0xf]
        %v489 = vld [vmem:[%s383 + $0x340] sm:$0xff]
        %v490 = vld [vmem:[%s383 + $0x348] sm:$0xff]
        %v491 = vld [vmem:[%s383 + $0x350] sm:$0xff]
        %v492 = vld [vmem:[%s383 + $0x358] sm:$0xf]
        %v493 = vld [vmem:[%s383 + $0x360] sm:$0xff]
        %v494 = vld [vmem:[%s383 + $0x368] sm:$0xff]
        %v495 = vld [vmem:[%s383 + $0x370] sm:$0xff]
        %v496 = vld [vmem:[%s383 + $0x378] sm:$0xf]
        %vm497 = vcmask 7168
        %498 = vst.msk [vmem:[#allocation2] sm:$0xff] %vm497, %v385
        %499 = vst.msk [vmem:[#allocation2 + $0x8] sm:$0xff] %vm497, %v386
        %500 = vst.msk [vmem:[#allocation2 + $0x10] sm:$0xff] %vm497, %v387
        %vm501 = vcmask 3072
        %502 = vst.msk [vmem:[#allocation2 + $0x18] sm:$0xf] %vm501, %v388
        %503 = vst.msk [vmem:[#allocation2 + $0x20] sm:$0xff] %vm497, %v389
        %504 = vst.msk [vmem:[#allocation2 + $0x28] sm:$0xff] %vm497, %v390
        %505 = vst.msk [vmem:[#allocation2 + $0x30] sm:$0xff] %vm497, %v391
        %506 = vst.msk [vmem:[#allocation2 + $0x38] sm:$0xf] %vm501, %v392
        %507 = vst.msk [vmem:[#allocation2 + $0x40] sm:$0xff] %vm497, %v393
        %508 = vst.msk [vmem:[#allocation2 + $0x48] sm:$0xff] %vm497, %v394
        %509 = vst.msk [vmem:[#allocation2 + $0x50] sm:$0xff] %vm497, %v395
        %510 = vst.msk [vmem:[#allocation2 + $0x58] sm:$0xf] %vm501, %v396
        %511 = vst.msk [vmem:[#allocation2 + $0x60] sm:$0xff] %vm497, %v397
        %512 = vst.msk [vmem:[#allocation2 + $0x68] sm:$0xff] %vm497, %v398
        %513 = vst.msk [vmem:[#allocation2 + $0x70] sm:$0xff] %vm497, %v399
        %514 = vst.msk [vmem:[#allocation2 + $0x78] sm:$0xf] %vm501, %v400
        %515 = vst.msk [vmem:[#allocation2 + $0x80] sm:$0xff] %vm497, %v401
        %516 = vst.msk [vmem:[#allocation2 + $0x88] sm:$0xff] %vm497, %v402
        %517 = vst.msk [vmem:[#allocation2 + $0x90] sm:$0xff] %vm497, %v403
        %518 = vst.msk [vmem:[#allocation2 + $0x98] sm:$0xf] %vm501, %v404
        %519 = vst.msk [vmem:[#allocation2 + $0xa0] sm:$0xff] %vm497, %v405
        %520 = vst.msk [vmem:[#allocation2 + $0xa8] sm:$0xff] %vm497, %v406
        %521 = vst.msk [vmem:[#allocation2 + $0xb0] sm:$0xff] %vm497, %v407
        %522 = vst.msk [vmem:[#allocation2 + $0xb8] sm:$0xf] %vm501, %v408
        %523 = vst.msk [vmem:[#allocation2 + $0xc0] sm:$0xff] %vm497, %v409
        %524 = vst.msk [vmem:[#allocation2 + $0xc8] sm:$0xff] %vm497, %v410
        %525 = vst.msk [vmem:[#allocation2 + $0xd0] sm:$0xff] %vm497, %v411
        %526 = vst.msk [vmem:[#allocation2 + $0xd8] sm:$0xf] %vm501, %v412
        %527 = vst.msk [vmem:[#allocation2 + $0xe0] sm:$0xff] %vm497, %v413
        %528 = vst.msk [vmem:[#allocation2 + $0xe8] sm:$0xff] %vm497, %v414
        %529 = vst.msk [vmem:[#allocation2 + $0xf0] sm:$0xff] %vm497, %v415
        %530 = vst.msk [vmem:[#allocation2 + $0xf8] sm:$0xf] %vm501, %v416
        %531 = vst.msk [vmem:[#allocation2 + $0x100] sm:$0xff] %vm497, %v417
        %532 = vst.msk [vmem:[#allocation2 + $0x108] sm:$0xff] %vm497, %v418
        %533 = vst.msk [vmem:[#allocation2 + $0x110] sm:$0xff] %vm497, %v419
        %534 = vst.msk [vmem:[#allocation2 + $0x118] sm:$0xf] %vm501, %v420
        %535 = vst.msk [vmem:[#allocation2 + $0x120] sm:$0xff] %vm497, %v421
        %536 = vst.msk [vmem:[#allocation2 + $0x128] sm:$0xff] %vm497, %v422
        %537 = vst.msk [vmem:[#allocation2 + $0x130] sm:$0xff] %vm497, %v423
        %538 = vst.msk [vmem:[#allocation2 + $0x138] sm:$0xf] %vm501, %v424
        %539 = vst.msk [vmem:[#allocation2 + $0x140] sm:$0xff] %vm497, %v425
        %540 = vst.msk [vmem:[#allocation2 + $0x148] sm:$0xff] %vm497, %v426
        %541 = vst.msk [vmem:[#allocation2 + $0x150] sm:$0xff] %vm497, %v427
        %542 = vst.msk [vmem:[#allocation2 + $0x158] sm:$0xf] %vm501, %v428
        %543 = vst.msk [vmem:[#allocation2 + $0x160] sm:$0xff] %vm497, %v429
        %544 = vst.msk [vmem:[#allocation2 + $0x168] sm:$0xff] %vm497, %v430
        %545 = vst.msk [vmem:[#allocation2 + $0x170] sm:$0xff] %vm497, %v431
        %546 = vst.msk [vmem:[#allocation2 + $0x178] sm:$0xf] %vm501, %v432
        %547 = vst.msk [vmem:[#allocation2 + $0x180] sm:$0xff] %vm497, %v433
        %548 = vst.msk [vmem:[#allocation2 + $0x188] sm:$0xff] %vm497, %v434
        %549 = vst.msk [vmem:[#allocation2 + $0x190] sm:$0xff] %vm497, %v435
        %550 = vst.msk [vmem:[#allocation2 + $0x198] sm:$0xf] %vm501, %v436
        %551 = vst.msk [vmem:[#allocation2 + $0x1a0] sm:$0xff] %vm497, %v437
        %552 = vst.msk [vmem:[#allocation2 + $0x1a8] sm:$0xff] %vm497, %v438
        %553 = vst.msk [vmem:[#allocation2 + $0x1b0] sm:$0xff] %vm497, %v439
        %554 = vst.msk [vmem:[#allocation2 + $0x1b8] sm:$0xf] %vm501, %v440
        %555 = vst.msk [vmem:[#allocation2 + $0x1c0] sm:$0xff] %vm497, %v441
        %556 = vst.msk [vmem:[#allocation2 + $0x1c8] sm:$0xff] %vm497, %v442
        %557 = vst.msk [vmem:[#allocation2 + $0x1d0] sm:$0xff] %vm497, %v443
        %558 = vst.msk [vmem:[#allocation2 + $0x1d8] sm:$0xf] %vm501, %v444
        %559 = vst.msk [vmem:[#allocation2 + $0x1e0] sm:$0xff] %vm497, %v445
        %560 = vst.msk [vmem:[#allocation2 + $0x1e8] sm:$0xff] %vm497, %v446
        %561 = vst.msk [vmem:[#allocation2 + $0x1f0] sm:$0xff] %vm497, %v447
        %562 = vst.msk [vmem:[#allocation2 + $0x1f8] sm:$0xf] %vm501, %v448
        %563 = vst.msk [vmem:[#allocation2 + $0x200] sm:$0xff] %vm497, %v449
        %564 = vst.msk [vmem:[#allocation2 + $0x208] sm:$0xff] %vm497, %v450
        %565 = vst.msk [vmem:[#allocation2 + $0x210] sm:$0xff] %vm497, %v451
        %566 = vst.msk [vmem:[#allocation2 + $0x218] sm:$0xf] %vm501, %v452
        %567 = vst.msk [vmem:[#allocation2 + $0x220] sm:$0xff] %vm497, %v453
        %568 = vst.msk [vmem:[#allocation2 + $0x228] sm:$0xff] %vm497, %v454
        %569 = vst.msk [vmem:[#allocation2 + $0x230] sm:$0xff] %vm497, %v455
        %570 = vst.msk [vmem:[#allocation2 + $0x238] sm:$0xf] %vm501, %v456
        %571 = vst.msk [vmem:[#allocation2 + $0x240] sm:$0xff] %vm497, %v457
        %572 = vst.msk [vmem:[#allocation2 + $0x248] sm:$0xff] %vm497, %v458
        %573 = vst.msk [vmem:[#allocation2 + $0x250] sm:$0xff] %vm497, %v459
        %574 = vst.msk [vmem:[#allocation2 + $0x258] sm:$0xf] %vm501, %v460
        %575 = vst.msk [vmem:[#allocation2 + $0x260] sm:$0xff] %vm497, %v461
        %576 = vst.msk [vmem:[#allocation2 + $0x268] sm:$0xff] %vm497, %v462
        %577 = vst.msk [vmem:[#allocation2 + $0x270] sm:$0xff] %vm497, %v463
        %578 = vst.msk [vmem:[#allocation2 + $0x278] sm:$0xf] %vm501, %v464
        %579 = vst.msk [vmem:[#allocation2 + $0x280] sm:$0xff] %vm497, %v465
        %580 = vst.msk [vmem:[#allocation2 + $0x288] sm:$0xff] %vm497, %v466
        %581 = vst.msk [vmem:[#allocation2 + $0x290] sm:$0xff] %vm497, %v467
        %582 = vst.msk [vmem:[#allocation2 + $0x298] sm:$0xf] %vm501, %v468
        %583 = vst.msk [vmem:[#allocation2 + $0x2a0] sm:$0xff] %vm497, %v469
        %584 = vst.msk [vmem:[#allocation2 + $0x2a8] sm:$0xff] %vm497, %v470
        %585 = vst.msk [vmem:[#allocation2 + $0x2b0] sm:$0xff] %vm497, %v471
        %586 = vst.msk [vmem:[#allocation2 + $0x2b8] sm:$0xf] %vm501, %v472
        %587 = vst.msk [vmem:[#allocation2 + $0x2c0] sm:$0xff] %vm497, %v473
        %588 = vst.msk [vmem:[#allocation2 + $0x2c8] sm:$0xff] %vm497, %v474
        %589 = vst.msk [vmem:[#allocation2 + $0x2d0] sm:$0xff] %vm497, %v475
        %590 = vst.msk [vmem:[#allocation2 + $0x2d8] sm:$0xf] %vm501, %v476
        %591 = vst.msk [vmem:[#allocation2 + $0x2e0] sm:$0xff] %vm497, %v477
        %592 = vst.msk [vmem:[#allocation2 + $0x2e8] sm:$0xff] %vm497, %v478
        %593 = vst.msk [vmem:[#allocation2 + $0x2f0] sm:$0xff] %vm497, %v479
        %594 = vst.msk [vmem:[#allocation2 + $0x2f8] sm:$0xf] %vm501, %v480
        %595 = vst.msk [vmem:[#allocation2 + $0x300] sm:$0xff] %vm497, %v481
        %596 = vst.msk [vmem:[#allocation2 + $0x308] sm:$0xff] %vm497, %v482
        %597 = vst.msk [vmem:[#allocation2 + $0x310] sm:$0xff] %vm497, %v483
        %598 = vst.msk [vmem:[#allocation2 + $0x318] sm:$0xf] %vm501, %v484
        %599 = vst.msk [vmem:[#allocation2 + $0x320] sm:$0xff] %vm497, %v485
        %600 = vst.msk [vmem:[#allocation2 + $0x328] sm:$0xff] %vm497, %v486
        %601 = vst.msk [vmem:[#allocation2 + $0x330] sm:$0xff] %vm497, %v487
        %602 = vst.msk [vmem:[#allocation2 + $0x338] sm:$0xf] %vm501, %v488
        %603 = vst.msk [vmem:[#allocation2 + $0x340] sm:$0xff] %vm497, %v489
        %604 = vst.msk [vmem:[#allocation2 + $0x348] sm:$0xff] %vm497, %v490
        %605 = vst.msk [vmem:[#allocation2 + $0x350] sm:$0xff] %vm497, %v491
        %606 = vst.msk [vmem:[#allocation2 + $0x358] sm:$0xf] %vm501, %v492
        %607 = vst.msk [vmem:[#allocation2 + $0x360] sm:$0xff] %vm497, %v493
        %608 = vst.msk [vmem:[#allocation2 + $0x368] sm:$0xff] %vm497, %v494
        %609 = vst.msk [vmem:[#allocation2 + $0x370] sm:$0xff] %vm497, %v495
        %610 = vst.msk [vmem:[#allocation2 + $0x378] sm:$0xf] %vm501, %v496
        %v611 = vld [vmem:[%s1] sm:$0xf]
        %v612 = vld [vmem:[%s1 + $0x4] sm:$0xf]
        %v613 = vld [vmem:[%s1 + $0x8] sm:$0xf]
        %v614 = vld [vmem:[%s1 + $0xc] sm:$0x1]
        %v615 = vld [vmem:[%s2] sm:$0x1]
        loop: start=0, step=1, limit=24
        $region65: #{mycnn_forward.1} parent=63 // loop_pre_header
          _
        $region66: #{mycnn_forward.1} parent=63 // loop_header
          %s617 = sphi 0, %s621
          %p618 = scmp.ge.s32.totalorder %s617, 24
        $region67: #{mycnn_forward.1} parent=63 // loop_header_branch
          %620 = sbr.rel (%p618) target = $region71
        $region68: #{mycnn_forward.1} parent=63 // loop_body
          %s622 = smul.u32 %s617, 32
          %s623 = scalar_lea.vmem [#allocation2], %s622
          %v624 = vld [vmem:[%s623] sm:$0xff]
          %v625 = vld [vmem:[%s623 + $0x8] sm:$0xff]
          %v626 = vld [vmem:[%s623 + $0x10] sm:$0xff]
          %v627 = vld [vmem:[%s623 + $0x1] sm:$0xff]
          %v628 = vld [vmem:[%s623 + $0x9] sm:$0xff]
          %v629 = vld [vmem:[%s623 + $0x11] sm:$0xff]
          %v630 = vld [vmem:[%s623 + $0x2] sm:$0xff]
          %v631 = vld [vmem:[%s623 + $0xa] sm:$0xff]
          %v632 = vld [vmem:[%s623 + $0x12] sm:$0xff]
          %v633 = vld [vmem:[%s623 + $0x3] sm:$0xff]
          %v634 = vld [vmem:[%s623 + $0xb] sm:$0xff]
          %v635 = vld [vmem:[%s623 + $0x13] sm:$0xff]
          %v636 = vld [vmem:[%s623 + $0x4] sm:$0xff]
          %v637 = vld [vmem:[%s623 + $0xc] sm:$0xff]
          %v638 = vld [vmem:[%s623 + $0x14] sm:$0xff]
          %s639 = sadd.s32 %s617, 1
          %s640 = smul.u32 %s639, 32
          %s641 = scalar_lea.vmem [#allocation2], %s640
          %v642 = vld [vmem:[%s641] sm:$0xff]
          %v643 = vld [vmem:[%s641 + $0x8] sm:$0xff]
          %v644 = vld [vmem:[%s641 + $0x10] sm:$0xff]
          %v645 = vld [vmem:[%s641 + $0x1] sm:$0xff]
          %v646 = vld [vmem:[%s641 + $0x9] sm:$0xff]
          %v647 = vld [vmem:[%s641 + $0x11] sm:$0xff]
          %v648 = vld [vmem:[%s641 + $0x2] sm:$0xff]
          %v649 = vld [vmem:[%s641 + $0xa] sm:$0xff]
          %v650 = vld [vmem:[%s641 + $0x12] sm:$0xff]
          %v651 = vld [vmem:[%s641 + $0x3] sm:$0xff]
          %v652 = vld [vmem:[%s641 + $0xb] sm:$0xff]
          %v653 = vld [vmem:[%s641 + $0x13] sm:$0xff]
          %v654 = vld [vmem:[%s641 + $0x4] sm:$0xff]
          %v655 = vld [vmem:[%s641 + $0xc] sm:$0xff]
          %v656 = vld [vmem:[%s641 + $0x14] sm:$0xff]
          %s657 = sadd.s32 %s617, 2
          %s658 = smul.u32 %s657, 32
          %s659 = scalar_lea.vmem [#allocation2], %s658
          %v660 = vld [vmem:[%s659] sm:$0xff]
          %v661 = vld [vmem:[%s659 + $0x8] sm:$0xff]
          %v662 = vld [vmem:[%s659 + $0x10] sm:$0xff]
          %v663 = vld [vmem:[%s659 + $0x1] sm:$0xff]
          %v664 = vld [vmem:[%s659 + $0x9] sm:$0xff]
          %v665 = vld [vmem:[%s659 + $0x11] sm:$0xff]
          %v666 = vld [vmem:[%s659 + $0x2] sm:$0xff]
          %v667 = vld [vmem:[%s659 + $0xa] sm:$0xff]
          %v668 = vld [vmem:[%s659 + $0x12] sm:$0xff]
          %v669 = vld [vmem:[%s659 + $0x3] sm:$0xff]
          %v670 = vld [vmem:[%s659 + $0xb] sm:$0xff]
          %v671 = vld [vmem:[%s659 + $0x13] sm:$0xff]
          %v672 = vld [vmem:[%s659 + $0x4] sm:$0xff]
          %v673 = vld [vmem:[%s659 + $0xc] sm:$0xff]
          %v674 = vld [vmem:[%s659 + $0x14] sm:$0xff]
          %s675 = sadd.s32 %s617, 3
          %s676 = smul.u32 %s675, 32
          %s677 = scalar_lea.vmem [#allocation2], %s676
          %v678 = vld [vmem:[%s677] sm:$0xff]
          %v679 = vld [vmem:[%s677 + $0x8] sm:$0xff]
          %v680 = vld [vmem:[%s677 + $0x10] sm:$0xff]
          %v681 = vld [vmem:[%s677 + $0x1] sm:$0xff]
          %v682 = vld [vmem:[%s677 + $0x9] sm:$0xff]
          %v683 = vld [vmem:[%s677 + $0x11] sm:$0xff]
          %v684 = vld [vmem:[%s677 + $0x2] sm:$0xff]
          %v685 = vld [vmem:[%s677 + $0xa] sm:$0xff]
          %v686 = vld [vmem:[%s677 + $0x12] sm:$0xff]
          %v687 = vld [vmem:[%s677 + $0x3] sm:$0xff]
          %v688 = vld [vmem:[%s677 + $0xb] sm:$0xff]
          %v689 = vld [vmem:[%s677 + $0x13] sm:$0xff]
          %v690 = vld [vmem:[%s677 + $0x4] sm:$0xff]
          %v691 = vld [vmem:[%s677 + $0xc] sm:$0xff]
          %v692 = vld [vmem:[%s677 + $0x14] sm:$0xff]
          %s693 = sadd.s32 %s617, 4
          %s694 = smul.u32 %s693, 32
          %s695 = scalar_lea.vmem [#allocation2], %s694
          %v696 = vld [vmem:[%s695] sm:$0xff]
          %v697 = vld [vmem:[%s695 + $0x8] sm:$0xff]
          %v698 = vld [vmem:[%s695 + $0x10] sm:$0xff]
          %v699 = vld [vmem:[%s695 + $0x1] sm:$0xff]
          %v700 = vld [vmem:[%s695 + $0x9] sm:$0xff]
          %v701 = vld [vmem:[%s695 + $0x11] sm:$0xff]
          %v702 = vld [vmem:[%s695 + $0x2] sm:$0xff]
          %v703 = vld [vmem:[%s695 + $0xa] sm:$0xff]
          %v704 = vld [vmem:[%s695 + $0x12] sm:$0xff]
          %v705 = vld [vmem:[%s695 + $0x3] sm:$0xff]
          %v706 = vld [vmem:[%s695 + $0xb] sm:$0xff]
          %v707 = vld [vmem:[%s695 + $0x13] sm:$0xff]
          %v708 = vld [vmem:[%s695 + $0x4] sm:$0xff]
          %v709 = vld [vmem:[%s695 + $0xc] sm:$0xff]
          %v710 = vld [vmem:[%s695 + $0x14] sm:$0xff]
          %714 = vrot.lane.b32.xlu0 %v627, 1
          %v715 = vpop.permute.xlu0 %714
          %716 = vrot.lane.b32.xlu0 %v628, 1
          %v717 = vpop.permute.xlu0 %716
          %718 = vrot.lane.b32.xlu0 %v629, 1
          %v719 = vpop.permute.xlu0 %718
          %726 = vrot.lane.b32.xlu0 %v630, 2
          %v727 = vpop.permute.xlu0 %726
          %728 = vrot.lane.b32.xlu0 %v631, 2
          %v729 = vpop.permute.xlu0 %728
          %730 = vrot.lane.b32.xlu0 %v632, 2
          %v731 = vpop.permute.xlu0 %730
          %738 = vrot.lane.b32.xlu0 %v633, 3
          %v739 = vpop.permute.xlu0 %738
          %740 = vrot.lane.b32.xlu0 %v634, 3
          %v741 = vpop.permute.xlu0 %740
          %742 = vrot.lane.b32.xlu0 %v635, 3
          %v743 = vpop.permute.xlu0 %742
          %750 = vrot.lane.b32.xlu0 %v636, 4
          %v751 = vpop.permute.xlu0 %750
          %752 = vrot.lane.b32.xlu0 %v637, 4
          %v753 = vpop.permute.xlu0 %752
          %754 = vrot.lane.b32.xlu0 %v638, 4
          %v755 = vpop.permute.xlu0 %754
          %762 = vrot.lane.b32.xlu0 %v642, 5
          %v763 = vpop.permute.xlu0 %762
          %764 = vrot.lane.b32.xlu0 %v643, 5
          %v765 = vpop.permute.xlu0 %764
          %766 = vrot.lane.b32.xlu0 %v644, 5
          %v767 = vpop.permute.xlu0 %766
          %774 = vrot.lane.b32.xlu0 %v645, 6
          %v775 = vpop.permute.xlu0 %774
          %776 = vrot.lane.b32.xlu0 %v646, 6
          %v777 = vpop.permute.xlu0 %776
          %778 = vrot.lane.b32.xlu0 %v647, 6
          %v779 = vpop.permute.xlu0 %778
          %786 = vrot.lane.b32.xlu0 %v648, 7
          %v787 = vpop.permute.xlu0 %786
          %788 = vrot.lane.b32.xlu0 %v649, 7
          %v789 = vpop.permute.xlu0 %788
          %790 = vrot.lane.b32.xlu0 %v650, 7
          %v791 = vpop.permute.xlu0 %790
          %798 = vrot.lane.b32.xlu0 %v651, 8
          %v799 = vpop.permute.xlu0 %798
          %800 = vrot.lane.b32.xlu0 %v652, 8
          %v801 = vpop.permute.xlu0 %800
          %802 = vrot.lane.b32.xlu0 %v653, 8
          %v803 = vpop.permute.xlu0 %802
          %810 = vrot.lane.b32.xlu0 %v654, 9
          %v811 = vpop.permute.xlu0 %810
          %812 = vrot.lane.b32.xlu0 %v655, 9
          %v813 = vpop.permute.xlu0 %812
          %814 = vrot.lane.b32.xlu0 %v656, 9
          %v815 = vpop.permute.xlu0 %814
          %822 = vrot.lane.b32.xlu0 %v660, 10
          %v823 = vpop.permute.xlu0 %822
          %824 = vrot.lane.b32.xlu0 %v661, 10
          %v825 = vpop.permute.xlu0 %824
          %826 = vrot.lane.b32.xlu0 %v662, 10
          %v827 = vpop.permute.xlu0 %826
          %834 = vrot.lane.b32.xlu0 %v663, 11
          %v835 = vpop.permute.xlu0 %834
          %836 = vrot.lane.b32.xlu0 %v664, 11
          %v837 = vpop.permute.xlu0 %836
          %838 = vrot.lane.b32.xlu0 %v665, 11
          %v839 = vpop.permute.xlu0 %838
          %846 = vrot.lane.b32.xlu0 %v666, 12
          %v847 = vpop.permute.xlu0 %846
          %848 = vrot.lane.b32.xlu0 %v667, 12
          %v849 = vpop.permute.xlu0 %848
          %850 = vrot.lane.b32.xlu0 %v668, 12
          %v851 = vpop.permute.xlu0 %850
          %858 = vrot.lane.b32.xlu0 %v669, 13
          %v859 = vpop.permute.xlu0 %858
          %860 = vrot.lane.b32.xlu0 %v670, 13
          %v861 = vpop.permute.xlu0 %860
          %862 = vrot.lane.b32.xlu0 %v671, 13
          %v863 = vpop.permute.xlu0 %862
          %870 = vrot.lane.b32.xlu0 %v672, 14
          %v871 = vpop.permute.xlu0 %870
          %872 = vrot.lane.b32.xlu0 %v673, 14
          %v873 = vpop.permute.xlu0 %872
          %874 = vrot.lane.b32.xlu0 %v674, 14
          %v875 = vpop.permute.xlu0 %874
          %882 = vrot.lane.b32.xlu0 %v678, 15
          %v883 = vpop.permute.xlu0 %882
          %884 = vrot.lane.b32.xlu0 %v679, 15
          %v885 = vpop.permute.xlu0 %884
          %886 = vrot.lane.b32.xlu0 %v680, 15
          %v887 = vpop.permute.xlu0 %886
          %v891 = vsel %vm497, %v624, %v715
          %v892 = vsel %vm497, %v625, %v717
          %v893 = vsel %vm497, %v626, %v719
          %vm894 = vcmask 15360
          %v895 = vsel %vm894, %v891, %v727
          %v896 = vsel %vm894, %v892, %v729
          %v897 = vsel %vm894, %v893, %v731
          %vm898 = vcmask 23552
          %v899 = vsel %vm898, %v895, %v739
          %v900 = vsel %vm898, %v896, %v741
          %v901 = vsel %vm898, %v897, %v743
          %vm902 = vcmask 31744
          %v903 = vsel %vm902, %v899, %v751
          %v904 = vsel %vm902, %v900, %v753
          %v905 = vsel %vm902, %v901, %v755
          %vm906 = vcmask 39936
          %v907 = vsel %vm906, %v903, %v763
          %v908 = vsel %vm906, %v904, %v765
          %v909 = vsel %vm906, %v905, %v767
          %vm910 = vcmask 48128
          %v911 = vsel %vm910, %v907, %v775
          %v912 = vsel %vm910, %v908, %v777
          %v913 = vsel %vm910, %v909, %v779
          %vm914 = vcmask 56320
          %v915 = vsel %vm914, %v911, %v787
          %v916 = vsel %vm914, %v912, %v789
          %v917 = vsel %vm914, %v913, %v791
          %vm918 = vcmask 64512
          %v919 = vsel %vm918, %v915, %v799
          %v920 = vsel %vm918, %v916, %v801
          %v921 = vsel %vm918, %v917, %v803
          %vm922 = vcmask 72704
          %v923 = vsel %vm922, %v919, %v811
          %v924 = vsel %vm922, %v920, %v813
          %v925 = vsel %vm922, %v921, %v815
          %vm926 = vcmask 80896
          %v927 = vsel %vm926, %v923, %v823
          %v928 = vsel %vm926, %v924, %v825
          %v929 = vsel %vm926, %v925, %v827
          %vm930 = vcmask 89088
          %v931 = vsel %vm930, %v927, %v835
          %v932 = vsel %vm930, %v928, %v837
          %v933 = vsel %vm930, %v929, %v839
          %vm934 = vcmask 97280
          %v935 = vsel %vm934, %v931, %v847
          %v936 = vsel %vm934, %v932, %v849
          %v937 = vsel %vm934, %v933, %v851
          %vm938 = vcmask 105472
          %v939 = vsel %vm938, %v935, %v859
          %v940 = vsel %vm938, %v936, %v861
          %v941 = vsel %vm938, %v937, %v863
          %vm942 = vcmask 113664
          %v943 = vsel %vm942, %v939, %v871
          %v944 = vsel %vm942, %v940, %v873
          %v945 = vsel %vm942, %v941, %v875
          %vm946 = vcmask 121856
          %v947 = vsel %vm946, %v943, %v883
          %v948 = vsel %vm946, %v944, %v885
          %v949 = vsel %vm946, %v945, %v887
          %953 = vrot.lane.b32.xlu0 %v684, 1
          %v954 = vpop.permute.xlu0 %953
          %955 = vrot.lane.b32.xlu0 %v685, 1
          %v956 = vpop.permute.xlu0 %955
          %957 = vrot.lane.b32.xlu0 %v686, 1
          %v958 = vpop.permute.xlu0 %957
          %965 = vrot.lane.b32.xlu0 %v687, 2
          %v966 = vpop.permute.xlu0 %965
          %967 = vrot.lane.b32.xlu0 %v688, 2
          %v968 = vpop.permute.xlu0 %967
          %969 = vrot.lane.b32.xlu0 %v689, 2
          %v970 = vpop.permute.xlu0 %969
          %977 = vrot.lane.b32.xlu0 %v690, 3
          %v978 = vpop.permute.xlu0 %977
          %979 = vrot.lane.b32.xlu0 %v691, 3
          %v980 = vpop.permute.xlu0 %979
          %981 = vrot.lane.b32.xlu0 %v692, 3
          %v982 = vpop.permute.xlu0 %981
          %989 = vrot.lane.b32.xlu0 %v696, 4
          %v990 = vpop.permute.xlu0 %989
          %991 = vrot.lane.b32.xlu0 %v697, 4
          %v992 = vpop.permute.xlu0 %991
          %993 = vrot.lane.b32.xlu0 %v698, 4
          %v994 = vpop.permute.xlu0 %993
          %1001 = vrot.lane.b32.xlu0 %v699, 5
          %v1002 = vpop.permute.xlu0 %1001
          %1003 = vrot.lane.b32.xlu0 %v700, 5
          %v1004 = vpop.permute.xlu0 %1003
          %1005 = vrot.lane.b32.xlu0 %v701, 5
          %v1006 = vpop.permute.xlu0 %1005
          %1013 = vrot.lane.b32.xlu0 %v702, 6
          %v1014 = vpop.permute.xlu0 %1013
          %1015 = vrot.lane.b32.xlu0 %v703, 6
          %v1016 = vpop.permute.xlu0 %1015
          %1017 = vrot.lane.b32.xlu0 %v704, 6
          %v1018 = vpop.permute.xlu0 %1017
          %1025 = vrot.lane.b32.xlu0 %v705, 7
          %v1026 = vpop.permute.xlu0 %1025
          %1027 = vrot.lane.b32.xlu0 %v706, 7
          %v1028 = vpop.permute.xlu0 %1027
          %1029 = vrot.lane.b32.xlu0 %v707, 7
          %v1030 = vpop.permute.xlu0 %1029
          %1037 = vrot.lane.b32.xlu0 %v708, 8
          %v1038 = vpop.permute.xlu0 %1037
          %1039 = vrot.lane.b32.xlu0 %v709, 8
          %v1040 = vpop.permute.xlu0 %1039
          %1041 = vrot.lane.b32.xlu0 %v710, 8
          %v1042 = vpop.permute.xlu0 %1041
          %v1046 = vsel %vm497, %v681, %v954
          %v1047 = vsel %vm497, %v682, %v956
          %v1048 = vsel %vm497, %v683, %v958
          %v1049 = vsel %vm894, %v1046, %v966
          %v1050 = vsel %vm894, %v1047, %v968
          %v1051 = vsel %vm894, %v1048, %v970
          %v1052 = vsel %vm898, %v1049, %v978
          %v1053 = vsel %vm898, %v1050, %v980
          %v1054 = vsel %vm898, %v1051, %v982
          %v1055 = vsel %vm902, %v1052, %v990
          %v1056 = vsel %vm902, %v1053, %v992
          %v1057 = vsel %vm902, %v1054, %v994
          %v1058 = vsel %vm906, %v1055, %v1002
          %v1059 = vsel %vm906, %v1056, %v1004
          %v1060 = vsel %vm906, %v1057, %v1006
          %v1061 = vsel %vm910, %v1058, %v1014
          %v1062 = vsel %vm910, %v1059, %v1016
          %v1063 = vsel %vm910, %v1060, %v1018
          %v1064 = vsel %vm914, %v1061, %v1026
          %v1065 = vsel %vm914, %v1062, %v1028
          %v1066 = vsel %vm914, %v1063, %v1030
          %v1067 = vsel %vm918, %v1064, %v1038
          %v1068 = vsel %vm918, %v1065, %v1040
          %v1069 = vsel %vm918, %v1066, %v1042
          %1073 = vrot.lane.b32.xlu0 %v1067, 16
          %v1074 = vpop.permute.xlu0 %1073
          %1075 = vrot.lane.b32.xlu0 %v1068, 16
          %v1076 = vpop.permute.xlu0 %1075
          %1077 = vrot.lane.b32.xlu0 %v1069, 16
          %v1078 = vpop.permute.xlu0 %1077
          %vm1082 = vcmask 130048
          %v1083 = vsel %vm1082, %v947, %v1074
          %v1084 = vsel %vm1082, %v948, %v1076
          %v1085 = vsel %vm1082, %v949, %v1078
          %v1086 = vpack.c.bf16 %v1084, %v1083
          %v1087 = vpack.c.bf16 %v1085, %v1085
          %v1089 = vperm.slane %v615, 0
          %v1095 = vunpack.c.l.b16 %v611
          %v1096 = vunpack.c.l.b16 %v612
          %v1097 = vunpack.c.l.b16 %v613
          %v1098 = vunpack.c.l.b16 %v614
          %v1099 = vpack.c.b16 %v1096, %v1095
          %v1100 = vpack.c.b16 %v1098, %v1097
          %vm1102 = vcmask 203776
          %v1104 = vsel %vm1102, %v1086, 0
          %v1107 = vsel %vm1102, %v1087, 0
          %vm1109 = vcmask 1043456
          %vm1110 = vcmask 1044480
          %v1111 = vsel %vm1109, 4294967295, 65535
          %v1112 = vsel %vm1110, %v1111, 0
          %v1114 = vand.u32 %v1100, %v1112
          %1116 = vmatpush.bf16.msra.mxu0 0
          %1117 = vmatpush.bf16.msra.mxu0 0
          %1118 = vmatpush.bf16.msra.mxu0 0
          %1119 = vmatpush.bf16.msra.mxu0 0
          %1120 = vmatpush.bf16.msra.mxu0 0
          %1121 = vmatpush.bf16.msra.mxu0 0
          %1122 = vmatpush.bf16.msra.mxu0 %v1114
          %1123 = vmatpush.bf16.msra.mxu0 %v1099
          %1124 = vmatmul.bf16.gmra.mxu0 %v1104
          %v1125 = vpop.f32.mrf.mxu0
          %v1126 = vadd.f32 %v1089, %v1125
          %v1127 = vpop.f32.mrf.mxu0
          %v1128 = vadd.f32 %v1089, %v1127
          %1129 = vmatmul.bf16.gmra.mxu0 %v1107
          %v1130 = vpop.f32.mrf.mxu0
          %v1131 = vadd.f32 %v1089, %v1130
          %v1132 = vpop.f32.mrf.mxu0
          %1133 = vdwg.mxu0
          %v1134 = vmax.f32 %v1126, 0.0
          %v1135 = vmax.f32 %v1128, 0.0
          %v1136 = vmax.f32 %v1131, 0.0
          %s1137 = smul.u32 %s617, 24
          %s1138 = scalar_lea.vmem [#allocation3], %s1137
          %1139 = vst.msk [vmem:[%s1138] sm:$0xff] %vm1082, %v1134
          %1140 = vst.msk [vmem:[%s1138 + $0x8] sm:$0xff] %vm1082, %v1135
          %1141 = vst.msk [vmem:[%s1138 + $0x10] sm:$0xff] %vm1082, %v1136
        $region69: #{mycnn_forward.1} parent=63 // loop_footer
          %s621 = sadd.s32 1, %s617
        $region70: #{mycnn_forward.1} parent=63 // loop_footer_branch
          %616 = sbr.rel target = $region66
        $region71: #{mycnn_forward.1} parent=63 // loop_exit
          _
        %v1142 = vld [vmem:[%s3] sm:$0xf]
        %v1143 = vld [vmem:[%s3 + $0x4] sm:$0xf]
        %v1144 = vld [vmem:[%s3 + $0x8] sm:$0xf]
        %v1145 = vld [vmem:[%s3 + $0xc] sm:$0xf]
        %v1146 = vld [vmem:[%s3 + $0x10] sm:$0xf]
        %v1147 = vld [vmem:[%s3 + $0x14] sm:$0xf]
        %v1148 = vld [vmem:[%s3 + $0x18] sm:$0xf]
        %v1149 = vld [vmem:[%s3 + $0x1c] sm:$0xf]
        %v1150 = vld [vmem:[%s3 + $0x20] sm:$0xf]
        %v1151 = vld [vmem:[%s3 + $0x24] sm:$0xf]
        %v1152 = vld [vmem:[%s3 + $0x28] sm:$0xf]
        %v1153 = vld [vmem:[%s3 + $0x2c] sm:$0xf]
        %v1154 = vld [vmem:[%s3 + $0x30] sm:$0xf]
        %v1155 = vld [vmem:[%s3 + $0x34] sm:$0xf]
        %v1156 = vld [vmem:[%s3 + $0x38] sm:$0xf]
        %v1157 = vld [vmem:[%s3 + $0x3c] sm:$0xf]
        %v1158 = vld [vmem:[%s3 + $0x40] sm:$0xf]
        %v1159 = vld [vmem:[%s3 + $0x44] sm:$0xf]
        %v1160 = vld [vmem:[%s3 + $0x48] sm:$0xf]
        %v1161 = vld [vmem:[%s3 + $0x4c] sm:$0xf]
        %v1162 = vld [vmem:[%s3 + $0x50] sm:$0xf]
        %v1163 = vld [vmem:[%s3 + $0x54] sm:$0xf]
        %v1164 = vld [vmem:[%s3 + $0x58] sm:$0xf]
        %v1165 = vld [vmem:[%s3 + $0x5c] sm:$0xf]
        %v1166 = vld [vmem:[%s3 + $0x60] sm:$0xf]
        %v1167 = vld [vmem:[%s3 + $0x64] sm:$0xf]
        %v1168 = vld [vmem:[%s3 + $0x68] sm:$0xf]
        %v1169 = vld [vmem:[%s3 + $0x6c] sm:$0xf]
        %v1170 = vld [vmem:[%s3 + $0x70] sm:$0xf]
        %v1171 = vld [vmem:[%s3 + $0x74] sm:$0xf]
        %v1172 = vld [vmem:[%s3 + $0x78] sm:$0xf]
        %v1173 = vld [vmem:[%s3 + $0x7c] sm:$0xf]
        %v1174 = vld [vmem:[%s3 + $0x80] sm:$0xf]
        %v1175 = vld [vmem:[%s3 + $0x84] sm:$0xf]
        %v1176 = vld [vmem:[%s3 + $0x88] sm:$0xf]
        %v1177 = vld [vmem:[%s3 + $0x8c] sm:$0xf]
        %v1178 = vld [vmem:[%s3 + $0x90] sm:$0xf]
        %v1179 = vld [vmem:[%s3 + $0x94] sm:$0xf]
        %v1180 = vld [vmem:[%s3 + $0x98] sm:$0xf]
        %v1181 = vld [vmem:[%s3 + $0x9c] sm:$0xf]
        %v1182 = vld [vmem:[%s3 + $0xa0] sm:$0xf]
        %v1183 = vld [vmem:[%s3 + $0xa4] sm:$0xf]
        %v1184 = vld [vmem:[%s3 + $0xa8] sm:$0xf]
        %v1185 = vld [vmem:[%s3 + $0xac] sm:$0xf]
        %v1186 = vld [vmem:[%s3 + $0xb0] sm:$0xf]
        %v1187 = vld [vmem:[%s3 + $0xb4] sm:$0xf]
        %v1188 = vld [vmem:[%s3 + $0xb8] sm:$0xf]
        %v1189 = vld [vmem:[%s3 + $0xbc] sm:$0xf]
        %v1190 = vld [vmem:[%s3 + $0xc0] sm:$0xf]
        %v1191 = vld [vmem:[%s3 + $0xc4] sm:$0xf]
        %v1192 = vld [vmem:[%s4] sm:$0x1]
        loop: start=0, step=1, limit=20
        $region72: #{mycnn_forward.1} parent=63 // loop_pre_header
          _
        $region73: #{mycnn_forward.1} parent=63 // loop_header
          %s1194 = sphi 0, %s1198
          %p1195 = scmp.ge.s32.totalorder %s1194, 20
        $region74: #{mycnn_forward.1} parent=63 // loop_header_branch
          %1197 = sbr.rel (%p1195) target = $region78
        $region75: #{mycnn_forward.1} parent=63 // loop_body
          %s1199 = smul.u32 %s1194, 24
          %s1200 = scalar_lea.vmem [#allocation3], %s1199
          %v1201 = vld [vmem:[%s1200] sm:$0xff]
          %v1202 = vld [vmem:[%s1200 + $0x8] sm:$0xff]
          %v1203 = vld [vmem:[%s1200 + $0x10] sm:$0xf]
          %v1204 = vld [vmem:[%s1200 + $0x1] sm:$0xff]
          %v1205 = vld [vmem:[%s1200 + $0x9] sm:$0xff]
          %v1206 = vld [vmem:[%s1200 + $0x11] sm:$0xf]
          %v1207 = vld [vmem:[%s1200 + $0x2] sm:$0xff]
          %v1208 = vld [vmem:[%s1200 + $0xa] sm:$0xff]
          %v1209 = vld [vmem:[%s1200 + $0x12] sm:$0xf]
          %v1210 = vld [vmem:[%s1200 + $0x3] sm:$0xff]
          %v1211 = vld [vmem:[%s1200 + $0xb] sm:$0xff]
          %v1212 = vld [vmem:[%s1200 + $0x13] sm:$0xf]
          %v1213 = vld [vmem:[%s1200 + $0x4] sm:$0xff]
          %v1214 = vld [vmem:[%s1200 + $0xc] sm:$0xff]
          %v1215 = vld [vmem:[%s1200 + $0x14] sm:$0xf]
          %s1216 = sadd.s32 %s1194, 1
          %s1217 = smul.u32 %s1216, 24
          %s1218 = scalar_lea.vmem [#allocation3], %s1217
          %v1219 = vld [vmem:[%s1218] sm:$0xff]
          %v1220 = vld [vmem:[%s1218 + $0x8] sm:$0xff]
          %v1221 = vld [vmem:[%s1218 + $0x10] sm:$0xf]
          %v1222 = vld [vmem:[%s1218 + $0x1] sm:$0xff]
          %v1223 = vld [vmem:[%s1218 + $0x9] sm:$0xff]
          %v1224 = vld [vmem:[%s1218 + $0x11] sm:$0xf]
          %v1225 = vld [vmem:[%s1218 + $0x2] sm:$0xff]
          %v1226 = vld [vmem:[%s1218 + $0xa] sm:$0xff]
          %v1227 = vld [vmem:[%s1218 + $0x12] sm:$0xf]
          %v1228 = vld [vmem:[%s1218 + $0x3] sm:$0xff]
          %v1229 = vld [vmem:[%s1218 + $0xb] sm:$0xff]
          %v1230 = vld [vmem:[%s1218 + $0x13] sm:$0xf]
          %v1231 = vld [vmem:[%s1218 + $0x4] sm:$0xff]
          %v1232 = vld [vmem:[%s1218 + $0xc] sm:$0xff]
          %v1233 = vld [vmem:[%s1218 + $0x14] sm:$0xf]
          %s1234 = sadd.s32 %s1194, 2
          %s1235 = smul.u32 %s1234, 24
          %s1236 = scalar_lea.vmem [#allocation3], %s1235
          %v1237 = vld [vmem:[%s1236] sm:$0xff]
          %v1238 = vld [vmem:[%s1236 + $0x8] sm:$0xff]
          %v1239 = vld [vmem:[%s1236 + $0x10] sm:$0xf]
          %v1240 = vld [vmem:[%s1236 + $0x1] sm:$0xff]
          %v1241 = vld [vmem:[%s1236 + $0x9] sm:$0xff]
          %v1242 = vld [vmem:[%s1236 + $0x11] sm:$0xf]
          %v1243 = vld [vmem:[%s1236 + $0x2] sm:$0xff]
          %v1244 = vld [vmem:[%s1236 + $0xa] sm:$0xff]
          %v1245 = vld [vmem:[%s1236 + $0x12] sm:$0xf]
          %v1246 = vld [vmem:[%s1236 + $0x3] sm:$0xff]
          %v1247 = vld [vmem:[%s1236 + $0xb] sm:$0xff]
          %v1248 = vld [vmem:[%s1236 + $0x13] sm:$0xf]
          %v1249 = vld [vmem:[%s1236 + $0x4] sm:$0xff]
          %v1250 = vld [vmem:[%s1236 + $0xc] sm:$0xff]
          %v1251 = vld [vmem:[%s1236 + $0x14] sm:$0xf]
          %s1252 = sadd.s32 %s1194, 3
          %s1253 = smul.u32 %s1252, 24
          %s1254 = scalar_lea.vmem [#allocation3], %s1253
          %v1255 = vld [vmem:[%s1254] sm:$0xff]
          %v1256 = vld [vmem:[%s1254 + $0x8] sm:$0xff]
          %v1257 = vld [vmem:[%s1254 + $0x10] sm:$0xf]
          %v1258 = vld [vmem:[%s1254 + $0x1] sm:$0xff]
          %v1259 = vld [vmem:[%s1254 + $0x9] sm:$0xff]
          %v1260 = vld [vmem:[%s1254 + $0x11] sm:$0xf]
          %v1261 = vld [vmem:[%s1254 + $0x2] sm:$0xff]
          %v1262 = vld [vmem:[%s1254 + $0xa] sm:$0xff]
          %v1263 = vld [vmem:[%s1254 + $0x12] sm:$0xf]
          %v1264 = vld [vmem:[%s1254 + $0x3] sm:$0xff]
          %v1265 = vld [vmem:[%s1254 + $0xb] sm:$0xff]
          %v1266 = vld [vmem:[%s1254 + $0x13] sm:$0xf]
          %v1267 = vld [vmem:[%s1254 + $0x4] sm:$0xff]
          %v1268 = vld [vmem:[%s1254 + $0xc] sm:$0xff]
          %v1269 = vld [vmem:[%s1254 + $0x14] sm:$0xf]
          %s1270 = sadd.s32 %s1194, 4
          %s1271 = smul.u32 %s1270, 24
          %s1272 = scalar_lea.vmem [#allocation3], %s1271
          %v1273 = vld [vmem:[%s1272] sm:$0xff]
          %v1274 = vld [vmem:[%s1272 + $0x8] sm:$0xff]
          %v1275 = vld [vmem:[%s1272 + $0x10] sm:$0xf]
          %v1276 = vld [vmem:[%s1272 + $0x1] sm:$0xff]
          %v1277 = vld [vmem:[%s1272 + $0x9] sm:$0xff]
          %v1278 = vld [vmem:[%s1272 + $0x11] sm:$0xf]
          %v1279 = vld [vmem:[%s1272 + $0x2] sm:$0xff]
          %v1280 = vld [vmem:[%s1272 + $0xa] sm:$0xff]
          %v1281 = vld [vmem:[%s1272 + $0x12] sm:$0xf]
          %v1282 = vld [vmem:[%s1272 + $0x3] sm:$0xff]
          %v1283 = vld [vmem:[%s1272 + $0xb] sm:$0xff]
          %v1284 = vld [vmem:[%s1272 + $0x13] sm:$0xf]
          %v1285 = vld [vmem:[%s1272 + $0x4] sm:$0xff]
          %v1286 = vld [vmem:[%s1272 + $0xc] sm:$0xff]
          %v1287 = vld [vmem:[%s1272 + $0x14] sm:$0xf]
          %1291 = vrot.lane.b32.xlu0 %v1204, 16
          %v1292 = vpop.permute.xlu0 %1291
          %1293 = vrot.lane.b32.xlu0 %v1205, 16
          %v1294 = vpop.permute.xlu0 %1293
          %1295 = vrot.lane.b32.xlu0 %v1206, 16
          %v1296 = vpop.permute.xlu0 %1295
          %1303 = vrot.lane.b32.xlu0 %v1207, 32
          %v1304 = vpop.permute.xlu0 %1303
          %1305 = vrot.lane.b32.xlu0 %v1208, 32
          %v1306 = vpop.permute.xlu0 %1305
          %1307 = vrot.lane.b32.xlu0 %v1209, 32
          %v1308 = vpop.permute.xlu0 %1307
          %1315 = vrot.lane.b32.xlu0 %v1210, 48
          %v1316 = vpop.permute.xlu0 %1315
          %1317 = vrot.lane.b32.xlu0 %v1211, 48
          %v1318 = vpop.permute.xlu0 %1317
          %1319 = vrot.lane.b32.xlu0 %v1212, 48
          %v1320 = vpop.permute.xlu0 %1319
          %1327 = vrot.lane.b32.xlu0 %v1213, 64
          %v1328 = vpop.permute.xlu0 %1327
          %1329 = vrot.lane.b32.xlu0 %v1214, 64
          %v1330 = vpop.permute.xlu0 %1329
          %1331 = vrot.lane.b32.xlu0 %v1215, 64
          %v1332 = vpop.permute.xlu0 %1331
          %1339 = vrot.lane.b32.xlu0 %v1219, 80
          %v1340 = vpop.permute.xlu0 %1339
          %1341 = vrot.lane.b32.xlu0 %v1220, 80
          %v1342 = vpop.permute.xlu0 %1341
          %1343 = vrot.lane.b32.xlu0 %v1221, 80
          %v1344 = vpop.permute.xlu0 %1343
          %1351 = vrot.lane.b32.xlu0 %v1222, 96
          %v1352 = vpop.permute.xlu0 %1351
          %1353 = vrot.lane.b32.xlu0 %v1223, 96
          %v1354 = vpop.permute.xlu0 %1353
          %1355 = vrot.lane.b32.xlu0 %v1224, 96
          %v1356 = vpop.permute.xlu0 %1355
          %1363 = vrot.lane.b32.xlu0 %v1225, 112
          %v1364 = vpop.permute.xlu0 %1363
          %1365 = vrot.lane.b32.xlu0 %v1226, 112
          %v1366 = vpop.permute.xlu0 %1365
          %1367 = vrot.lane.b32.xlu0 %v1227, 112
          %v1368 = vpop.permute.xlu0 %1367
          %1375 = vrot.lane.b32.xlu0 %v1231, 16
          %v1376 = vpop.permute.xlu0 %1375
          %1377 = vrot.lane.b32.xlu0 %v1232, 16
          %v1378 = vpop.permute.xlu0 %1377
          %1379 = vrot.lane.b32.xlu0 %v1233, 16
          %v1380 = vpop.permute.xlu0 %1379
          %1387 = vrot.lane.b32.xlu0 %v1237, 32
          %v1388 = vpop.permute.xlu0 %1387
          %1389 = vrot.lane.b32.xlu0 %v1238, 32
          %v1390 = vpop.permute.xlu0 %1389
          %1391 = vrot.lane.b32.xlu0 %v1239, 32
          %v1392 = vpop.permute.xlu0 %1391
          %1399 = vrot.lane.b32.xlu0 %v1240, 48
          %v1400 = vpop.permute.xlu0 %1399
          %1401 = vrot.lane.b32.xlu0 %v1241, 48
          %v1402 = vpop.permute.xlu0 %1401
          %1403 = vrot.lane.b32.xlu0 %v1242, 48
          %v1404 = vpop.permute.xlu0 %1403
          %1411 = vrot.lane.b32.xlu0 %v1243, 64
          %v1412 = vpop.permute.xlu0 %1411
          %1413 = vrot.lane.b32.xlu0 %v1244, 64
          %v1414 = vpop.permute.xlu0 %1413
          %1415 = vrot.lane.b32.xlu0 %v1245, 64
          %v1416 = vpop.permute.xlu0 %1415
          %1423 = vrot.lane.b32.xlu0 %v1246, 80
          %v1424 = vpop.permute.xlu0 %1423
          %1425 = vrot.lane.b32.xlu0 %v1247, 80
          %v1426 = vpop.permute.xlu0 %1425
          %1427 = vrot.lane.b32.xlu0 %v1248, 80
          %v1428 = vpop.permute.xlu0 %1427
          %1435 = vrot.lane.b32.xlu0 %v1249, 96
          %v1436 = vpop.permute.xlu0 %1435
          %1437 = vrot.lane.b32.xlu0 %v1250, 96
          %v1438 = vpop.permute.xlu0 %1437
          %1439 = vrot.lane.b32.xlu0 %v1251, 96
          %v1440 = vpop.permute.xlu0 %1439
          %1447 = vrot.lane.b32.xlu0 %v1255, 112
          %v1448 = vpop.permute.xlu0 %1447
          %1449 = vrot.lane.b32.xlu0 %v1256, 112
          %v1450 = vpop.permute.xlu0 %1449
          %1451 = vrot.lane.b32.xlu0 %v1257, 112
          %v1452 = vpop.permute.xlu0 %1451
          %vm1456 = vcmask 130048
          %v1457 = vsel %vm1456, %v1201, %v1292
          %v1458 = vsel %vm1456, %v1202, %v1294
          %v1459 = vsel %vm1456, %v1203, %v1296
          %vm1460 = vcmask 261120
          %v1461 = vsel %vm1460, %v1457, %v1304
          %v1462 = vsel %vm1460, %v1458, %v1306
          %v1463 = vsel %vm1460, %v1459, %v1308
          %vm1464 = vcmask 392192
          %v1465 = vsel %vm1464, %v1461, %v1316
          %v1466 = vsel %vm1464, %v1462, %v1318
          %v1467 = vsel %vm1464, %v1463, %v1320
          %vm1468 = vcmask 523264
          %v1469 = vsel %vm1468, %v1465, %v1328
          %v1470 = vsel %vm1468, %v1466, %v1330
          %v1471 = vsel %vm1468, %v1467, %v1332
          %vm1472 = vcmask 654336
          %v1473 = vsel %vm1472, %v1469, %v1340
          %v1474 = vsel %vm1472, %v1470, %v1342
          %v1475 = vsel %vm1472, %v1471, %v1344
          %vm1476 = vcmask 785408
          %v1477 = vsel %vm1476, %v1473, %v1352
          %v1478 = vsel %vm1476, %v1474, %v1354
          %v1479 = vsel %vm1476, %v1475, %v1356
          %vm1480 = vcmask 916480
          %v1481 = vsel %vm1480, %v1477, %v1364
          %v1482 = vsel %vm1480, %v1478, %v1366
          %v1483 = vsel %vm1480, %v1479, %v1368
          %v1484 = vsel %vm1456, %v1228, %v1376
          %v1485 = vsel %vm1456, %v1229, %v1378
          %v1486 = vsel %vm1456, %v1230, %v1380
          %v1487 = vsel %vm1460, %v1484, %v1388
          %v1488 = vsel %vm1460, %v1485, %v1390
          %v1489 = vsel %vm1460, %v1486, %v1392
          %v1490 = vsel %vm1464, %v1487, %v1400
          %v1491 = vsel %vm1464, %v1488, %v1402
          %v1492 = vsel %vm1464, %v1489, %v1404
          %v1493 = vsel %vm1468, %v1490, %v1412
          %v1494 = vsel %vm1468, %v1491, %v1414
          %v1495 = vsel %vm1468, %v1492, %v1416
          %v1496 = vsel %vm1472, %v1493, %v1424
          %v1497 = vsel %vm1472, %v1494, %v1426
          %v1498 = vsel %vm1472, %v1495, %v1428
          %v1499 = vsel %vm1476, %v1496, %v1436
          %v1500 = vsel %vm1476, %v1497, %v1438
          %v1501 = vsel %vm1476, %v1498, %v1440
          %v1502 = vsel %vm1480, %v1499, %v1448
          %v1503 = vsel %vm1480, %v1500, %v1450
          %v1504 = vsel %vm1480, %v1501, %v1452
          %1508 = vrot.lane.b32.xlu0 %v1261, 16
          %v1509 = vpop.permute.xlu0 %1508
          %1510 = vrot.lane.b32.xlu0 %v1262, 16
          %v1511 = vpop.permute.xlu0 %1510
          %1512 = vrot.lane.b32.xlu0 %v1263, 16
          %v1513 = vpop.permute.xlu0 %1512
          %1520 = vrot.lane.b32.xlu0 %v1264, 32
          %v1521 = vpop.permute.xlu0 %1520
          %1522 = vrot.lane.b32.xlu0 %v1265, 32
          %v1523 = vpop.permute.xlu0 %1522
          %1524 = vrot.lane.b32.xlu0 %v1266, 32
          %v1525 = vpop.permute.xlu0 %1524
          %1532 = vrot.lane.b32.xlu0 %v1267, 48
          %v1533 = vpop.permute.xlu0 %1532
          %1534 = vrot.lane.b32.xlu0 %v1268, 48
          %v1535 = vpop.permute.xlu0 %1534
          %1536 = vrot.lane.b32.xlu0 %v1269, 48
          %v1537 = vpop.permute.xlu0 %1536
          %1544 = vrot.lane.b32.xlu0 %v1273, 64
          %v1545 = vpop.permute.xlu0 %1544
          %1546 = vrot.lane.b32.xlu0 %v1274, 64
          %v1547 = vpop.permute.xlu0 %1546
          %1548 = vrot.lane.b32.xlu0 %v1275, 64
          %v1549 = vpop.permute.xlu0 %1548
          %1556 = vrot.lane.b32.xlu0 %v1276, 80
          %v1557 = vpop.permute.xlu0 %1556
          %1558 = vrot.lane.b32.xlu0 %v1277, 80
          %v1559 = vpop.permute.xlu0 %1558
          %1560 = vrot.lane.b32.xlu0 %v1278, 80
          %v1561 = vpop.permute.xlu0 %1560
          %1568 = vrot.lane.b32.xlu0 %v1279, 96
          %v1569 = vpop.permute.xlu0 %1568
          %1570 = vrot.lane.b32.xlu0 %v1280, 96
          %v1571 = vpop.permute.xlu0 %1570
          %1572 = vrot.lane.b32.xlu0 %v1281, 96
          %v1573 = vpop.permute.xlu0 %1572
          %1580 = vrot.lane.b32.xlu0 %v1282, 112
          %v1581 = vpop.permute.xlu0 %1580
          %1582 = vrot.lane.b32.xlu0 %v1283, 112
          %v1583 = vpop.permute.xlu0 %1582
          %1584 = vrot.lane.b32.xlu0 %v1284, 112
          %v1585 = vpop.permute.xlu0 %1584
          %v1589 = vsel %vm1456, %v1258, %v1509
          %v1590 = vsel %vm1456, %v1259, %v1511
          %v1591 = vsel %vm1456, %v1260, %v1513
          %v1592 = vsel %vm1460, %v1589, %v1521
          %v1593 = vsel %vm1460, %v1590, %v1523
          %v1594 = vsel %vm1460, %v1591, %v1525
          %v1595 = vsel %vm1464, %v1592, %v1533
          %v1596 = vsel %vm1464, %v1593, %v1535
          %v1597 = vsel %vm1464, %v1594, %v1537
          %v1598 = vsel %vm1468, %v1595, %v1545
          %v1599 = vsel %vm1468, %v1596, %v1547
          %v1600 = vsel %vm1468, %v1597, %v1549
          %v1601 = vsel %vm1472, %v1598, %v1557
          %v1602 = vsel %vm1472, %v1599, %v1559
          %v1603 = vsel %vm1472, %v1600, %v1561
          %v1604 = vsel %vm1476, %v1601, %v1569
          %v1605 = vsel %vm1476, %v1602, %v1571
          %v1606 = vsel %vm1476, %v1603, %v1573
          %v1607 = vsel %vm1480, %v1604, %v1581
          %v1608 = vsel %vm1480, %v1605, %v1583
          %v1609 = vsel %vm1480, %v1606, %v1585
          %v1610 = vpack.c.bf16 %v1482, %v1481
          %v1611 = vpack.c.bf16 %v1503, %v1502
          %v1612 = vpack.c.bf16 %v1608, %v1607
          %v1613 = vpack.c.bf16 %v1286, %v1285
          %v1614 = vpack.c.bf16 %v1483, %v1483
          %v1615 = vpack.c.bf16 %v1504, %v1504
          %v1616 = vpack.c.bf16 %v1609, %v1609
          %v1617 = vpack.c.bf16 %v1287, %v1287
          %v1619 = vperm.slane %v1192, 0
          %v1671 = vunpack.c.l.b16 %v1142
          %v1672 = vunpack.c.l.b16 %v1143
          %v1673 = vunpack.c.l.b16 %v1144
          %v1674 = vunpack.c.l.b16 %v1145
          %v1675 = vunpack.c.l.b16 %v1146
          %v1676 = vunpack.c.l.b16 %v1147
          %v1677 = vunpack.c.l.b16 %v1148
          %v1678 = vunpack.c.l.b16 %v1149
          %v1679 = vunpack.c.l.b16 %v1150
          %v1680 = vunpack.c.l.b16 %v1151
          %v1681 = vunpack.c.l.b16 %v1152
          %v1682 = vunpack.c.l.b16 %v1153
          %v1683 = vunpack.c.l.b16 %v1154
          %v1684 = vunpack.c.l.b16 %v1155
          %v1685 = vunpack.c.l.b16 %v1156
          %v1686 = vunpack.c.l.b16 %v1157
          %v1687 = vunpack.c.l.b16 %v1158
          %v1688 = vunpack.c.l.b16 %v1159
          %v1689 = vunpack.c.l.b16 %v1160
          %v1690 = vunpack.c.l.b16 %v1161
          %v1691 = vunpack.c.l.b16 %v1162
          %v1692 = vunpack.c.l.b16 %v1163
          %v1693 = vunpack.c.l.b16 %v1164
          %v1694 = vunpack.c.l.b16 %v1165
          %v1695 = vunpack.c.l.b16 %v1166
          %v1696 = vunpack.c.l.b16 %v1167
          %v1697 = vunpack.c.l.b16 %v1168
          %v1698 = vunpack.c.l.b16 %v1169
          %v1699 = vunpack.c.l.b16 %v1170
          %v1700 = vunpack.c.l.b16 %v1171
          %v1701 = vunpack.c.l.b16 %v1172
          %v1702 = vunpack.c.l.b16 %v1173
          %v1703 = vunpack.c.l.b16 %v1174
          %v1704 = vunpack.c.l.b16 %v1175
          %v1705 = vunpack.c.l.b16 %v1176
          %v1706 = vunpack.c.l.b16 %v1177
          %v1707 = vunpack.c.l.b16 %v1178
          %v1708 = vunpack.c.l.b16 %v1179
          %v1709 = vunpack.c.l.b16 %v1180
          %v1710 = vunpack.c.l.b16 %v1181
          %v1711 = vunpack.c.l.b16 %v1182
          %v1712 = vunpack.c.l.b16 %v1183
          %v1713 = vunpack.c.l.b16 %v1184
          %v1714 = vunpack.c.l.b16 %v1185
          %v1715 = vunpack.c.l.b16 %v1186
          %v1716 = vunpack.c.l.b16 %v1187
          %v1717 = vunpack.c.l.b16 %v1188
          %v1718 = vunpack.c.l.b16 %v1189
          %v1719 = vunpack.c.l.b16 %v1190
          %v1720 = vunpack.c.l.b16 %v1191
          %v1721 = vpack.c.b16 %v1672, %v1671
          %v1722 = vpack.c.b16 %v1674, %v1673
          %v1723 = vpack.c.b16 %v1676, %v1675
          %v1724 = vpack.c.b16 %v1678, %v1677
          %v1725 = vpack.c.b16 %v1680, %v1679
          %v1726 = vpack.c.b16 %v1682, %v1681
          %v1727 = vpack.c.b16 %v1684, %v1683
          %v1728 = vpack.c.b16 %v1686, %v1685
          %v1729 = vpack.c.b16 %v1688, %v1687
          %v1730 = vpack.c.b16 %v1690, %v1689
          %v1731 = vpack.c.b16 %v1692, %v1691
          %v1732 = vpack.c.b16 %v1694, %v1693
          %v1733 = vpack.c.b16 %v1696, %v1695
          %v1734 = vpack.c.b16 %v1698, %v1697
          %v1735 = vpack.c.b16 %v1700, %v1699
          %v1736 = vpack.c.b16 %v1702, %v1701
          %v1737 = vpack.c.b16 %v1704, %v1703
          %v1738 = vpack.c.b16 %v1706, %v1705
          %v1739 = vpack.c.b16 %v1708, %v1707
          %v1740 = vpack.c.b16 %v1710, %v1709
          %v1741 = vpack.c.b16 %v1712, %v1711
          %v1742 = vpack.c.b16 %v1714, %v1713
          %v1743 = vpack.c.b16 %v1716, %v1715
          %v1744 = vpack.c.b16 %v1718, %v1717
          %v1745 = vpack.c.b16 %v1720, %v1719
          %v1772 = vsel %vm1456, %v1613, 0
          %v1775 = vsel %vm1456, %v1617, 0
          %1777 = vmatpush.bf16.msra.mxu0 %v1728
          %1778 = vmatpush.bf16.msra.mxu0 %v1727
          %1779 = vmatpush.bf16.msra.mxu0 %v1726
          %1780 = vmatpush.bf16.msra.mxu0 %v1725
          %1781 = vmatpush.bf16.msra.mxu0 %v1724
          %1782 = vmatpush.bf16.msra.mxu0 %v1723
          %1783 = vmatpush.bf16.msra.mxu0 %v1722
          %1784 = vmatpush.bf16.msra.mxu0 %v1721
          %1785 = vmatmul.bf16.gmra.mxu0 %v1610
          %v1786 = vpop.f32.mrf.mxu0
          %v1787 = vadd.f32 %v1619, %v1786
          %v1788 = vpop.f32.mrf.mxu0
          %v1789 = vadd.f32 %v1619, %v1788
          %1790 = vmatmul.bf16.gmra.mxu0 %v1614
          %v1791 = vpop.f32.mrf.mxu0
          %v1792 = vadd.f32 %v1619, %v1791
          %v1793 = vpop.f32.mrf.mxu0
          %1794 = vdwg.mxu0
          %1795 = vmatpush.bf16.msra.mxu0 %v1736
          %1796 = vmatpush.bf16.msra.mxu0 %v1735
          %1797 = vmatpush.bf16.msra.mxu0 %v1734
          %1798 = vmatpush.bf16.msra.mxu0 %v1733
          %1799 = vmatpush.bf16.msra.mxu0 %v1732
          %1800 = vmatpush.bf16.msra.mxu0 %v1731
          %1801 = vmatpush.bf16.msra.mxu0 %v1730
          %1802 = vmatpush.bf16.msra.mxu0 %v1729
          %1803 = vmatmul.bf16.gmra.mxu0 %v1611
          %v1804 = vpop.f32.mrf.mxu0
          %v1805 = vadd.f32 %v1787, %v1804
          %v1806 = vpop.f32.mrf.mxu0
          %v1807 = vadd.f32 %v1789, %v1806
          %1808 = vmatmul.bf16.gmra.mxu0 %v1615
          %v1809 = vpop.f32.mrf.mxu0
          %v1810 = vadd.f32 %v1792, %v1809
          %v1811 = vpop.f32.mrf.mxu0
          %1812 = vdwg.mxu0
          %1813 = vmatpush.bf16.msra.mxu0 %v1744
          %1814 = vmatpush.bf16.msra.mxu0 %v1743
          %1815 = vmatpush.bf16.msra.mxu0 %v1742
          %1816 = vmatpush.bf16.msra.mxu0 %v1741
          %1817 = vmatpush.bf16.msra.mxu0 %v1740
          %1818 = vmatpush.bf16.msra.mxu0 %v1739
          %1819 = vmatpush.bf16.msra.mxu0 %v1738
          %1820 = vmatpush.bf16.msra.mxu0 %v1737
          %1821 = vmatmul.bf16.gmra.mxu0 %v1612
          %v1822 = vpop.f32.mrf.mxu0
          %v1823 = vadd.f32 %v1805, %v1822
          %v1824 = vpop.f32.mrf.mxu0
          %v1825 = vadd.f32 %v1807, %v1824
          %1826 = vmatmul.bf16.gmra.mxu0 %v1616
          %v1827 = vpop.f32.mrf.mxu0
          %v1828 = vadd.f32 %v1810, %v1827
          %v1829 = vpop.f32.mrf.mxu0
          %1830 = vdwg.mxu0
          %1831 = vmatpush.bf16.msra.mxu0 0
          %1832 = vmatpush.bf16.msra.mxu0 0
          %1833 = vmatpush.bf16.msra.mxu0 0
          %1834 = vmatpush.bf16.msra.mxu0 0
          %1835 = vmatpush.bf16.msra.mxu0 0
          %1836 = vmatpush.bf16.msra.mxu0 0
          %1837 = vmatpush.bf16.msra.mxu0 0
          %1838 = vmatpush.bf16.msra.mxu0 %v1745
          %1839 = vmatmul.bf16.gmra.mxu0 %v1772
          %v1840 = vpop.f32.mrf.mxu0
          %v1841 = vadd.f32 %v1823, %v1840
          %v1842 = vpop.f32.mrf.mxu0
          %v1843 = vadd.f32 %v1825, %v1842
          %1844 = vmatmul.bf16.gmra.mxu0 %v1775
          %v1845 = vpop.f32.mrf.mxu0
          %v1846 = vadd.f32 %v1828, %v1845
          %v1847 = vpop.f32.mrf.mxu0
          %1848 = vdwg.mxu0
          %v1849 = vmax.f32 %v1841, 0.0
          %v1850 = vmax.f32 %v1843, 0.0
          %v1851 = vmax.f32 %v1846, 0.0
          %s1852 = scalar_lea.vmem [#allocation4], %s1199
          %1853 = vst.msk [vmem:[%s1852] sm:$0xff] %vm1460, %v1849
          %1854 = vst.msk [vmem:[%s1852 + $0x8] sm:$0xff] %vm1460, %v1850
          %vm1855 = vcmask 257024
          %1856 = vst.msk [vmem:[%s1852 + $0x10] sm:$0xf] %vm1855, %v1851
        $region76: #{mycnn_forward.1} parent=63 // loop_footer
          %s1198 = sadd.s32 1, %s1194
        $region77: #{mycnn_forward.1} parent=63 // loop_footer_branch
          %1193 = sbr.rel target = $region73
        $region78: #{mycnn_forward.1} parent=63 // loop_exit
          _
        %v1857 = vld [vmem:[#allocation4] ss:$2 sm:$0xff]
        %s1858 = scalar_lea.vmem [#allocation4], 16
        %v1859 = vld [vmem:[%s1858] ss:$2 sm:$0x3]
        %s1860 = scalar_lea.vmem [#allocation4], 24
        %v1861 = vld [vmem:[%s1860] ss:$2 sm:$0xff]
        %s1862 = scalar_lea.vmem [#allocation4], 40
        %v1863 = vld [vmem:[%s1862] ss:$2 sm:$0x3]
        %s1864 = scalar_lea.vmem [#allocation4], 48
        %v1865 = vld [vmem:[%s1864] ss:$2 sm:$0xff]
        %s1866 = scalar_lea.vmem [#allocation4], 64
        %v1867 = vld [vmem:[%s1866] ss:$2 sm:$0x3]
        %s1868 = scalar_lea.vmem [#allocation4], 72
        %v1869 = vld [vmem:[%s1868] ss:$2 sm:$0xff]
        %s1870 = scalar_lea.vmem [#allocation4], 88
        %v1871 = vld [vmem:[%s1870] ss:$2 sm:$0x3]
        %s1872 = scalar_lea.vmem [#allocation4], 96
        %v1873 = vld [vmem:[%s1872] ss:$2 sm:$0xff]
        %s1874 = scalar_lea.vmem [#allocation4], 112
        %v1875 = vld [vmem:[%s1874] ss:$2 sm:$0x3]
        %s1876 = scalar_lea.vmem [#allocation4], 120
        %v1877 = vld [vmem:[%s1876] ss:$2 sm:$0xff]
        %s1878 = scalar_lea.vmem [#allocation4], 136
        %v1879 = vld [vmem:[%s1878] ss:$2 sm:$0x3]
        %s1880 = scalar_lea.vmem [#allocation4], 144
        %v1881 = vld [vmem:[%s1880] ss:$2 sm:$0xff]
        %s1882 = scalar_lea.vmem [#allocation4], 160
        %v1883 = vld [vmem:[%s1882] ss:$2 sm:$0x3]
        %s1884 = scalar_lea.vmem [#allocation4], 168
        %v1885 = vld [vmem:[%s1884] ss:$2 sm:$0xff]
        %s1886 = scalar_lea.vmem [#allocation4], 184
        %v1887 = vld [vmem:[%s1886] ss:$2 sm:$0x3]
        %s1888 = scalar_lea.vmem [#allocation4], 192
        %v1889 = vld [vmem:[%s1888] ss:$2 sm:$0xff]
        %s1890 = scalar_lea.vmem [#allocation4], 208
        %v1891 = vld [vmem:[%s1890] ss:$2 sm:$0x3]
        %s1892 = scalar_lea.vmem [#allocation4], 216
        %v1893 = vld [vmem:[%s1892] ss:$2 sm:$0xff]
        %s1894 = scalar_lea.vmem [#allocation4], 232
        %v1895 = vld [vmem:[%s1894] ss:$2 sm:$0x3]
        %s1896 = scalar_lea.vmem [#allocation4], 240
        %v1897 = vld [vmem:[%s1896] ss:$2 sm:$0xff]
        %s1898 = scalar_lea.vmem [#allocation4], 256
        %v1899 = vld [vmem:[%s1898] ss:$2 sm:$0x3]
        %s1900 = scalar_lea.vmem [#allocation4], 264
        %v1901 = vld [vmem:[%s1900] ss:$2 sm:$0xff]
        %s1902 = scalar_lea.vmem [#allocation4], 280
        %v1903 = vld [vmem:[%s1902] ss:$2 sm:$0x3]
        %s1904 = scalar_lea.vmem [#allocation4], 288
        %v1905 = vld [vmem:[%s1904] ss:$2 sm:$0xff]
        %s1906 = scalar_lea.vmem [#allocation4], 304
        %v1907 = vld [vmem:[%s1906] ss:$2 sm:$0x3]
        %s1908 = scalar_lea.vmem [#allocation4], 312
        %v1909 = vld [vmem:[%s1908] ss:$2 sm:$0xff]
        %s1910 = scalar_lea.vmem [#allocation4], 328
        %v1911 = vld [vmem:[%s1910] ss:$2 sm:$0x3]
        %s1912 = scalar_lea.vmem [#allocation4], 336
        %v1913 = vld [vmem:[%s1912] ss:$2 sm:$0xff]
        %s1914 = scalar_lea.vmem [#allocation4], 352
        %v1915 = vld [vmem:[%s1914] ss:$2 sm:$0x3]
        %s1916 = scalar_lea.vmem [#allocation4], 360
        %v1917 = vld [vmem:[%s1916] ss:$2 sm:$0xff]
        %s1918 = scalar_lea.vmem [#allocation4], 376
        %v1919 = vld [vmem:[%s1918] ss:$2 sm:$0x3]
        %s1920 = scalar_lea.vmem [#allocation4], 384
        %v1921 = vld [vmem:[%s1920] ss:$2 sm:$0xff]
        %s1922 = scalar_lea.vmem [#allocation4], 400
        %v1923 = vld [vmem:[%s1922] ss:$2 sm:$0x3]
        %s1924 = scalar_lea.vmem [#allocation4], 408
        %v1925 = vld [vmem:[%s1924] ss:$2 sm:$0xff]
        %s1926 = scalar_lea.vmem [#allocation4], 424
        %v1927 = vld [vmem:[%s1926] ss:$2 sm:$0x3]
        %s1928 = scalar_lea.vmem [#allocation4], 432
        %v1929 = vld [vmem:[%s1928] ss:$2 sm:$0xff]
        %s1930 = scalar_lea.vmem [#allocation4], 448
        %v1931 = vld [vmem:[%s1930] ss:$2 sm:$0x3]
        %s1932 = scalar_lea.vmem [#allocation4], 456
        %v1933 = vld [vmem:[%s1932] ss:$2 sm:$0xff]
        %s1934 = scalar_lea.vmem [#allocation4], 472
        %v1935 = vld [vmem:[%s1934] ss:$2 sm:$0x3]
        %s1936 = scalar_lea.vmem [#allocation4], 1
        %v1937 = vld [vmem:[%s1936] ss:$2 sm:$0xff]
        %s1938 = scalar_lea.vmem [#allocation4], 17
        %v1939 = vld [vmem:[%s1938] ss:$2 sm:$0x3]
        %s1940 = scalar_lea.vmem [#allocation4], 25
        %v1941 = vld [vmem:[%s1940] ss:$2 sm:$0xff]
        %s1942 = scalar_lea.vmem [#allocation4], 41
        %v1943 = vld [vmem:[%s1942] ss:$2 sm:$0x3]
        %s1944 = scalar_lea.vmem [#allocation4], 49
        %v1945 = vld [vmem:[%s1944] ss:$2 sm:$0xff]
        %s1946 = scalar_lea.vmem [#allocation4], 65
        %v1947 = vld [vmem:[%s1946] ss:$2 sm:$0x3]
        %s1948 = scalar_lea.vmem [#allocation4], 73
        %v1949 = vld [vmem:[%s1948] ss:$2 sm:$0xff]
        %s1950 = scalar_lea.vmem [#allocation4], 89
        %v1951 = vld [vmem:[%s1950] ss:$2 sm:$0x3]
        %s1952 = scalar_lea.vmem [#allocation4], 97
        %v1953 = vld [vmem:[%s1952] ss:$2 sm:$0xff]
        %s1954 = scalar_lea.vmem [#allocation4], 113
        %v1955 = vld [vmem:[%s1954] ss:$2 sm:$0x3]
        %s1956 = scalar_lea.vmem [#allocation4], 121
        %v1957 = vld [vmem:[%s1956] ss:$2 sm:$0xff]
        %s1958 = scalar_lea.vmem [#allocation4], 137
        %v1959 = vld [vmem:[%s1958] ss:$2 sm:$0x3]
        %s1960 = scalar_lea.vmem [#allocation4], 145
        %v1961 = vld [vmem:[%s1960] ss:$2 sm:$0xff]
        %s1962 = scalar_lea.vmem [#allocation4], 161
        %v1963 = vld [vmem:[%s1962] ss:$2 sm:$0x3]
        %s1964 = scalar_lea.vmem [#allocation4], 169
        %v1965 = vld [vmem:[%s1964] ss:$2 sm:$0xff]
        %s1966 = scalar_lea.vmem [#allocation4], 185
        %v1967 = vld [vmem:[%s1966] ss:$2 sm:$0x3]
        %s1968 = scalar_lea.vmem [#allocation4], 193
        %v1969 = vld [vmem:[%s1968] ss:$2 sm:$0xff]
        %s1970 = scalar_lea.vmem [#allocation4], 209
        %v1971 = vld [vmem:[%s1970] ss:$2 sm:$0x3]
        %s1972 = scalar_lea.vmem [#allocation4], 217
        %v1973 = vld [vmem:[%s1972] ss:$2 sm:$0xff]
        %s1974 = scalar_lea.vmem [#allocation4], 233
        %v1975 = vld [vmem:[%s1974] ss:$2 sm:$0x3]
        %s1976 = scalar_lea.vmem [#allocation4], 241
        %v1977 = vld [vmem:[%s1976] ss:$2 sm:$0xff]
        %s1978 = scalar_lea.vmem [#allocation4], 257
        %v1979 = vld [vmem:[%s1978] ss:$2 sm:$0x3]
        %s1980 = scalar_lea.vmem [#allocation4], 265
        %v1981 = vld [vmem:[%s1980] ss:$2 sm:$0xff]
        %s1982 = scalar_lea.vmem [#allocation4], 281
        %v1983 = vld [vmem:[%s1982] ss:$2 sm:$0x3]
        %s1984 = scalar_lea.vmem [#allocation4], 289
        %v1985 = vld [vmem:[%s1984] ss:$2 sm:$0xff]
        %s1986 = scalar_lea.vmem [#allocation4], 305
        %v1987 = vld [vmem:[%s1986] ss:$2 sm:$0x3]
        %s1988 = scalar_lea.vmem [#allocation4], 313
        %v1989 = vld [vmem:[%s1988] ss:$2 sm:$0xff]
        %s1990 = scalar_lea.vmem [#allocation4], 329
        %v1991 = vld [vmem:[%s1990] ss:$2 sm:$0x3]
        %s1992 = scalar_lea.vmem [#allocation4], 337
        %v1993 = vld [vmem:[%s1992] ss:$2 sm:$0xff]
        %s1994 = scalar_lea.vmem [#allocation4], 353
        %v1995 = vld [vmem:[%s1994] ss:$2 sm:$0x3]
        %s1996 = scalar_lea.vmem [#allocation4], 361
        %v1997 = vld [vmem:[%s1996] ss:$2 sm:$0xff]
        %s1998 = scalar_lea.vmem [#allocation4], 377
        %v1999 = vld [vmem:[%s1998] ss:$2 sm:$0x3]
        %s2000 = scalar_lea.vmem [#allocation4], 385
        %v2001 = vld [vmem:[%s2000] ss:$2 sm:$0xff]
        %s2002 = scalar_lea.vmem [#allocation4], 401
        %v2003 = vld [vmem:[%s2002] ss:$2 sm:$0x3]
        %s2004 = scalar_lea.vmem [#allocation4], 409
        %v2005 = vld [vmem:[%s2004] ss:$2 sm:$0xff]
        %s2006 = scalar_lea.vmem [#allocation4], 425
        %v2007 = vld [vmem:[%s2006] ss:$2 sm:$0x3]
        %s2008 = scalar_lea.vmem [#allocation4], 433
        %v2009 = vld [vmem:[%s2008] ss:$2 sm:$0xff]
        %s2010 = scalar_lea.vmem [#allocation4], 449
        %v2011 = vld [vmem:[%s2010] ss:$2 sm:$0x3]
        %s2012 = scalar_lea.vmem [#allocation4], 457
        %v2013 = vld [vmem:[%s2012] ss:$2 sm:$0xff]
        %s2014 = scalar_lea.vmem [#allocation4], 473
        %v2015 = vld [vmem:[%s2014] ss:$2 sm:$0x3]
        %v2016 = vmax.f32 %v1857, %v1937
        %v2017 = vmax.f32 %v1859, %v1939
        %v2018 = vmax.f32 %v1861, %v1941
        %v2019 = vmax.f32 %v1863, %v1943
        %v2020 = vmax.f32 %v1865, %v1945
        %v2021 = vmax.f32 %v1867, %v1947
        %v2022 = vmax.f32 %v1869, %v1949
        %v2023 = vmax.f32 %v1871, %v1951
        %v2024 = vmax.f32 %v1873, %v1953
        %v2025 = vmax.f32 %v1875, %v1955
        %v2026 = vmax.f32 %v1877, %v1957
        %v2027 = vmax.f32 %v1879, %v1959
        %v2028 = vmax.f32 %v1881, %v1961
        %v2029 = vmax.f32 %v1883, %v1963
        %v2030 = vmax.f32 %v1885, %v1965
        %v2031 = vmax.f32 %v1887, %v1967
        %v2032 = vmax.f32 %v1889, %v1969
        %v2033 = vmax.f32 %v1891, %v1971
        %v2034 = vmax.f32 %v1893, %v1973
        %v2035 = vmax.f32 %v1895, %v1975
        %v2036 = vmax.f32 %v1897, %v1977
        %v2037 = vmax.f32 %v1899, %v1979
        %v2038 = vmax.f32 %v1901, %v1981
        %v2039 = vmax.f32 %v1903, %v1983
        %v2040 = vmax.f32 %v1905, %v1985
        %v2041 = vmax.f32 %v1907, %v1987
        %v2042 = vmax.f32 %v1909, %v1989
        %v2043 = vmax.f32 %v1911, %v1991
        %v2044 = vmax.f32 %v1913, %v1993
        %v2045 = vmax.f32 %v1915, %v1995
        %v2046 = vmax.f32 %v1917, %v1997
        %v2047 = vmax.f32 %v1919, %v1999
        %v2048 = vmax.f32 %v1921, %v2001
        %v2049 = vmax.f32 %v1923, %v2003
        %v2050 = vmax.f32 %v1925, %v2005
        %v2051 = vmax.f32 %v1927, %v2007
        %v2052 = vmax.f32 %v1929, %v2009
        %v2053 = vmax.f32 %v1931, %v2011
        %v2054 = vmax.f32 %v1933, %v2013
        %v2055 = vmax.f32 %v1935, %v2015
        %vm2056 = vcmask 261120
        %2057 = vst.msk [vmem:[#allocation5] sm:$0xff] %vm2056, %v2016
        %vm2058 = vcmask 254976
        %2059 = vst.msk [vmem:[#allocation5 + $0x8] sm:$0x3] %vm2058, %v2017
        %2060 = vst.msk [vmem:[#allocation5 + $0x10] sm:$0xff] %vm2056, %v2018
        %2061 = vst.msk [vmem:[#allocation5 + $0x18] sm:$0x3] %vm2058, %v2019
        %2062 = vst.msk [vmem:[#allocation5 + $0x20] sm:$0xff] %vm2056, %v2020
        %2063 = vst.msk [vmem:[#allocation5 + $0x28] sm:$0x3] %vm2058, %v2021
        %2064 = vst.msk [vmem:[#allocation5 + $0x30] sm:$0xff] %vm2056, %v2022
        %2065 = vst.msk [vmem:[#allocation5 + $0x38] sm:$0x3] %vm2058, %v2023
        %2066 = vst.msk [vmem:[#allocation5 + $0x40] sm:$0xff] %vm2056, %v2024
        %2067 = vst.msk [vmem:[#allocation5 + $0x48] sm:$0x3] %vm2058, %v2025
        %2068 = vst.msk [vmem:[#allocation5 + $0x50] sm:$0xff] %vm2056, %v2026
        %2069 = vst.msk [vmem:[#allocation5 + $0x58] sm:$0x3] %vm2058, %v2027
        %2070 = vst.msk [vmem:[#allocation5 + $0x60] sm:$0xff] %vm2056, %v2028
        %2071 = vst.msk [vmem:[#allocation5 + $0x68] sm:$0x3] %vm2058, %v2029
        %2072 = vst.msk [vmem:[#allocation5 + $0x70] sm:$0xff] %vm2056, %v2030
        %2073 = vst.msk [vmem:[#allocation5 + $0x78] sm:$0x3] %vm2058, %v2031
        %2074 = vst.msk [vmem:[#allocation5 + $0x80] sm:$0xff] %vm2056, %v2032
        %2075 = vst.msk [vmem:[#allocation5 + $0x88] sm:$0x3] %vm2058, %v2033
        %2076 = vst.msk [vmem:[#allocation5 + $0x90] sm:$0xff] %vm2056, %v2034
        %2077 = vst.msk [vmem:[#allocation5 + $0x98] sm:$0x3] %vm2058, %v2035
        %2078 = vst.msk [vmem:[#allocation5 + $0xa0] sm:$0xff] %vm2056, %v2036
        %2079 = vst.msk [vmem:[#allocation5 + $0xa8] sm:$0x3] %vm2058, %v2037
        %2080 = vst.msk [vmem:[#allocation5 + $0xb0] sm:$0xff] %vm2056, %v2038
        %2081 = vst.msk [vmem:[#allocation5 + $0xb8] sm:$0x3] %vm2058, %v2039
        %2082 = vst.msk [vmem:[#allocation5 + $0xc0] sm:$0xff] %vm2056, %v2040
        %2083 = vst.msk [vmem:[#allocation5 + $0xc8] sm:$0x3] %vm2058, %v2041
        %2084 = vst.msk [vmem:[#allocation5 + $0xd0] sm:$0xff] %vm2056, %v2042
        %2085 = vst.msk [vmem:[#allocation5 + $0xd8] sm:$0x3] %vm2058, %v2043
        %2086 = vst.msk [vmem:[#allocation5 + $0xe0] sm:$0xff] %vm2056, %v2044
        %2087 = vst.msk [vmem:[#allocation5 + $0xe8] sm:$0x3] %vm2058, %v2045
        %2088 = vst.msk [vmem:[#allocation5 + $0xf0] sm:$0xff] %vm2056, %v2046
        %2089 = vst.msk [vmem:[#allocation5 + $0xf8] sm:$0x3] %vm2058, %v2047
        %2090 = vst.msk [vmem:[#allocation5 + $0x100] sm:$0xff] %vm2056, %v2048
        %2091 = vst.msk [vmem:[#allocation5 + $0x108] sm:$0x3] %vm2058, %v2049
        %2092 = vst.msk [vmem:[#allocation5 + $0x110] sm:$0xff] %vm2056, %v2050
        %2093 = vst.msk [vmem:[#allocation5 + $0x118] sm:$0x3] %vm2058, %v2051
        %2094 = vst.msk [vmem:[#allocation5 + $0x120] sm:$0xff] %vm2056, %v2052
        %2095 = vst.msk [vmem:[#allocation5 + $0x128] sm:$0x3] %vm2058, %v2053
        %2096 = vst.msk [vmem:[#allocation5 + $0x130] sm:$0xff] %vm2056, %v2054
        %2097 = vst.msk [vmem:[#allocation5 + $0x138] sm:$0x3] %vm2058, %v2055
        %v2098 = vld [vmem:[#allocation5] sm:$0xff]
        %v2099 = vld [vmem:[#allocation5 + $0x8] sm:$0x3]
        %v2100 = vld [vmem:[#allocation5 + $0x20] sm:$0xff]
        %v2101 = vld [vmem:[#allocation5 + $0x28] sm:$0x3]
        %v2102 = vld [vmem:[#allocation5 + $0x40] sm:$0xff]
        %v2103 = vld [vmem:[#allocation5 + $0x48] sm:$0x3]
        %v2104 = vld [vmem:[#allocation5 + $0x60] sm:$0xff]
        %v2105 = vld [vmem:[#allocation5 + $0x68] sm:$0x3]
        %v2106 = vld [vmem:[#allocation5 + $0x80] sm:$0xff]
        %v2107 = vld [vmem:[#allocation5 + $0x88] sm:$0x3]
        %v2108 = vld [vmem:[#allocation5 + $0xa0] sm:$0xff]
        %v2109 = vld [vmem:[#allocation5 + $0xa8] sm:$0x3]
        %v2110 = vld [vmem:[#allocation5 + $0xc0] sm:$0xff]
        %v2111 = vld [vmem:[#allocation5 + $0xc8] sm:$0x3]
        %v2112 = vld [vmem:[#allocation5 + $0xe0] sm:$0xff]
        %v2113 = vld [vmem:[#allocation5 + $0xe8] sm:$0x3]
        %v2114 = vld [vmem:[#allocation5 + $0x100] sm:$0xff]
        %v2115 = vld [vmem:[#allocation5 + $0x108] sm:$0x3]
        %v2116 = vld [vmem:[#allocation5 + $0x120] sm:$0xff]
        %v2117 = vld [vmem:[#allocation5 + $0x128] sm:$0x3]
        %s2118 = scalar_lea.vmem [#allocation5], 16
        %v2119 = vld [vmem:[%s2118] sm:$0xff]
        %v2120 = vld [vmem:[%s2118 + $0x8] sm:$0x3]
        %v2121 = vld [vmem:[%s2118 + $0x20] sm:$0xff]
        %v2122 = vld [vmem:[%s2118 + $0x28] sm:$0x3]
        %v2123 = vld [vmem:[%s2118 + $0x40] sm:$0xff]
        %v2124 = vld [vmem:[%s2118 + $0x48] sm:$0x3]
        %v2125 = vld [vmem:[%s2118 + $0x60] sm:$0xff]
        %v2126 = vld [vmem:[%s2118 + $0x68] sm:$0x3]
        %v2127 = vld [vmem:[%s2118 + $0x80] sm:$0xff]
        %v2128 = vld [vmem:[%s2118 + $0x88] sm:$0x3]
        %v2129 = vld [vmem:[%s2118 + $0xa0] sm:$0xff]
        %v2130 = vld [vmem:[%s2118 + $0xa8] sm:$0x3]
        %v2131 = vld [vmem:[%s2118 + $0xc0] sm:$0xff]
        %v2132 = vld [vmem:[%s2118 + $0xc8] sm:$0x3]
        %v2133 = vld [vmem:[%s2118 + $0xe0] sm:$0xff]
        %v2134 = vld [vmem:[%s2118 + $0xe8] sm:$0x3]
        %v2135 = vld [vmem:[%s2118 + $0x100] sm:$0xff]
        %v2136 = vld [vmem:[%s2118 + $0x108] sm:$0x3]
        %v2137 = vld [vmem:[%s2118 + $0x120] sm:$0xff]
        %v2138 = vld [vmem:[%s2118 + $0x128] sm:$0x3]
        %v2139 = vmax.f32 %v2098, %v2119
        %v2140 = vmax.f32 %v2099, %v2120
        %v2141 = vmax.f32 %v2100, %v2121
        %v2142 = vmax.f32 %v2101, %v2122
        %v2143 = vmax.f32 %v2102, %v2123
        %v2144 = vmax.f32 %v2103, %v2124
        %v2145 = vmax.f32 %v2104, %v2125
        %v2146 = vmax.f32 %v2105, %v2126
        %v2147 = vmax.f32 %v2106, %v2127
        %v2148 = vmax.f32 %v2107, %v2128
        %v2149 = vmax.f32 %v2108, %v2129
        %v2150 = vmax.f32 %v2109, %v2130
        %v2151 = vmax.f32 %v2110, %v2131
        %v2152 = vmax.f32 %v2111, %v2132
        %v2153 = vmax.f32 %v2112, %v2133
        %v2154 = vmax.f32 %v2113, %v2134
        %v2155 = vmax.f32 %v2114, %v2135
        %v2156 = vmax.f32 %v2115, %v2136
        %v2157 = vmax.f32 %v2116, %v2137
        %v2158 = vmax.f32 %v2117, %v2138
        %2159 = vst.msk [vmem:[#allocation6] sm:$0xff] %vm2056, %v2139
        %2160 = vst.msk [vmem:[#allocation6 + $0x8] sm:$0x3] %vm2058, %v2140
        %2161 = vst.msk [vmem:[#allocation6 + $0x10] sm:$0xff] %vm2056, %v2141
        %2162 = vst.msk [vmem:[#allocation6 + $0x18] sm:$0x3] %vm2058, %v2142
        %2163 = vst.msk [vmem:[#allocation6 + $0x20] sm:$0xff] %vm2056, %v2143
        %2164 = vst.msk [vmem:[#allocation6 + $0x28] sm:$0x3] %vm2058, %v2144
        %2165 = vst.msk [vmem:[#allocation6 + $0x30] sm:$0xff] %vm2056, %v2145
        %2166 = vst.msk [vmem:[#allocation6 + $0x38] sm:$0x3] %vm2058, %v2146
        %2167 = vst.msk [vmem:[#allocation6 + $0x40] sm:$0xff] %vm2056, %v2147
        %2168 = vst.msk [vmem:[#allocation6 + $0x48] sm:$0x3] %vm2058, %v2148
        %2169 = vst.msk [vmem:[#allocation6 + $0x50] sm:$0xff] %vm2056, %v2149
        %2170 = vst.msk [vmem:[#allocation6 + $0x58] sm:$0x3] %vm2058, %v2150
        %2171 = vst.msk [vmem:[#allocation6 + $0x60] sm:$0xff] %vm2056, %v2151
        %2172 = vst.msk [vmem:[#allocation6 + $0x68] sm:$0x3] %vm2058, %v2152
        %2173 = vst.msk [vmem:[#allocation6 + $0x70] sm:$0xff] %vm2056, %v2153
        %2174 = vst.msk [vmem:[#allocation6 + $0x78] sm:$0x3] %vm2058, %v2154
        %2175 = vst.msk [vmem:[#allocation6 + $0x80] sm:$0xff] %vm2056, %v2155
        %2176 = vst.msk [vmem:[#allocation6 + $0x88] sm:$0x3] %vm2058, %v2156
        %2177 = vst.msk [vmem:[#allocation6 + $0x90] sm:$0xff] %vm2056, %v2157
        %2178 = vst.msk [vmem:[#allocation6 + $0x98] sm:$0x3] %vm2058, %v2158
        %v2179 = vld [vmem:[%s5] sm:$0xf]
        %v2180 = vld [vmem:[%s5 + $0x4] sm:$0xf]
        %v2181 = vld [vmem:[%s5 + $0x8] sm:$0xf]
        %v2182 = vld [vmem:[%s5 + $0xc] sm:$0xf]
        %v2183 = vld [vmem:[%s5 + $0x10] sm:$0xf]
        %v2184 = vld [vmem:[%s5 + $0x14] sm:$0xf]
        %v2185 = vld [vmem:[%s5 + $0x18] sm:$0xf]
        %v2186 = vld [vmem:[%s5 + $0x1c] sm:$0xf]
        %v2187 = vld [vmem:[%s5 + $0x20] sm:$0xf]
        %v2188 = vld [vmem:[%s5 + $0x24] sm:$0xf]
        %v2189 = vld [vmem:[%s5 + $0x28] sm:$0xf]
        %v2190 = vld [vmem:[%s5 + $0x2c] sm:$0xf]
        %v2191 = vld [vmem:[%s5 + $0x30] sm:$0xf]
        %v2192 = vld [vmem:[%s5 + $0x34] sm:$0xf]
        %v2193 = vld [vmem:[%s5 + $0x38] sm:$0xf]
        %v2194 = vld [vmem:[%s5 + $0x3c] sm:$0xf]
        %v2195 = vld [vmem:[%s5 + $0x40] sm:$0xf]
        %v2196 = vld [vmem:[%s5 + $0x44] sm:$0xf]
        %v2197 = vld [vmem:[%s5 + $0x48] sm:$0xf]
        %v2198 = vld [vmem:[%s5 + $0x4c] sm:$0xf]
        %v2199 = vld [vmem:[%s5 + $0x50] sm:$0xf]
        %v2200 = vld [vmem:[%s5 + $0x54] sm:$0xf]
        %v2201 = vld [vmem:[%s5 + $0x58] sm:$0xf]
        %v2202 = vld [vmem:[%s5 + $0x5c] sm:$0xf]
        %v2203 = vld [vmem:[%s5 + $0x60] sm:$0xf]
        %v2204 = vld [vmem:[%s5 + $0x64] sm:$0xf]
        %v2205 = vld [vmem:[%s5 + $0x68] sm:$0xf]
        %v2206 = vld [vmem:[%s5 + $0x6c] sm:$0xf]
        %v2207 = vld [vmem:[%s5 + $0x70] sm:$0xf]
        %v2208 = vld [vmem:[%s5 + $0x74] sm:$0xf]
        %v2209 = vld [vmem:[%s5 + $0x78] sm:$0xf]
        %v2210 = vld [vmem:[%s5 + $0x7c] sm:$0xf]
        %v2211 = vld [vmem:[%s5 + $0x80] sm:$0xf]
        %v2212 = vld [vmem:[%s5 + $0x84] sm:$0xf]
        %v2213 = vld [vmem:[%s5 + $0x88] sm:$0xf]
        %v2214 = vld [vmem:[%s5 + $0x8c] sm:$0xf]
        %v2215 = vld [vmem:[%s5 + $0x90] sm:$0xf]
        %v2216 = vld [vmem:[%s5 + $0x94] sm:$0xf]
        %v2217 = vld [vmem:[%s5 + $0x98] sm:$0xf]
        %v2218 = vld [vmem:[%s5 + $0x9c] sm:$0xf]
        %v2219 = vld [vmem:[%s5 + $0xa0] sm:$0xf]
        %v2220 = vld [vmem:[%s5 + $0xa4] sm:$0xf]
        %v2221 = vld [vmem:[%s5 + $0xa8] sm:$0xf]
        %v2222 = vld [vmem:[%s5 + $0xac] sm:$0xf]
        %v2223 = vld [vmem:[%s5 + $0xb0] sm:$0xf]
        %v2224 = vld [vmem:[%s5 + $0xb4] sm:$0xf]
        %v2225 = vld [vmem:[%s5 + $0xb8] sm:$0xf]
        %v2226 = vld [vmem:[%s5 + $0xbc] sm:$0xf]
        %v2227 = vld [vmem:[%s5 + $0xc0] sm:$0xf]
        %v2228 = vld [vmem:[%s5 + $0xc4] sm:$0xf]
        %v2229 = vld [vmem:[%s5 + $0xc8] sm:$0xf]
        %v2230 = vld [vmem:[%s5 + $0xcc] sm:$0xf]
        %v2231 = vld [vmem:[%s5 + $0xd0] sm:$0xf]
        %v2232 = vld [vmem:[%s5 + $0xd4] sm:$0xf]
        %v2233 = vld [vmem:[%s5 + $0xd8] sm:$0xf]
        %v2234 = vld [vmem:[%s5 + $0xdc] sm:$0xf]
        %v2235 = vld [vmem:[%s5 + $0xe0] sm:$0xf]
        %v2236 = vld [vmem:[%s5 + $0xe4] sm:$0xf]
        %v2237 = vld [vmem:[%s5 + $0xe8] sm:$0xf]
        %v2238 = vld [vmem:[%s5 + $0xec] sm:$0xf]
        %v2239 = vld [vmem:[%s5 + $0xf0] sm:$0xf]
        %v2240 = vld [vmem:[%s5 + $0xf4] sm:$0xf]
        %v2241 = vld [vmem:[%s5 + $0xf8] sm:$0xf]
        %v2242 = vld [vmem:[%s5 + $0xfc] sm:$0xf]
        %v2243 = vld [vmem:[%s5 + $0x100] sm:$0xf]
        %v2244 = vld [vmem:[%s5 + $0x104] sm:$0xf]
        %v2245 = vld [vmem:[%s5 + $0x108] sm:$0xf]
        %v2246 = vld [vmem:[%s5 + $0x10c] sm:$0xf]
        %v2247 = vld [vmem:[%s5 + $0x110] sm:$0xf]
        %v2248 = vld [vmem:[%s5 + $0x114] sm:$0xf]
        %v2249 = vld [vmem:[%s5 + $0x118] sm:$0xf]
        %v2250 = vld [vmem:[%s5 + $0x11c] sm:$0xf]
        %v2251 = vld [vmem:[%s5 + $0x120] sm:$0xf]
        %v2252 = vld [vmem:[%s5 + $0x124] sm:$0xf]
        %v2253 = vld [vmem:[%s5 + $0x128] sm:$0xf]
        %v2254 = vld [vmem:[%s5 + $0x12c] sm:$0xf]
        %v2255 = vld [vmem:[%s5 + $0x130] sm:$0xf]
        %v2256 = vld [vmem:[%s5 + $0x134] sm:$0xf]
        %v2257 = vld [vmem:[%s5 + $0x138] sm:$0xf]
        %v2258 = vld [vmem:[%s5 + $0x13c] sm:$0xf]
        %v2259 = vld [vmem:[%s5 + $0x140] sm:$0xf]
        %v2260 = vld [vmem:[%s5 + $0x144] sm:$0xf]
        %v2261 = vld [vmem:[%s5 + $0x148] sm:$0xf]
        %v2262 = vld [vmem:[%s5 + $0x14c] sm:$0xf]
        %v2263 = vld [vmem:[%s5 + $0x150] sm:$0xf]
        %v2264 = vld [vmem:[%s5 + $0x154] sm:$0xf]
        %v2265 = vld [vmem:[%s5 + $0x158] sm:$0xf]
        %v2266 = vld [vmem:[%s5 + $0x15c] sm:$0xf]
        %v2267 = vld [vmem:[%s5 + $0x160] sm:$0xf]
        %v2268 = vld [vmem:[%s5 + $0x164] sm:$0xf]
        %v2269 = vld [vmem:[%s5 + $0x168] sm:$0xf]
        %v2270 = vld [vmem:[%s5 + $0x16c] sm:$0xf]
        %v2271 = vld [vmem:[%s5 + $0x170] sm:$0xf]
        %v2272 = vld [vmem:[%s5 + $0x174] sm:$0xf]
        %v2273 = vld [vmem:[%s5 + $0x178] sm:$0xf]
        %v2274 = vld [vmem:[%s5 + $0x17c] sm:$0xf]
        %v2275 = vld [vmem:[%s5 + $0x180] sm:$0xf]
        %v2276 = vld [vmem:[%s5 + $0x184] sm:$0xf]
        %v2277 = vld [vmem:[%s5 + $0x188] sm:$0xf]
        %v2278 = vld [vmem:[%s5 + $0x18c] sm:$0xf]
        %v2279 = vld [vmem:[%s6] sm:$0x1]
        loop: start=0, step=1, limit=6
        $region79: #{mycnn_forward.1} parent=63 // loop_pre_header
          _
        $region80: #{mycnn_forward.1} parent=63 // loop_header
          %s2281 = sphi 0, %s2285
          %p2282 = scmp.ge.s32.totalorder %s2281, 6
        $region81: #{mycnn_forward.1} parent=63 // loop_header_branch
          %2284 = sbr.rel (%p2282) target = $region85
        $region82: #{mycnn_forward.1} parent=63 // loop_body
          %s2286 = smul.u32 %s2281, 16
          %s2287 = scalar_lea.vmem [#allocation6], %s2286
          %v2288 = vld [vmem:[%s2287] sm:$0x3f]
          %v2289 = vld [vmem:[%s2287 + $0x1] sm:$0x3f]
          %v2290 = vld [vmem:[%s2287 + $0x2] sm:$0x3f]
          %v2291 = vld [vmem:[%s2287 + $0x3] sm:$0x3f]
          %v2292 = vld [vmem:[%s2287 + $0x4] sm:$0x3f]
          %s2293 = sadd.s32 %s2281, 1
          %s2294 = smul.u32 %s2293, 16
          %s2295 = scalar_lea.vmem [#allocation6], %s2294
          %v2296 = vld [vmem:[%s2295] sm:$0x3f]
          %v2297 = vld [vmem:[%s2295 + $0x1] sm:$0x3f]
          %v2298 = vld [vmem:[%s2295 + $0x2] sm:$0x3f]
          %v2299 = vld [vmem:[%s2295 + $0x3] sm:$0x3f]
          %v2300 = vld [vmem:[%s2295 + $0x4] sm:$0x3f]
          %s2301 = sadd.s32 %s2281, 2
          %s2302 = smul.u32 %s2301, 16
          %s2303 = scalar_lea.vmem [#allocation6], %s2302
          %v2304 = vld [vmem:[%s2303] sm:$0x3f]
          %v2305 = vld [vmem:[%s2303 + $0x1] sm:$0x3f]
          %v2306 = vld [vmem:[%s2303 + $0x2] sm:$0x3f]
          %v2307 = vld [vmem:[%s2303 + $0x3] sm:$0x3f]
          %v2308 = vld [vmem:[%s2303 + $0x4] sm:$0x3f]
          %s2309 = sadd.s32 %s2281, 3
          %s2310 = smul.u32 %s2309, 16
          %s2311 = scalar_lea.vmem [#allocation6], %s2310
          %v2312 = vld [vmem:[%s2311] sm:$0x3f]
          %v2313 = vld [vmem:[%s2311 + $0x1] sm:$0x3f]
          %v2314 = vld [vmem:[%s2311 + $0x2] sm:$0x3f]
          %v2315 = vld [vmem:[%s2311 + $0x3] sm:$0x3f]
          %v2316 = vld [vmem:[%s2311 + $0x4] sm:$0x3f]
          %s2317 = sadd.s32 %s2281, 4
          %s2318 = smul.u32 %s2317, 16
          %s2319 = scalar_lea.vmem [#allocation6], %s2318
          %v2320 = vld [vmem:[%s2319] sm:$0x3f]
          %v2321 = vld [vmem:[%s2319 + $0x1] sm:$0x3f]
          %v2322 = vld [vmem:[%s2319 + $0x2] sm:$0x3f]
          %v2323 = vld [vmem:[%s2319 + $0x3] sm:$0x3f]
          %v2324 = vld [vmem:[%s2319 + $0x4] sm:$0x3f]
          %2326 = vrot.lane.b32.xlu0 %v2289, 32
          %v2327 = vpop.permute.xlu0 %2326
          %2330 = vrot.lane.b32.xlu0 %v2290, 64
          %v2331 = vpop.permute.xlu0 %2330
          %2334 = vrot.lane.b32.xlu0 %v2291, 96
          %v2335 = vpop.permute.xlu0 %2334
          %2338 = vrot.lane.b32.xlu0 %v2296, 32
          %v2339 = vpop.permute.xlu0 %2338
          %2342 = vrot.lane.b32.xlu0 %v2297, 64
          %v2343 = vpop.permute.xlu0 %2342
          %2346 = vrot.lane.b32.xlu0 %v2298, 96
          %v2347 = vpop.permute.xlu0 %2346
          %2350 = vrot.lane.b32.xlu0 %v2300, 32
          %v2351 = vpop.permute.xlu0 %2350
          %2354 = vrot.lane.b32.xlu0 %v2304, 64
          %v2355 = vpop.permute.xlu0 %2354
          %2358 = vrot.lane.b32.xlu0 %v2305, 96
          %v2359 = vpop.permute.xlu0 %2358
          %2362 = vrot.lane.b32.xlu0 %v2307, 32
          %v2363 = vpop.permute.xlu0 %2362
          %2366 = vrot.lane.b32.xlu0 %v2308, 64
          %v2367 = vpop.permute.xlu0 %2366
          %2370 = vrot.lane.b32.xlu0 %v2312, 96
          %v2371 = vpop.permute.xlu0 %2370
          %v2373 = vsel %vm2056, %v2288, %v2327
          %vm2374 = vcmask 523264
          %v2375 = vsel %vm2374, %v2373, %v2331
          %vm2376 = vcmask 785408
          %v2377 = vsel %vm2376, %v2375, %v2335
          %v2378 = vsel %vm2056, %v2292, %v2339
          %v2379 = vsel %vm2374, %v2378, %v2343
          %v2380 = vsel %vm2376, %v2379, %v2347
          %v2381 = vsel %vm2056, %v2299, %v2351
          %v2382 = vsel %vm2374, %v2381, %v2355
          %v2383 = vsel %vm2376, %v2382, %v2359
          %v2384 = vsel %vm2056, %v2306, %v2363
          %v2385 = vsel %vm2374, %v2384, %v2367
          %v2386 = vsel %vm2376, %v2385, %v2371
          %2388 = vrot.lane.b32.xlu0 %v2314, 32
          %v2389 = vpop.permute.xlu0 %2388
          %2392 = vrot.lane.b32.xlu0 %v2315, 64
          %v2393 = vpop.permute.xlu0 %2392
          %2396 = vrot.lane.b32.xlu0 %v2316, 96
          %v2397 = vpop.permute.xlu0 %2396
          %2400 = vrot.lane.b32.xlu0 %v2321, 32
          %v2401 = vpop.permute.xlu0 %2400
          %2404 = vrot.lane.b32.xlu0 %v2322, 64
          %v2405 = vpop.permute.xlu0 %2404
          %2408 = vrot.lane.b32.xlu0 %v2323, 96
          %v2409 = vpop.permute.xlu0 %2408
          %v2411 = vsel %vm2056, %v2313, %v2389
          %v2412 = vsel %vm2374, %v2411, %v2393
          %v2413 = vsel %vm2376, %v2412, %v2397
          %v2414 = vsel %vm2056, %v2320, %v2401
          %v2415 = vsel %vm2374, %v2414, %v2405
          %v2416 = vsel %vm2376, %v2415, %v2409
          %v2417 = vpack.c.bf16 %v2377, %v2377
          %v2418 = vpack.c.bf16 %v2380, %v2380
          %v2419 = vpack.c.bf16 %v2383, %v2383
          %v2420 = vpack.c.bf16 %v2386, %v2386
          %v2421 = vpack.c.bf16 %v2413, %v2413
          %v2422 = vpack.c.bf16 %v2416, %v2416
          %v2423 = vpack.c.bf16 %v2324, %v2324
          %v2425 = vperm.slane %v2279, 0
          %v2527 = vunpack.c.l.b16 %v2179
          %v2528 = vunpack.c.l.b16 %v2180
          %v2529 = vunpack.c.l.b16 %v2181
          %v2530 = vunpack.c.l.b16 %v2182
          %v2531 = vunpack.c.l.b16 %v2183
          %v2532 = vunpack.c.l.b16 %v2184
          %v2533 = vunpack.c.l.b16 %v2185
          %v2534 = vunpack.c.l.b16 %v2186
          %v2535 = vunpack.c.l.b16 %v2187
          %v2536 = vunpack.c.l.b16 %v2188
          %v2537 = vunpack.c.l.b16 %v2189
          %v2538 = vunpack.c.l.b16 %v2190
          %v2539 = vunpack.c.l.b16 %v2191
          %v2540 = vunpack.c.l.b16 %v2192
          %v2541 = vunpack.c.l.b16 %v2193
          %v2542 = vunpack.c.l.b16 %v2194
          %v2543 = vunpack.c.l.b16 %v2195
          %v2544 = vunpack.c.l.b16 %v2196
          %v2545 = vunpack.c.l.b16 %v2197
          %v2546 = vunpack.c.l.b16 %v2198
          %v2547 = vunpack.c.l.b16 %v2199
          %v2548 = vunpack.c.l.b16 %v2200
          %v2549 = vunpack.c.l.b16 %v2201
          %v2550 = vunpack.c.l.b16 %v2202
          %v2551 = vunpack.c.l.b16 %v2203
          %v2552 = vunpack.c.l.b16 %v2204
          %v2553 = vunpack.c.l.b16 %v2205
          %v2554 = vunpack.c.l.b16 %v2206
          %v2555 = vunpack.c.l.b16 %v2207
          %v2556 = vunpack.c.l.b16 %v2208
          %v2557 = vunpack.c.l.b16 %v2209
          %v2558 = vunpack.c.l.b16 %v2210
          %v2559 = vunpack.c.l.b16 %v2211
          %v2560 = vunpack.c.l.b16 %v2212
          %v2561 = vunpack.c.l.b16 %v2213
          %v2562 = vunpack.c.l.b16 %v2214
          %v2563 = vunpack.c.l.b16 %v2215
          %v2564 = vunpack.c.l.b16 %v2216
          %v2565 = vunpack.c.l.b16 %v2217
          %v2566 = vunpack.c.l.b16 %v2218
          %v2567 = vunpack.c.l.b16 %v2219
          %v2568 = vunpack.c.l.b16 %v2220
          %v2569 = vunpack.c.l.b16 %v2221
          %v2570 = vunpack.c.l.b16 %v2222
          %v2571 = vunpack.c.l.b16 %v2223
          %v2572 = vunpack.c.l.b16 %v2224
          %v2573 = vunpack.c.l.b16 %v2225
          %v2574 = vunpack.c.l.b16 %v2226
          %v2575 = vunpack.c.l.b16 %v2227
          %v2576 = vunpack.c.l.b16 %v2228
          %v2577 = vunpack.c.l.b16 %v2229
          %v2578 = vunpack.c.l.b16 %v2230
          %v2579 = vunpack.c.l.b16 %v2231
          %v2580 = vunpack.c.l.b16 %v2232
          %v2581 = vunpack.c.l.b16 %v2233
          %v2582 = vunpack.c.l.b16 %v2234
          %v2583 = vunpack.c.l.b16 %v2235
          %v2584 = vunpack.c.l.b16 %v2236
          %v2585 = vunpack.c.l.b16 %v2237
          %v2586 = vunpack.c.l.b16 %v2238
          %v2587 = vunpack.c.l.b16 %v2239
          %v2588 = vunpack.c.l.b16 %v2240
          %v2589 = vunpack.c.l.b16 %v2241
          %v2590 = vunpack.c.l.b16 %v2242
          %v2591 = vunpack.c.l.b16 %v2243
          %v2592 = vunpack.c.l.b16 %v2244
          %v2593 = vunpack.c.l.b16 %v2245
          %v2594 = vunpack.c.l.b16 %v2246
          %v2595 = vunpack.c.l.b16 %v2247
          %v2596 = vunpack.c.l.b16 %v2248
          %v2597 = vunpack.c.l.b16 %v2249
          %v2598 = vunpack.c.l.b16 %v2250
          %v2599 = vunpack.c.l.b16 %v2251
          %v2600 = vunpack.c.l.b16 %v2252
          %v2601 = vunpack.c.l.b16 %v2253
          %v2602 = vunpack.c.l.b16 %v2254
          %v2603 = vunpack.c.l.b16 %v2255
          %v2604 = vunpack.c.l.b16 %v2256
          %v2605 = vunpack.c.l.b16 %v2257
          %v2606 = vunpack.c.l.b16 %v2258
          %v2607 = vunpack.c.l.b16 %v2259
          %v2608 = vunpack.c.l.b16 %v2260
          %v2609 = vunpack.c.l.b16 %v2261
          %v2610 = vunpack.c.l.b16 %v2262
          %v2611 = vunpack.c.l.b16 %v2263
          %v2612 = vunpack.c.l.b16 %v2264
          %v2613 = vunpack.c.l.b16 %v2265
          %v2614 = vunpack.c.l.b16 %v2266
          %v2615 = vunpack.c.l.b16 %v2267
          %v2616 = vunpack.c.l.b16 %v2268
          %v2617 = vunpack.c.l.b16 %v2269
          %v2618 = vunpack.c.l.b16 %v2270
          %v2619 = vunpack.c.l.b16 %v2271
          %v2620 = vunpack.c.l.b16 %v2272
          %v2621 = vunpack.c.l.b16 %v2273
          %v2622 = vunpack.c.l.b16 %v2274
          %v2623 = vunpack.c.l.b16 %v2275
          %v2624 = vunpack.c.l.b16 %v2276
          %v2625 = vunpack.c.l.b16 %v2277
          %v2626 = vunpack.c.l.b16 %v2278
          %v2627 = vpack.c.b16 %v2528, %v2527
          %v2628 = vpack.c.b16 %v2530, %v2529
          %v2629 = vpack.c.b16 %v2532, %v2531
          %v2630 = vpack.c.b16 %v2534, %v2533
          %v2631 = vpack.c.b16 %v2536, %v2535
          %v2632 = vpack.c.b16 %v2538, %v2537
          %v2633 = vpack.c.b16 %v2540, %v2539
          %v2634 = vpack.c.b16 %v2542, %v2541
          %v2635 = vpack.c.b16 %v2544, %v2543
          %v2636 = vpack.c.b16 %v2546, %v2545
          %v2637 = vpack.c.b16 %v2548, %v2547
          %v2638 = vpack.c.b16 %v2550, %v2549
          %v2639 = vpack.c.b16 %v2552, %v2551
          %v2640 = vpack.c.b16 %v2554, %v2553
          %v2641 = vpack.c.b16 %v2556, %v2555
          %v2642 = vpack.c.b16 %v2558, %v2557
          %v2643 = vpack.c.b16 %v2560, %v2559
          %v2644 = vpack.c.b16 %v2562, %v2561
          %v2645 = vpack.c.b16 %v2564, %v2563
          %v2646 = vpack.c.b16 %v2566, %v2565
          %v2647 = vpack.c.b16 %v2568, %v2567
          %v2648 = vpack.c.b16 %v2570, %v2569
          %v2649 = vpack.c.b16 %v2572, %v2571
          %v2650 = vpack.c.b16 %v2574, %v2573
          %v2651 = vpack.c.b16 %v2576, %v2575
          %v2652 = vpack.c.b16 %v2578, %v2577
          %v2653 = vpack.c.b16 %v2580, %v2579
          %v2654 = vpack.c.b16 %v2582, %v2581
          %v2655 = vpack.c.b16 %v2584, %v2583
          %v2656 = vpack.c.b16 %v2586, %v2585
          %v2657 = vpack.c.b16 %v2588, %v2587
          %v2658 = vpack.c.b16 %v2590, %v2589
          %v2659 = vpack.c.b16 %v2592, %v2591
          %v2660 = vpack.c.b16 %v2594, %v2593
          %v2661 = vpack.c.b16 %v2596, %v2595
          %v2662 = vpack.c.b16 %v2598, %v2597
          %v2663 = vpack.c.b16 %v2600, %v2599
          %v2664 = vpack.c.b16 %v2602, %v2601
          %v2665 = vpack.c.b16 %v2604, %v2603
          %v2666 = vpack.c.b16 %v2606, %v2605
          %v2667 = vpack.c.b16 %v2608, %v2607
          %v2668 = vpack.c.b16 %v2610, %v2609
          %v2669 = vpack.c.b16 %v2612, %v2611
          %v2670 = vpack.c.b16 %v2614, %v2613
          %v2671 = vpack.c.b16 %v2616, %v2615
          %v2672 = vpack.c.b16 %v2618, %v2617
          %v2673 = vpack.c.b16 %v2620, %v2619
          %v2674 = vpack.c.b16 %v2622, %v2621
          %v2675 = vpack.c.b16 %v2624, %v2623
          %v2676 = vpack.c.b16 %v2626, %v2625
          %v2728 = vsel %vm2056, %v2423, 0
          %2730 = vmatpush.bf16.msra.mxu0 %v2634
          %2731 = vmatpush.bf16.msra.mxu0 %v2633
          %2732 = vmatpush.bf16.msra.mxu0 %v2632
          %2733 = vmatpush.bf16.msra.mxu0 %v2631
          %2734 = vmatpush.bf16.msra.mxu0 %v2630
          %2735 = vmatpush.bf16.msra.mxu0 %v2629
          %2736 = vmatpush.bf16.msra.mxu0 %v2628
          %2737 = vmatpush.bf16.msra.mxu0 %v2627
          %2738 = vmatmul.bf16.gmra.mxu0 %v2417
          %v2739 = vpop.f32.mrf.mxu0
          %v2740 = vadd.f32 %v2425, %v2739
          %v2741 = vpop.f32.mrf.mxu0
          %2742 = vdwg.mxu0
          %2743 = vmatpush.bf16.msra.mxu0 %v2642
          %2744 = vmatpush.bf16.msra.mxu0 %v2641
          %2745 = vmatpush.bf16.msra.mxu0 %v2640
          %2746 = vmatpush.bf16.msra.mxu0 %v2639
          %2747 = vmatpush.bf16.msra.mxu0 %v2638
          %2748 = vmatpush.bf16.msra.mxu0 %v2637
          %2749 = vmatpush.bf16.msra.mxu0 %v2636
          %2750 = vmatpush.bf16.msra.mxu0 %v2635
          %2751 = vmatmul.bf16.gmra.mxu0 %v2418
          %v2752 = vpop.f32.mrf.mxu0
          %v2753 = vadd.f32 %v2740, %v2752
          %v2754 = vpop.f32.mrf.mxu0
          %2755 = vdwg.mxu0
          %2756 = vmatpush.bf16.msra.mxu0 %v2650
          %2757 = vmatpush.bf16.msra.mxu0 %v2649
          %2758 = vmatpush.bf16.msra.mxu0 %v2648
          %2759 = vmatpush.bf16.msra.mxu0 %v2647
          %2760 = vmatpush.bf16.msra.mxu0 %v2646
          %2761 = vmatpush.bf16.msra.mxu0 %v2645
          %2762 = vmatpush.bf16.msra.mxu0 %v2644
          %2763 = vmatpush.bf16.msra.mxu0 %v2643
          %2764 = vmatmul.bf16.gmra.mxu0 %v2419
          %v2765 = vpop.f32.mrf.mxu0
          %v2766 = vadd.f32 %v2753, %v2765
          %v2767 = vpop.f32.mrf.mxu0
          %2768 = vdwg.mxu0
          %2769 = vmatpush.bf16.msra.mxu0 %v2658
          %2770 = vmatpush.bf16.msra.mxu0 %v2657
          %2771 = vmatpush.bf16.msra.mxu0 %v2656
          %2772 = vmatpush.bf16.msra.mxu0 %v2655
          %2773 = vmatpush.bf16.msra.mxu0 %v2654
          %2774 = vmatpush.bf16.msra.mxu0 %v2653
          %2775 = vmatpush.bf16.msra.mxu0 %v2652
          %2776 = vmatpush.bf16.msra.mxu0 %v2651
          %2777 = vmatmul.bf16.gmra.mxu0 %v2420
          %v2778 = vpop.f32.mrf.mxu0
          %v2779 = vadd.f32 %v2766, %v2778
          %v2780 = vpop.f32.mrf.mxu0
          %2781 = vdwg.mxu0
          %2782 = vmatpush.bf16.msra.mxu0 %v2666
          %2783 = vmatpush.bf16.msra.mxu0 %v2665
          %2784 = vmatpush.bf16.msra.mxu0 %v2664
          %2785 = vmatpush.bf16.msra.mxu0 %v2663
          %2786 = vmatpush.bf16.msra.mxu0 %v2662
          %2787 = vmatpush.bf16.msra.mxu0 %v2661
          %2788 = vmatpush.bf16.msra.mxu0 %v2660
          %2789 = vmatpush.bf16.msra.mxu0 %v2659
          %2790 = vmatmul.bf16.gmra.mxu0 %v2421
          %v2791 = vpop.f32.mrf.mxu0
          %v2792 = vadd.f32 %v2779, %v2791
          %v2793 = vpop.f32.mrf.mxu0
          %2794 = vdwg.mxu0
          %2795 = vmatpush.bf16.msra.mxu0 %v2674
          %2796 = vmatpush.bf16.msra.mxu0 %v2673
          %2797 = vmatpush.bf16.msra.mxu0 %v2672
          %2798 = vmatpush.bf16.msra.mxu0 %v2671
          %2799 = vmatpush.bf16.msra.mxu0 %v2670
          %2800 = vmatpush.bf16.msra.mxu0 %v2669
          %2801 = vmatpush.bf16.msra.mxu0 %v2668
          %2802 = vmatpush.bf16.msra.mxu0 %v2667
          %2803 = vmatmul.bf16.gmra.mxu0 %v2422
          %v2804 = vpop.f32.mrf.mxu0
          %v2805 = vadd.f32 %v2792, %v2804
          %v2806 = vpop.f32.mrf.mxu0
          %2807 = vdwg.mxu0
          %2808 = vmatpush.bf16.msra.mxu0 0
          %2809 = vmatpush.bf16.msra.mxu0 0
          %2810 = vmatpush.bf16.msra.mxu0 0
          %2811 = vmatpush.bf16.msra.mxu0 0
          %2812 = vmatpush.bf16.msra.mxu0 0
          %2813 = vmatpush.bf16.msra.mxu0 0
          %2814 = vmatpush.bf16.msra.mxu0 %v2676
          %2815 = vmatpush.bf16.msra.mxu0 %v2675
          %2816 = vmatmul.bf16.gmra.mxu0 %v2728
          %v2817 = vpop.f32.mrf.mxu0
          %v2818 = vadd.f32 %v2805, %v2817
          %v2819 = vpop.f32.mrf.mxu0
          %2820 = vdwg.mxu0
          %v2821 = vmax.f32 %v2818, 0.0
          %s2822 = smul.u32 %s2281, 8
          %s2823 = scalar_lea.vmem [#allocation7], %s2822
          %vm2824 = vcmask 521216
          %2825 = vst.msk [vmem:[%s2823] sm:$0x3f] %vm2824, %v2821
        $region83: #{mycnn_forward.1} parent=63 // loop_footer
          %s2285 = sadd.s32 1, %s2281
        $region84: #{mycnn_forward.1} parent=63 // loop_footer_branch
          %2280 = sbr.rel target = $region80
        $region85: #{mycnn_forward.1} parent=63 // loop_exit
          _
        %v2826 = vld [vmem:[#allocation7] ss:$2 sm:$0x7]
        %s2827 = scalar_lea.vmem [#allocation7], 8
        %v2828 = vld [vmem:[%s2827] ss:$2 sm:$0x7]
        %s2829 = scalar_lea.vmem [#allocation7], 16
        %v2830 = vld [vmem:[%s2829] ss:$2 sm:$0x7]
        %s2831 = scalar_lea.vmem [#allocation7], 24
        %v2832 = vld [vmem:[%s2831] ss:$2 sm:$0x7]
        %s2833 = scalar_lea.vmem [#allocation7], 32
        %v2834 = vld [vmem:[%s2833] ss:$2 sm:$0x7]
        %s2835 = scalar_lea.vmem [#allocation7], 40
        %v2836 = vld [vmem:[%s2835] ss:$2 sm:$0x7]
        %s2837 = scalar_lea.vmem [#allocation7], 1
        %v2838 = vld [vmem:[%s2837] ss:$2 sm:$0x7]
        %s2839 = scalar_lea.vmem [#allocation7], 9
        %v2840 = vld [vmem:[%s2839] ss:$2 sm:$0x7]
        %s2841 = scalar_lea.vmem [#allocation7], 17
        %v2842 = vld [vmem:[%s2841] ss:$2 sm:$0x7]
        %s2843 = scalar_lea.vmem [#allocation7], 25
        %v2844 = vld [vmem:[%s2843] ss:$2 sm:$0x7]
        %s2845 = scalar_lea.vmem [#allocation7], 33
        %v2846 = vld [vmem:[%s2845] ss:$2 sm:$0x7]
        %s2847 = scalar_lea.vmem [#allocation7], 41
        %v2848 = vld [vmem:[%s2847] ss:$2 sm:$0x7]
        %v2849 = vmax.f32 %v2826, %v2838
        %v2850 = vmax.f32 %v2828, %v2840
        %v2851 = vmax.f32 %v2830, %v2842
        %v2852 = vmax.f32 %v2832, %v2844
        %v2853 = vmax.f32 %v2834, %v2846
        %v2854 = vmax.f32 %v2836, %v2848
        %vm2855 = vcmask 518144
        %2856 = vst.msk [vmem:[#allocation8] sm:$0x7] %vm2855, %v2849
        %2857 = vst.msk [vmem:[#allocation8 + $0x4] sm:$0x7] %vm2855, %v2850
        %2858 = vst.msk [vmem:[#allocation8 + $0x8] sm:$0x7] %vm2855, %v2851
        %2859 = vst.msk [vmem:[#allocation8 + $0xc] sm:$0x7] %vm2855, %v2852
        %2860 = vst.msk [vmem:[#allocation8 + $0x10] sm:$0x7] %vm2855, %v2853
        %2861 = vst.msk [vmem:[#allocation8 + $0x14] sm:$0x7] %vm2855, %v2854
        %v2862 = vld [vmem:[#allocation8] sm:$0x7]
        %v2863 = vld [vmem:[#allocation8 + $0x8] sm:$0x7]
        %v2864 = vld [vmem:[#allocation8 + $0x10] sm:$0x7]
        %s2865 = scalar_lea.vmem [#allocation8], 4
        %v2866 = vld [vmem:[%s2865] sm:$0x7]
        %v2867 = vld [vmem:[%s2865 + $0x8] sm:$0x7]
        %v2868 = vld [vmem:[%s2865 + $0x10] sm:$0x7]
        %v2869 = vmax.f32 %v2862, %v2866
        %v2870 = vmax.f32 %v2863, %v2867
        %v2871 = vmax.f32 %v2864, %v2868
        %v2873 = vrot.slane %v2869, 1
        %2874 = vrot.lane.b32.xlu0 %v2873, 64
        %v2875 = vpop.permute.xlu0 %2874
        %v2877 = vrot.slane %v2869, 2
        %2880 = vrot.lane.b32.xlu0 %v2870, 64
        %v2881 = vpop.permute.xlu0 %2880
        %v2883 = vrot.slane %v2870, 1
        %v2885 = vrot.slane %v2870, 2
        %2886 = vrot.lane.b32.xlu0 %v2885, 64
        %v2887 = vpop.permute.xlu0 %2886
        %v2890 = vrot.slane %v2871, 1
        %2891 = vrot.lane.b32.xlu0 %v2890, 64
        %v2892 = vpop.permute.xlu0 %2891
        %v2894 = vrot.slane %v2871, 2
        %vm2896 = vcmask 523264
        %v2897 = vsel %vm2896, %v2869, %v2875
        %v2898 = vsel %vm2896, %v2877, %v2881
        %v2899 = vsel %vm2896, %v2883, %v2887
        %v2900 = vsel %vm2896, %v2871, %v2892
        %v2901 = vpack.c.bf16 %v2897, %v2897
        %v2902 = vpack.c.bf16 %v2898, %v2898
        %v2903 = vpack.c.bf16 %v2899, %v2899
        %v2904 = vpack.c.bf16 %v2900, %v2900
        %v2905 = vpack.c.bf16 %v2894, %v2894
        %v2906 = vld [vmem:[%s7] sm:$0xf]
        %v2907 = vld [vmem:[%s7 + $0x4] sm:$0xf]
        %v2908 = vld [vmem:[%s7 + $0x8] sm:$0xf]
        %v2909 = vld [vmem:[%s7 + $0xc] sm:$0xf]
        %v2910 = vld [vmem:[%s7 + $0x10] sm:$0xf]
        %v2911 = vld [vmem:[%s7 + $0x14] sm:$0xf]
        %v2912 = vld [vmem:[%s7 + $0x18] sm:$0xf]
        %v2913 = vld [vmem:[%s7 + $0x1c] sm:$0xf]
        %v2914 = vld [vmem:[%s7 + $0x20] sm:$0xf]
        %v2915 = vld [vmem:[%s7 + $0x24] sm:$0xf]
        %v2916 = vld [vmem:[%s7 + $0x28] sm:$0xf]
        %v2917 = vld [vmem:[%s7 + $0x2c] sm:$0xf]
        %v2918 = vld [vmem:[%s7 + $0x30] sm:$0xf]
        %v2919 = vld [vmem:[%s7 + $0x34] sm:$0xf]
        %v2920 = vld [vmem:[%s7 + $0x38] sm:$0xf]
        %v2921 = vld [vmem:[%s7 + $0x3c] sm:$0xf]
        %v2922 = vld [vmem:[%s7 + $0x40] sm:$0xf]
        %v2923 = vld [vmem:[%s7 + $0x44] sm:$0xf]
        %v2924 = vld [vmem:[%s7 + $0x48] sm:$0xf]
        %v2925 = vld [vmem:[%s7 + $0x4c] sm:$0xf]
        %v2926 = vld [vmem:[%s7 + $0x50] sm:$0xf]
        %v2927 = vld [vmem:[%s7 + $0x54] sm:$0xf]
        %v2928 = vld [vmem:[%s7 + $0x58] sm:$0xf]
        %v2929 = vld [vmem:[%s7 + $0x5c] sm:$0xf]
        %v2930 = vld [vmem:[%s7 + $0x60] sm:$0xf]
        %v2931 = vld [vmem:[%s7 + $0x64] sm:$0xf]
        %v2932 = vld [vmem:[%s7 + $0x68] sm:$0xf]
        %v2933 = vld [vmem:[%s7 + $0x6c] sm:$0xf]
        %v2934 = vld [vmem:[%s7 + $0x70] sm:$0xf]
        %v2935 = vld [vmem:[%s7 + $0x74] sm:$0xf]
        %v2936 = vld [vmem:[%s7 + $0x78] sm:$0xf]
        %v2937 = vld [vmem:[%s7 + $0x7c] sm:$0xf]
        %v2938 = vld [vmem:[%s7 + $0x80] sm:$0xf]
        %v2939 = vld [vmem:[%s7 + $0x84] sm:$0xf]
        %v2940 = vld [vmem:[%s7 + $0x88] sm:$0xf]
        %v2941 = vld [vmem:[%s7 + $0x8c] sm:$0xf]
        %v2942 = vld [vmem:[%s7 + $0x90] sm:$0xf]
        %v2943 = vld [vmem:[%s7 + $0x94] sm:$0xf]
        %v2944 = vld [vmem:[%s7 + $0x98] sm:$0xf]
        %v2945 = vld [vmem:[%s7 + $0x9c] sm:$0xf]
        %v2946 = vld [vmem:[%s7 + $0xa0] sm:$0xf]
        %v2947 = vld [vmem:[%s7 + $0xa4] sm:$0xf]
        %v2948 = vld [vmem:[%s7 + $0xa8] sm:$0xf]
        %v2949 = vld [vmem:[%s7 + $0xac] sm:$0xf]
        %v2950 = vld [vmem:[%s7 + $0xb0] sm:$0xf]
        %v2951 = vld [vmem:[%s7 + $0xb4] sm:$0xf]
        %v2952 = vld [vmem:[%s7 + $0xb8] sm:$0xf]
        %v2953 = vld [vmem:[%s7 + $0xbc] sm:$0xf]
        %v2954 = vld [vmem:[%s7 + $0xc0] sm:$0xf]
        %v2955 = vld [vmem:[%s7 + $0xc4] sm:$0xf]
        %v2956 = vld [vmem:[%s7 + $0xc8] sm:$0xf]
        %v2957 = vld [vmem:[%s7 + $0xcc] sm:$0xf]
        %v2958 = vld [vmem:[%s7 + $0xd0] sm:$0xf]
        %v2959 = vld [vmem:[%s7 + $0xd4] sm:$0xf]
        %v2960 = vld [vmem:[%s7 + $0xd8] sm:$0xf]
        %v2961 = vld [vmem:[%s7 + $0xdc] sm:$0xf]
        %v2962 = vld [vmem:[%s7 + $0xe0] sm:$0xf]
        %v2963 = vld [vmem:[%s7 + $0xe4] sm:$0xf]
        %v2964 = vld [vmem:[%s7 + $0xe8] sm:$0xf]
        %v2965 = vld [vmem:[%s7 + $0xec] sm:$0xf]
        %v2966 = vld [vmem:[%s7 + $0xf0] sm:$0xf]
        %v2967 = vld [vmem:[%s7 + $0xf4] sm:$0xf]
        %v2968 = vld [vmem:[%s7 + $0xf8] sm:$0xf]
        %v2969 = vld [vmem:[%s7 + $0xfc] sm:$0xf]
        %v2970 = vld [vmem:[%s7 + $0x100] sm:$0xf]
        %v2971 = vld [vmem:[%s7 + $0x104] sm:$0xf]
        %v2972 = vld [vmem:[%s7 + $0x108] sm:$0xf]
        %v2973 = vld [vmem:[%s7 + $0x10c] sm:$0xf]
        %v2974 = vld [vmem:[%s7 + $0x110] sm:$0xf]
        %v2975 = vld [vmem:[%s7 + $0x114] sm:$0xf]
        %v2976 = vld [vmem:[%s7 + $0x118] sm:$0xf]
        %v2977 = vld [vmem:[%s7 + $0x11c] sm:$0xf]
        %v2978 = vld [vmem:[%s8] sm:$0x1]
        %v3051 = vunpack.c.l.b16 %v2906
        %v3052 = vunpack.c.l.b16 %v2907
        %v3053 = vunpack.c.l.b16 %v2908
        %v3054 = vunpack.c.l.b16 %v2909
        %v3055 = vunpack.c.l.b16 %v2910
        %v3056 = vunpack.c.l.b16 %v2911
        %v3057 = vunpack.c.l.b16 %v2912
        %v3058 = vunpack.c.l.b16 %v2913
        %v3059 = vunpack.c.l.b16 %v2914
        %v3060 = vunpack.c.l.b16 %v2915
        %v3061 = vunpack.c.l.b16 %v2916
        %v3062 = vunpack.c.l.b16 %v2917
        %v3063 = vunpack.c.l.b16 %v2918
        %v3064 = vunpack.c.l.b16 %v2919
        %v3065 = vunpack.c.l.b16 %v2920
        %v3066 = vunpack.c.l.b16 %v2921
        %v3067 = vunpack.c.l.b16 %v2922
        %v3068 = vunpack.c.l.b16 %v2923
        %v3069 = vunpack.c.l.b16 %v2924
        %v3070 = vunpack.c.l.b16 %v2925
        %v3071 = vunpack.c.l.b16 %v2926
        %v3072 = vunpack.c.l.b16 %v2927
        %v3073 = vunpack.c.l.b16 %v2928
        %v3074 = vunpack.c.l.b16 %v2929
        %v3075 = vunpack.c.l.b16 %v2930
        %v3076 = vunpack.c.l.b16 %v2931
        %v3077 = vunpack.c.l.b16 %v2932
        %v3078 = vunpack.c.l.b16 %v2933
        %v3079 = vunpack.c.l.b16 %v2934
        %v3080 = vunpack.c.l.b16 %v2935
        %v3081 = vunpack.c.l.b16 %v2936
        %v3082 = vunpack.c.l.b16 %v2937
        %v3083 = vunpack.c.l.b16 %v2938
        %v3084 = vunpack.c.l.b16 %v2939
        %v3085 = vunpack.c.l.b16 %v2940
        %v3086 = vunpack.c.l.b16 %v2941
        %v3087 = vunpack.c.l.b16 %v2942
        %v3088 = vunpack.c.l.b16 %v2943
        %v3089 = vunpack.c.l.b16 %v2944
        %v3090 = vunpack.c.l.b16 %v2945
        %v3091 = vunpack.c.l.b16 %v2946
        %v3092 = vunpack.c.l.b16 %v2947
        %v3093 = vunpack.c.l.b16 %v2948
        %v3094 = vunpack.c.l.b16 %v2949
        %v3095 = vunpack.c.l.b16 %v2950
        %v3096 = vunpack.c.l.b16 %v2951
        %v3097 = vunpack.c.l.b16 %v2952
        %v3098 = vunpack.c.l.b16 %v2953
        %v3099 = vunpack.c.l.b16 %v2954
        %v3100 = vunpack.c.l.b16 %v2955
        %v3101 = vunpack.c.l.b16 %v2956
        %v3102 = vunpack.c.l.b16 %v2957
        %v3103 = vunpack.c.l.b16 %v2958
        %v3104 = vunpack.c.l.b16 %v2959
        %v3105 = vunpack.c.l.b16 %v2960
        %v3106 = vunpack.c.l.b16 %v2961
        %v3107 = vunpack.c.l.b16 %v2962
        %v3108 = vunpack.c.l.b16 %v2963
        %v3109 = vunpack.c.l.b16 %v2964
        %v3110 = vunpack.c.l.b16 %v2965
        %v3111 = vunpack.c.l.b16 %v2966
        %v3112 = vunpack.c.l.b16 %v2967
        %v3113 = vunpack.c.l.b16 %v2968
        %v3114 = vunpack.c.l.b16 %v2969
        %v3115 = vunpack.c.l.b16 %v2970
        %v3116 = vunpack.c.l.b16 %v2971
        %v3117 = vunpack.c.l.b16 %v2972
        %v3118 = vunpack.c.l.b16 %v2973
        %v3119 = vunpack.c.l.b16 %v2974
        %v3120 = vunpack.c.l.b16 %v2975
        %v3121 = vunpack.c.l.b16 %v2976
        %v3122 = vunpack.c.l.b16 %v2977
        %v3123 = vpack.c.b16 %v3052, %v3051
        %v3124 = vpack.c.b16 %v3054, %v3053
        %v3125 = vpack.c.b16 %v3056, %v3055
        %v3126 = vpack.c.b16 %v3058, %v3057
        %v3127 = vpack.c.b16 %v3060, %v3059
        %v3128 = vpack.c.b16 %v3062, %v3061
        %v3129 = vpack.c.b16 %v3064, %v3063
        %v3130 = vpack.c.b16 %v3066, %v3065
        %v3131 = vpack.c.b16 %v3068, %v3067
        %v3132 = vpack.c.b16 %v3070, %v3069
        %v3133 = vpack.c.b16 %v3072, %v3071
        %v3134 = vpack.c.b16 %v3074, %v3073
        %v3135 = vpack.c.b16 %v3076, %v3075
        %v3136 = vpack.c.b16 %v3078, %v3077
        %v3137 = vpack.c.b16 %v3080, %v3079
        %v3138 = vpack.c.b16 %v3082, %v3081
        %v3139 = vpack.c.b16 %v3084, %v3083
        %v3140 = vpack.c.b16 %v3086, %v3085
        %v3141 = vpack.c.b16 %v3088, %v3087
        %v3142 = vpack.c.b16 %v3090, %v3089
        %v3143 = vpack.c.b16 %v3092, %v3091
        %v3144 = vpack.c.b16 %v3094, %v3093
        %v3145 = vpack.c.b16 %v3096, %v3095
        %v3146 = vpack.c.b16 %v3098, %v3097
        %v3147 = vpack.c.b16 %v3100, %v3099
        %v3148 = vpack.c.b16 %v3102, %v3101
        %v3149 = vpack.c.b16 %v3104, %v3103
        %v3150 = vpack.c.b16 %v3106, %v3105
        %v3151 = vpack.c.b16 %v3108, %v3107
        %v3152 = vpack.c.b16 %v3110, %v3109
        %v3153 = vpack.c.b16 %v3112, %v3111
        %v3154 = vpack.c.b16 %v3114, %v3113
        %v3155 = vpack.c.b16 %v3116, %v3115
        %v3156 = vpack.c.b16 %v3118, %v3117
        %v3157 = vpack.c.b16 %v3120, %v3119
        %v3158 = vpack.c.b16 %v3122, %v3121
        %v3196 = vsel %vm2896, %v2905, 0
        %3198 = vmatpush.bf16.msra.mxu0 %v3130
        %3199 = vmatpush.bf16.msra.mxu0 %v3129
        %3200 = vmatpush.bf16.msra.mxu0 %v3128
        %3201 = vmatpush.bf16.msra.mxu0 %v3127
        %3202 = vmatpush.bf16.msra.mxu0 %v3126
        %3203 = vmatpush.bf16.msra.mxu0 %v3125
        %3204 = vmatpush.bf16.msra.mxu0 %v3124
        %3205 = vmatpush.bf16.msra.mxu0 %v3123
        %3206 = vmatmul.bf16.gmra.mxu0 %v2901
        %v3207 = vpop.f32.mrf.mxu0
        %v3208 = vadd.f32 %v2978, %v3207
        %v3209 = vpop.f32.mrf.mxu0
        %3210 = vdwg.mxu0
        %3211 = vmatpush.bf16.msra.mxu0 %v3138
        %3212 = vmatpush.bf16.msra.mxu0 %v3137
        %3213 = vmatpush.bf16.msra.mxu0 %v3136
        %3214 = vmatpush.bf16.msra.mxu0 %v3135
        %3215 = vmatpush.bf16.msra.mxu0 %v3134
        %3216 = vmatpush.bf16.msra.mxu0 %v3133
        %3217 = vmatpush.bf16.msra.mxu0 %v3132
        %3218 = vmatpush.bf16.msra.mxu0 %v3131
        %3219 = vmatmul.bf16.gmra.mxu0 %v2902
        %v3220 = vpop.f32.mrf.mxu0
        %v3221 = vadd.f32 %v3208, %v3220
        %v3222 = vpop.f32.mrf.mxu0
        %3223 = vdwg.mxu0
        %3224 = vmatpush.bf16.msra.mxu0 %v3146
        %3225 = vmatpush.bf16.msra.mxu0 %v3145
        %3226 = vmatpush.bf16.msra.mxu0 %v3144
        %3227 = vmatpush.bf16.msra.mxu0 %v3143
        %3228 = vmatpush.bf16.msra.mxu0 %v3142
        %3229 = vmatpush.bf16.msra.mxu0 %v3141
        %3230 = vmatpush.bf16.msra.mxu0 %v3140
        %3231 = vmatpush.bf16.msra.mxu0 %v3139
        %3232 = vmatmul.bf16.gmra.mxu0 %v2903
        %v3233 = vpop.f32.mrf.mxu0
        %v3234 = vadd.f32 %v3221, %v3233
        %v3235 = vpop.f32.mrf.mxu0
        %3236 = vdwg.mxu0
        %3237 = vmatpush.bf16.msra.mxu0 %v3154
        %3238 = vmatpush.bf16.msra.mxu0 %v3153
        %3239 = vmatpush.bf16.msra.mxu0 %v3152
        %3240 = vmatpush.bf16.msra.mxu0 %v3151
        %3241 = vmatpush.bf16.msra.mxu0 %v3150
        %3242 = vmatpush.bf16.msra.mxu0 %v3149
        %3243 = vmatpush.bf16.msra.mxu0 %v3148
        %3244 = vmatpush.bf16.msra.mxu0 %v3147
        %3245 = vmatmul.bf16.gmra.mxu0 %v2904
        %v3246 = vpop.f32.mrf.mxu0
        %v3247 = vadd.f32 %v3234, %v3246
        %v3248 = vpop.f32.mrf.mxu0
        %3249 = vdwg.mxu0
        %3250 = vmatpush.bf16.msra.mxu0 0
        %3251 = vmatpush.bf16.msra.mxu0 0
        %3252 = vmatpush.bf16.msra.mxu0 0
        %3253 = vmatpush.bf16.msra.mxu0 0
        %3254 = vmatpush.bf16.msra.mxu0 %v3158
        %3255 = vmatpush.bf16.msra.mxu0 %v3157
        %3256 = vmatpush.bf16.msra.mxu0 %v3156
        %3257 = vmatpush.bf16.msra.mxu0 %v3155
        %3258 = vmatmul.bf16.gmra.mxu0 %v3196
        %v3259 = vpop.f32.mrf.mxu0
        %v3260 = vadd.f32 %v3247, %v3259
        %v3261 = vpop.f32.mrf.mxu0
        %3262 = vdwg.mxu0
        %v3263 = vmax.f32 %v3260, 0.0
        %v3264 = vpack.c.bf16 %v3263, %v3263
        %v3265 = vld [vmem:[%s9] sm:$0xf]
        %v3266 = vld [vmem:[%s9 + $0x4] sm:$0xf]
        %v3267 = vld [vmem:[%s9 + $0x8] sm:$0xf]
        %v3268 = vld [vmem:[%s9 + $0xc] sm:$0xf]
        %v3269 = vld [vmem:[%s9 + $0x10] sm:$0xf]
        %v3270 = vld [vmem:[%s9 + $0x14] sm:$0xf]
        %v3271 = vld [vmem:[%s9 + $0x18] sm:$0xf]
        %v3272 = vld [vmem:[%s9 + $0x1c] sm:$0xf]
        %v3273 = vld [vmem:[%s9 + $0x20] sm:$0xf]
        %v3274 = vld [vmem:[%s9 + $0x24] sm:$0xf]
        %v3275 = vld [vmem:[%s9 + $0x28] sm:$0xf]
        %v3276 = vld [vmem:[%s9 + $0x2c] sm:$0xf]
        %v3277 = vld [vmem:[%s9 + $0x30] sm:$0x3]
        %v3278 = vld [vmem:[%s10] sm:$0x1]
        %v3292 = vunpack.c.l.b16 %v3265
        %v3293 = vunpack.c.l.b16 %v3266
        %v3294 = vunpack.c.l.b16 %v3267
        %v3295 = vunpack.c.l.b16 %v3268
        %v3296 = vunpack.c.l.b16 %v3269
        %v3297 = vunpack.c.l.b16 %v3270
        %v3298 = vunpack.c.l.b16 %v3271
        %v3299 = vunpack.c.l.b16 %v3272
        %v3300 = vunpack.c.l.b16 %v3273
        %v3301 = vunpack.c.l.b16 %v3274
        %v3302 = vunpack.c.l.b16 %v3275
        %v3303 = vunpack.c.l.b16 %v3276
        %v3304 = vunpack.c.l.b16 %v3277
        %v3305 = vpack.c.b16 %v3293, %v3292
        %v3306 = vpack.c.b16 %v3295, %v3294
        %v3307 = vpack.c.b16 %v3297, %v3296
        %v3308 = vpack.c.b16 %v3299, %v3298
        %v3309 = vpack.c.b16 %v3301, %v3300
        %v3310 = vpack.c.b16 %v3303, %v3302
        %v3311 = vpack.c.b16 %v3304, %v3304
        %vm3318 = vcmask 818176
        %v3320 = vsel %vm3318, %v3264, 0
        %vm3322 = vcmask 1041408
        %v3324 = vsel %vm3322, %v3311, 0
        %3326 = vmatpush.bf16.msra.mxu0 0
        %3327 = vmatpush.bf16.msra.mxu0 %v3324
        %3328 = vmatpush.bf16.msra.mxu0 %v3310
        %3329 = vmatpush.bf16.msra.mxu0 %v3309
        %3330 = vmatpush.bf16.msra.mxu0 %v3308
        %3331 = vmatpush.bf16.msra.mxu0 %v3307
        %3332 = vmatpush.bf16.msra.mxu0 %v3306
        %3333 = vmatpush.bf16.msra.mxu0 %v3305
        %3334 = vmatmul.bf16.gmra.mxu0 %v3320
        %v3335 = vpop.f32.mrf.mxu0
        %v3336 = vadd.f32 %v3278, %v3335
        %v3337 = vpop.f32.mrf.mxu0
        %3338 = vdwg.mxu0
        %vm3339 = vcmask 73728
        %3340 = vst.msk [vmem:[%s378] sm:$0x1] %vm3339, %v3336
        %s3341 = sand.u32 %s269, 1
        %s3342 = scalar_lea.sflag [#allocation10], %s3341
        %s3343 = sand.u32 %s269, 1
        %s3344 = scalar_lea.vmem [#allocation9], %s3343
        // Predicated region
        $region86: #{mycnn_forward.1} parent=63 // pred_check
          %p3345 = pneg %p279
        $region87: #{mycnn_forward.1} parent=63 // pred_check_branch
          %3347 = sbr.rel (%p3345) target = $region89
        $region88: #{mycnn_forward.1} parent=63 // pred_region
          %3349 = vsyncadd %s3342, 0
          %s3350 = scalar_lea.hbm %s11, %s25
          %s3352 = sshll.u32 %s3344, 4
          %s3353 = int_to_ptr.vmem [resolvable:$true] %s3352
          %s3354 = sshll.u32 %s3350, 4
          %s3355 = int_to_ptr.hbm [resolvable:$true] %s3354
          %3357 = dma.vmem_to_hbm [thread:$0]  %s3353, 16, %s3355, %s3342
        $region89: #{mycnn_forward.1} parent=63 // pred_fallthru
          _
      $region64: #{mycnn_forward.1} parent=5 // pred_fallthru
        _
      %p3358 = scmp.le.s32.totalorder 2, %s20
      // Predicated region
      $region90: #{mycnn_forward.1} parent=5 // pred_check
        %p3359 = pneg %p3358
      $region91: #{mycnn_forward.1} parent=5 // pred_check_branch
        %3361 = sbr.rel (%p3359) target = $region93
      $region92: #{mycnn_forward.1} parent=5 // pred_region
        %s3362 = ssub.s32 %s20, 2
        // Predicated region
        $region94: #{mycnn_forward.1} parent=92 // pred_check
          %p3363 = pneg %p285
        $region95: #{mycnn_forward.1} parent=92 // pred_check_branch
          %3365 = sbr.rel (%p3363) target = $region97
        $region96: #{mycnn_forward.1} parent=92 // pred_region
          %s3366 = sand.u32 %s270, 1
          %s3367 = scalar_lea.sflag [#allocation10], %s3366
          %s3368 = sand.u32 %s270, 1
          %s3369 = scalar_lea.vmem [#allocation9], %s3368
          %3371 = dma.done %s3367, 16
        $region97: #{mycnn_forward.1} parent=92 // pred_fallthru
          _
      $region93: #{mycnn_forward.1} parent=5 // pred_fallthru
        _
    $region6: #{mycnn_forward.1} parent=1 // loop_footer
      %s24 = sadd.s32 1, %s20
    $region7: #{mycnn_forward.1} parent=1 // loop_footer_branch
      %19 = sbr.rel target = $region3
    $region8: #{mycnn_forward.1} parent=1 // loop_exit
      _
    %3372 = vsyncpa [#allocation10], 1
    %s3373 = scalar_lea.sflag [#allocation10], 1
    %3374 = vsyncpa %s3373, 1

</llo_original>
